<compile_context>
chip_gen: v7x
topology: tpu7x:2x2x1
jax: 0.10.0
libtpu: 0.0.40
codegen_flags: <defaults>
</compile_context>

<pallas_src>
import functools

import jax
import jax.numpy as jnp
from jax.experimental import pallas as pl
from jax.experimental.pallas import tpu as pltpu

# TODO(synk): ABNORMAL_CLASSIFIER_POS_WEIGHT is an external constant in the
# original repo; fixed deterministically to 2.13 here.
ABNORMAL_CLASSIFIER_POS_WEIGHT = 2.13

R_REGIONS = 29
INPUT_DIM = 1024
H1 = 512
H2 = 128


def _mlp_bce_kernel(x_ref, w1_ref, b1_ref, w2_ref, b2_ref, w3_ref, b3_ref,
                    det_ref, y_ref, logits_ref, loss_ref, *, pos_weight):
    """Single-shot 3-layer MLP + masked BCE-with-logits(pos_weight) reduction.

    x_ref:   (B, 29, 1024) f32   (cast to bf16 in-kernel, right before the dot)
    w1/w2/w3: bf16 weights, b1/b2/b3: f32 biases
    det_ref / y_ref: (B, 1, 29) f32 masks / labels
    logits_ref: (B, 1, 29) f32, loss_ref: (1, 1) f32
    """
    batch = x_ref.shape[0]

    w1 = w1_ref[...]                                    # (1024, 512) bf16
    b1 = b1_ref[...]                                    # (1, 512)    f32
    w2 = w2_ref[...]                                    # (512, 128)  bf16
    b2 = b2_ref[...]                                    # (1, 128)    f32
    w3 = w3_ref[...].astype(jnp.float32)                # (1, 128)    f32
    b3 = b3_ref[...]                                    # (1, 1)      f32

    num = jnp.zeros((1, 1), jnp.float32)
    den = jnp.zeros((1, 1), jnp.float32)

    for b in range(batch):                              # static unroll, B tiny
        # Layer 1: bf16 x bf16 -> f32 accumulate on the MXU (cast in-kernel).
        xb = x_ref[b].astype(jnp.bfloat16)              # (29, 1024)
        h1 = jnp.dot(xb, w1, preferred_element_type=jnp.float32) + b1
        h1 = jnp.maximum(h1, 0.0)                       # (29, 512) f32

        # Layer 2.
        h2 = jnp.dot(h1.astype(jnp.bfloat16), w2,
                     preferred_element_type=jnp.float32) + b2
        h2 = jnp.maximum(h2, 0.0)                       # (29, 128) f32

        # Layer 3 (128 -> 1): trans-B matmul -> lane-dense (1, 29) row.
        logit = jax.lax.dot_general(
            w3, h2, (((1,), (1,)), ((), ())),
            preferred_element_type=jnp.float32) + b3    # (1, 29)
        logits_ref[b] = logit

        # Masked BCEWithLogitsLoss(pos_weight) partial sums for this batch row:
        #   loss_i = (1-y)*x + (pos_weight*y + (1-y)) * softplus(-x)
        y = y_ref[b]                                    # (1, 29)
        det = det_ref[b]                                # (1, 29)
        sp = jnp.maximum(-logit, 0.0) + jnp.log(1.0 + jnp.exp(-jnp.abs(logit)))
        ell = (1.0 - y) * logit + (pos_weight * y + (1.0 - y)) * sp
        num = num + jnp.sum(det * ell, axis=1, keepdims=True)
        den = den + jnp.sum(det, axis=1, keepdims=True)

    # NOTE: like PyTorch's mean over an empty selection, zero detected regions
    # yields NaN; callers must guard.
    loss_ref[...] = num / den


def init_params(key, input_dim=INPUT_DIM, output_dim=1):
    """Deterministic synthetic parameters (shapes match the nn.Linear stack).

    Weights stored as bfloat16 (halves the dominant w1 HBM fetch, native MXU
    dtype); biases stay float32 for the f32 epilogue.  w3 is a (1, 128) row
    vector since output_dim == 1.
    """
    assert output_dim == 1
    k1, k2, k3, k4, k5, k6 = jax.random.split(key, 6)

    def uinit(k, shape, fan_in):
        bound = 1.0 / jnp.sqrt(fan_in)
        return jax.random.uniform(k, shape, jnp.float32, -bound, bound)

    w1 = uinit(k1, (input_dim, H1), input_dim).astype(jnp.bfloat16)
    b1 = uinit(k2, (1, H1), input_dim)
    w2 = uinit(k3, (H1, H2), H1).astype(jnp.bfloat16)
    b2 = uinit(k4, (1, H2), H1)
    w3 = uinit(k5, (1, H2), H2).astype(jnp.bfloat16)   # row vector (out_dim=1)
    b3 = uinit(k6, (1, 1), H2)
    return dict(w1=w1, b1=b1, w2=w2, b2=b2, w3=w3, b3=b3)


@jax.jit
def binary_classifier_region_abnormal(params, region_features, class_detected,
                                      region_is_abnormal):
    """Validation-mode forward: returns (loss, predicted_abnormal_regions)."""
    B, R, D = region_features.shape
    n = B * R

    # Tiny (B, 29) bool masks -> (B, 1, 29) f32 rows (negligible wrapper cost).
    det = class_detected[:, None, :].astype(jnp.float32)
    y = region_is_abnormal[:, None, :].astype(jnp.float32)

    cost = pl.CostEstimate(
        flops=2 * n * (D * H1 + H1 * H2 + H2),
        transcendentals=2 * n,
        bytes_accessed=(n * D * 4            # x (f32, read once by the kernel)
                        + D * H1 * 2         # w1 bf16
                        + H1 * H2 * 2        # w2 bf16
                        + (H1 + H2 + 1) * 4  # biases
                        + H2 * 2             # w3 bf16
                        + 2 * n * 4          # det, y
                        + n * 4 + 4))        # logits, loss

    vmem = pl.BlockSpec(memory_space=pltpu.MemorySpace.VMEM)
    kernel = functools.partial(_mlp_bce_kernel,
                               pos_weight=ABNORMAL_CLASSIFIER_POS_WEIGHT)

    logits, loss = pl.pallas_call(
        kernel,
        out_shape=[
            jax.ShapeDtypeStruct((B, 1, R), jnp.float32),   # logits rows
            jax.ShapeDtypeStruct((1, 1), jnp.float32),      # scalar loss
        ],
        in_specs=[vmem] * 9,
        out_specs=[vmem, vmem],
        cost_estimate=cost,
    )(region_features, params["w1"], params["b1"], params["w2"], params["b2"],
      params["w3"], params["b3"], det, y)

    predicted_abnormal_regions = logits[:, 0, :] > -1.0
    return loss[0, 0], predicted_abnormal_regions


def _reference(params, region_features, class_detected, region_is_abnormal):
    """Pure-JAX reference mirroring the kernel's bf16 storage / f32 accumulate."""
    B, R, D = region_features.shape
    hi = jax.lax.Precision.HIGHEST
    x = region_features.astype(jnp.bfloat16).astype(jnp.float32).reshape(B * R, D)
    w1 = params["w1"].astype(jnp.float32)
    w2 = params["w2"].astype(jnp.float32)
    w3 = params["w3"].astype(jnp.float32)
    h1 = jnp.maximum(jnp.dot(x, w1, precision=hi) + params["b1"], 0.0)
    h1 = h1.astype(jnp.bfloat16).astype(jnp.float32)
    h2 = jnp.maximum(jnp.dot(h1, w2, precision=hi) + params["b2"], 0.0)
    logits = jnp.dot(h2, w3.T, precision=hi)[:, 0] + params["b3"][0, 0]   # (N,)
    det = class_detected.reshape(-1).astype(jnp.float32)
    y = region_is_abnormal.reshape(-1).astype(jnp.float32)
    p = ABNORMAL_CLASSIFIER_POS_WEIGHT
    sp = jnp.maximum(-logits, 0.0) + jnp.log1p(jnp.exp(-jnp.abs(logits)))
    ell = (1.0 - y) * logits + (p * y + (1.0 - y)) * sp
    loss = jnp.sum(det * ell) / jnp.sum(det)
    preds = (logits > -1.0).reshape(B, R)
    return loss, preds, logits


if __name__ == "__main__":
    key = jax.random.PRNGKey(0)
    kp, kf, kd, ka = jax.random.split(key, 4)

    batch = 2
    params = init_params(kp)
    region_features = jax.random.normal(kf, (batch, R_REGIONS, INPUT_DIM),
                                        jnp.float32)
    class_detected = jax.random.bernoulli(kd, 0.7, (batch, R_REGIONS))
    region_is_abnormal = jax.random.bernoulli(ka, 0.3, (batch, R_REGIONS))

    loss, preds = binary_classifier_region_abnormal(
        params, region_features, class_detected, region_is_abnormal)
    jax.block_until_ready((loss, preds))

    ref_loss, ref_preds, ref_logits = _reference(
        params, region_features, class_detected, region_is_abnormal)

    assert jnp.allclose(loss, ref_loss, rtol=5e-3, atol=5e-3), (loss, ref_loss)
    # Predictions must match wherever the reference logit is not razor-close
    # to the -1.0 decision boundary (guards against rounding-order noise).
    safe = (jnp.abs(ref_logits + 1.0) > 1e-3).reshape(batch, R_REGIONS)
    assert bool(jnp.all(jnp.logical_or(preds == ref_preds, ~safe)))
    assert preds.shape == (batch, R_REGIONS) and preds.dtype == jnp.bool_

    print("KERNEL_OK")
</pallas_src>

<mosaic_0001>
module attributes {stable_mosaic.version = 11 : i64} {
  func.func @_mlp_bce_kernel(%arg0: memref<2x29x1024xf32, #tpu.memory_space<vmem>>, %arg1: memref<1024x512xbf16, #tpu.memory_space<vmem>>, %arg2: memref<1x512xf32, #tpu.memory_space<vmem>>, %arg3: memref<512x128xbf16, #tpu.memory_space<vmem>>, %arg4: memref<1x128xf32, #tpu.memory_space<vmem>>, %arg5: memref<1x128xbf16, #tpu.memory_space<vmem>>, %arg6: memref<1x1xf32, #tpu.memory_space<vmem>>, %arg7: memref<2x1x29xf32, #tpu.memory_space<vmem>>, %arg8: memref<2x1x29xf32, #tpu.memory_space<vmem>>, %arg9: memref<2x1x29xf32, #tpu.memory_space<vmem>>, %arg10: memref<1x1xf32, #tpu.memory_space<vmem>>) attributes {dimension_semantics = [], scalar_prefetch = 0 : i64, scratch_operands = 0 : i64, tpu.core_type = #tpu.core_type<tc>} {
    %c0 = arith.constant 0 : index
    %c0_0 = arith.constant 0 : index
    %0 = vector.load %arg1[%c0, %c0_0] : memref<1024x512xbf16, #tpu.memory_space<vmem>>, vector<1024x512xbf16>
    %c0_1 = arith.constant 0 : index
    %c0_2 = arith.constant 0 : index
    %1 = vector.load %arg2[%c0_1, %c0_2] : memref<1x512xf32, #tpu.memory_space<vmem>>, vector<1x512xf32>
    %c0_3 = arith.constant 0 : index
    %c0_4 = arith.constant 0 : index
    %2 = vector.load %arg3[%c0_3, %c0_4] : memref<512x128xbf16, #tpu.memory_space<vmem>>, vector<512x128xbf16>
    %c0_5 = arith.constant 0 : index
    %c0_6 = arith.constant 0 : index
    %3 = vector.load %arg4[%c0_5, %c0_6] : memref<1x128xf32, #tpu.memory_space<vmem>>, vector<1x128xf32>
    %c0_7 = arith.constant 0 : index
    %c0_8 = arith.constant 0 : index
    %4 = vector.load %arg5[%c0_7, %c0_8] : memref<1x128xbf16, #tpu.memory_space<vmem>>, vector<1x128xbf16>
    %5 = arith.extf %4 : vector<1x128xbf16> to vector<1x128xf32>
    %c0_9 = arith.constant 0 : index
    %c0_10 = arith.constant 0 : index
    %6 = vector.load %arg6[%c0_9, %c0_10] : memref<1x1xf32, #tpu.memory_space<vmem>>, vector<1x1xf32>
    %cst = arith.constant 0.000000e+00 : f32
    %7 = vector.broadcast %cst : f32 to vector<1x1xf32>
    %cst_11 = arith.constant 0.000000e+00 : f32
    %8 = vector.broadcast %cst_11 : f32 to vector<1x1xf32>
    %c0_12 = arith.constant 0 : index
    %c0_13 = arith.constant 0 : index
    %c0_14 = arith.constant 0 : index
    %9 = vector.load %arg0[%c0_12, %c0_13, %c0_14] : memref<2x29x1024xf32, #tpu.memory_space<vmem>>, vector<1x29x1024xf32>
    %10 = vector.shape_cast %9 : vector<1x29x1024xf32> to vector<29x1024xf32>
    %11 = arith.truncf %10 : vector<29x1024xf32> to vector<29x1024xbf16>
    %cst_15 = arith.constant dense<0.000000e+00> : vector<29x512xf32>
    %12 = tpu.matmul %11, %0, %cst_15 {dimension_numbers = #tpu.dot_dimension_numbers<[1], [0], [0], [1], [0, 0, 1, 1], [], []>} : vector<29x1024xbf16>, vector<1024x512xbf16>, vector<29x512xf32> -> vector<29x512xf32>
    %13 = vector.broadcast %1 : vector<1x512xf32> to vector<29x512xf32>
    %14 = arith.addf %12, %13 : vector<29x512xf32>
    %cst_16 = arith.constant 0.000000e+00 : f32
    %15 = vector.broadcast %cst_16 : f32 to vector<29x512xf32>
    %16 = arith.maximumf %14, %15 : vector<29x512xf32>
    %17 = arith.truncf %16 : vector<29x512xf32> to vector<29x512xbf16>
    %cst_17 = arith.constant dense<0.000000e+00> : vector<29x128xf32>
    %18 = tpu.matmul %17, %2, %cst_17 {dimension_numbers = #tpu.dot_dimension_numbers<[1], [0], [0], [1], [0, 0, 1, 1], [], []>} : vector<29x512xbf16>, vector<512x128xbf16>, vector<29x128xf32> -> vector<29x128xf32>
    %19 = vector.broadcast %3 : vector<1x128xf32> to vector<29x128xf32>
    %20 = arith.addf %18, %19 : vector<29x128xf32>
    %cst_18 = arith.constant 0.000000e+00 : f32
    %21 = vector.broadcast %cst_18 : f32 to vector<29x128xf32>
    %22 = arith.maximumf %20, %21 : vector<29x128xf32>
    %cst_19 = arith.constant dense<0.000000e+00> : vector<1x29xf32>
    %23 = tpu.matmul %5, %22, %cst_19 {dimension_numbers = #tpu.dot_dimension_numbers<[1], [1], [0], [0], [0, 0, 1, 0], [], []>} : vector<1x128xf32>, vector<29x128xf32>, vector<1x29xf32> -> vector<1x29xf32>
    %24 = vector.broadcast %6 : vector<1x1xf32> to vector<1x29xf32>
    %25 = arith.addf %23, %24 : vector<1x29xf32>
    %c0_20 = arith.constant 0 : index
    %c0_21 = arith.constant 0 : index
    %c0_22 = arith.constant 0 : index
    %26 = vector.load %arg9[%c0_20, %c0_21, %c0_22] : memref<2x1x29xf32, #tpu.memory_space<vmem>>, vector<1x1x29xf32>
    %27 = vector.shape_cast %26 : vector<1x1x29xf32> to vector<1x29xf32>
    %28 = vector.shape_cast %25 : vector<1x29xf32> to vector<1x1x29xf32>
    tpu.vector_store %arg9[%c0_20, %c0_21, %c0_22], %28 {strides = array<i32>} : memref<2x1x29xf32, #tpu.memory_space<vmem>>, vector<1x1x29xf32>,
    %c0_23 = arith.constant 0 : index
    %c0_24 = arith.constant 0 : index
    %c0_25 = arith.constant 0 : index
    %29 = vector.load %arg8[%c0_23, %c0_24, %c0_25] : memref<2x1x29xf32, #tpu.memory_space<vmem>>, vector<1x1x29xf32>
    %30 = vector.shape_cast %29 : vector<1x1x29xf32> to vector<1x29xf32>
    %c0_26 = arith.constant 0 : index
    %c0_27 = arith.constant 0 : index
    %c0_28 = arith.constant 0 : index
    %31 = vector.load %arg7[%c0_26, %c0_27, %c0_28] : memref<2x1x29xf32, #tpu.memory_space<vmem>>, vector<1x1x29xf32>
    %32 = vector.shape_cast %31 : vector<1x1x29xf32> to vector<1x29xf32>
    %cst_29 = arith.constant 0.000000e+00 : f32
    %33 = vector.broadcast %cst_29 : f32 to vector<1x29xf32>
    %34 = arith.subf %33, %25 : vector<1x29xf32>
    %cst_30 = arith.constant 0.000000e+00 : f32
    %35 = vector.broadcast %cst_30 : f32 to vector<1x29xf32>
    %36 = arith.maximumf %34, %35 : vector<1x29xf32>
    %37 = math.absf %25 : vector<1x29xf32>
    %cst_31 = arith.constant 0.000000e+00 : f32
    %38 = vector.broadcast %cst_31 : f32 to vector<1x29xf32>
    %39 = arith.subf %38, %37 : vector<1x29xf32>
    %40 = math.exp %39 : vector<1x29xf32>
    %cst_32 = arith.constant 1.000000e+00 : f32
    %41 = vector.broadcast %cst_32 : f32 to vector<1x29xf32>
    %42 = arith.addf %41, %40 : vector<1x29xf32>
    %43 = math.log %42 : vector<1x29xf32>
    %44 = arith.addf %36, %43 : vector<1x29xf32>
    %cst_33 = arith.constant 1.000000e+00 : f32
    %45 = vector.broadcast %cst_33 : f32 to vector<1x29xf32>
    %46 = arith.subf %45, %30 : vector<1x29xf32>
    %47 = arith.mulf %46, %25 : vector<1x29xf32>
    %cst_34 = arith.constant 2.130000e+00 : f32
    %48 = vector.broadcast %cst_34 : f32 to vector<1x29xf32>
    %49 = arith.mulf %48, %30 : vector<1x29xf32>
    %cst_35 = arith.constant 1.000000e+00 : f32
    %50 = vector.broadcast %cst_35 : f32 to vector<1x29xf32>
    %51 = arith.subf %50, %30 : vector<1x29xf32>
    %52 = arith.addf %49, %51 : vector<1x29xf32>
    %53 = arith.mulf %52, %44 : vector<1x29xf32>
    %54 = arith.addf %47, %53 : vector<1x29xf32>
    %55 = arith.mulf %32, %54 : vector<1x29xf32>
    %cst_36 = arith.constant dense<0.000000e+00> : vector<1xf32>
    %56 = vector.multi_reduction <add>, %55, %cst_36 [1] : vector<1x29xf32> to vector<1xf32>
    %57 = vector.shape_cast %56 : vector<1xf32> to vector<1x1xf32>
    %58 = arith.addf %7, %57 : vector<1x1xf32>
    %cst_37 = arith.constant dense<0.000000e+00> : vector<1xf32>
    %59 = vector.multi_reduction <add>, %32, %cst_37 [1] : vector<1x29xf32> to vector<1xf32>
    %60 = vector.shape_cast %59 : vector<1xf32> to vector<1x1xf32>
    %61 = arith.addf %8, %60 : vector<1x1xf32>
    %c1 = arith.constant 1 : index
    %c0_38 = arith.constant 0 : index
    %c0_39 = arith.constant 0 : index
    %62 = vector.load %arg0[%c1, %c0_38, %c0_39] : memref<2x29x1024xf32, #tpu.memory_space<vmem>>, vector<1x29x1024xf32>
    %63 = vector.shape_cast %62 : vector<1x29x1024xf32> to vector<29x1024xf32>
    %64 = arith.truncf %63 : vector<29x1024xf32> to vector<29x1024xbf16>
    %cst_40 = arith.constant dense<0.000000e+00> : vector<29x512xf32>
    %65 = tpu.matmul %64, %0, %cst_40 {dimension_numbers = #tpu.dot_dimension_numbers<[1], [0], [0], [1], [0, 0, 1, 1], [], []>} : vector<29x1024xbf16>, vector<1024x512xbf16>, vector<29x512xf32> -> vector<29x512xf32>
    %66 = vector.broadcast %1 : vector<1x512xf32> to vector<29x512xf32>
    %67 = arith.addf %65, %66 : vector<29x512xf32>
    %cst_41 = arith.constant 0.000000e+00 : f32
    %68 = vector.broadcast %cst_41 : f32 to vector<29x512xf32>
    %69 = arith.maximumf %67, %68 : vector<29x512xf32>
    %70 = arith.truncf %69 : vector<29x512xf32> to vector<29x512xbf16>
    %cst_42 = arith.constant dense<0.000000e+00> : vector<29x128xf32>
    %71 = tpu.matmul %70, %2, %cst_42 {dimension_numbers = #tpu.dot_dimension_numbers<[1], [0], [0], [1], [0, 0, 1, 1], [], []>} : vector<29x512xbf16>, vector<512x128xbf16>, vector<29x128xf32> -> vector<29x128xf32>
    %72 = vector.broadcast %3 : vector<1x128xf32> to vector<29x128xf32>
    %73 = arith.addf %71, %72 : vector<29x128xf32>
    %cst_43 = arith.constant 0.000000e+00 : f32
    %74 = vector.broadcast %cst_43 : f32 to vector<29x128xf32>
    %75 = arith.maximumf %73, %74 : vector<29x128xf32>
    %cst_44 = arith.constant dense<0.000000e+00> : vector<1x29xf32>
    %76 = tpu.matmul %5, %75, %cst_44 {dimension_numbers = #tpu.dot_dimension_numbers<[1], [1], [0], [0], [0, 0, 1, 0], [], []>} : vector<1x128xf32>, vector<29x128xf32>, vector<1x29xf32> -> vector<1x29xf32>
    %77 = vector.broadcast %6 : vector<1x1xf32> to vector<1x29xf32>
    %78 = arith.addf %76, %77 : vector<1x29xf32>
    %c1_45 = arith.constant 1 : index
    %c0_46 = arith.constant 0 : index
    %c0_47 = arith.constant 0 : index
    %79 = vector.load %arg9[%c1_45, %c0_46, %c0_47] : memref<2x1x29xf32, #tpu.memory_space<vmem>>, vector<1x1x29xf32>
    %80 = vector.shape_cast %79 : vector<1x1x29xf32> to vector<1x29xf32>
    %81 = vector.shape_cast %78 : vector<1x29xf32> to vector<1x1x29xf32>
    tpu.vector_store %arg9[%c1_45, %c0_46, %c0_47], %81 {strides = array<i32>} : memref<2x1x29xf32, #tpu.memory_space<vmem>>, vector<1x1x29xf32>,
    %c1_48 = arith.constant 1 : index
    %c0_49 = arith.constant 0 : index
    %c0_50 = arith.constant 0 : index
    %82 = vector.load %arg8[%c1_48, %c0_49, %c0_50] : memref<2x1x29xf32, #tpu.memory_space<vmem>>, vector<1x1x29xf32>
    %83 = vector.shape_cast %82 : vector<1x1x29xf32> to vector<1x29xf32>
    %c1_51 = arith.constant 1 : index
    %c0_52 = arith.constant 0 : index
    %c0_53 = arith.constant 0 : index
    %84 = vector.load %arg7[%c1_51, %c0_52, %c0_53] : memref<2x1x29xf32, #tpu.memory_space<vmem>>, vector<1x1x29xf32>
    %85 = vector.shape_cast %84 : vector<1x1x29xf32> to vector<1x29xf32>
    %cst_54 = arith.constant 0.000000e+00 : f32
    %86 = vector.broadcast %cst_54 : f32 to vector<1x29xf32>
    %87 = arith.subf %86, %78 : vector<1x29xf32>
    %cst_55 = arith.constant 0.000000e+00 : f32
    %88 = vector.broadcast %cst_55 : f32 to vector<1x29xf32>
    %89 = arith.maximumf %87, %88 : vector<1x29xf32>
    %90 = math.absf %78 : vector<1x29xf32>
    %cst_56 = arith.constant 0.000000e+00 : f32
    %91 = vector.broadcast %cst_56 : f32 to vector<1x29xf32>
    %92 = arith.subf %91, %90 : vector<1x29xf32>
    %93 = math.exp %92 : vector<1x29xf32>
    %cst_57 = arith.constant 1.000000e+00 : f32
    %94 = vector.broadcast %cst_57 : f32 to vector<1x29xf32>
    %95 = arith.addf %94, %93 : vector<1x29xf32>
    %96 = math.log %95 : vector<1x29xf32>
    %97 = arith.addf %89, %96 : vector<1x29xf32>
    %cst_58 = arith.constant 1.000000e+00 : f32
    %98 = vector.broadcast %cst_58 : f32 to vector<1x29xf32>
    %99 = arith.subf %98, %83 : vector<1x29xf32>
    %100 = arith.mulf %99, %78 : vector<1x29xf32>
    %cst_59 = arith.constant 2.130000e+00 : f32
    %101 = vector.broadcast %cst_59 : f32 to vector<1x29xf32>
    %102 = arith.mulf %101, %83 : vector<1x29xf32>
    %cst_60 = arith.constant 1.000000e+00 : f32
    %103 = vector.broadcast %cst_60 : f32 to vector<1x29xf32>
    %104 = arith.subf %103, %83 : vector<1x29xf32>
    %105 = arith.addf %102, %104 : vector<1x29xf32>
    %106 = arith.mulf %105, %97 : vector<1x29xf32>
    %107 = arith.addf %100, %106 : vector<1x29xf32>
    %108 = arith.mulf %85, %107 : vector<1x29xf32>
    %cst_61 = arith.constant dense<0.000000e+00> : vector<1xf32>
    %109 = vector.multi_reduction <add>, %108, %cst_61 [1] : vector<1x29xf32> to vector<1xf32>
    %110 = vector.shape_cast %109 : vector<1xf32> to vector<1x1xf32>
    %111 = arith.addf %58, %110 : vector<1x1xf32>
    %cst_62 = arith.constant dense<0.000000e+00> : vector<1xf32>
    %112 = vector.multi_reduction <add>, %85, %cst_62 [1] : vector<1x29xf32> to vector<1xf32>
    %113 = vector.shape_cast %112 : vector<1xf32> to vector<1x1xf32>
    %114 = arith.addf %61, %113 : vector<1x1xf32>
    %115 = arith.divf %111, %114 : vector<1x1xf32>
    %c0_63 = arith.constant 0 : index
    %c0_64 = arith.constant 0 : index
    %116 = vector.load %arg10[%c0_63, %c0_64] : memref<1x1xf32, #tpu.memory_space<vmem>>, vector<1x1xf32>
    tpu.vector_store %arg10[%c0_63, %c0_64], %115 {strides = array<i32>} : memref<1x1xf32, #tpu.memory_space<vmem>>, vector<1x1xf32>,
    return
  }
}

</mosaic_0001>

<llo_original>
// kernel: binary_classifier_region_abnormal.1
$region0: #{binary_classifier_region_abnormal.1}
  #allocation0 [shape = 'u32[]', space=smem, size = 0x4, offset = 0x4, fixed_abs, tag = 'smem constant byte address 0x4 - core index']
  #allocation1 [shape = 'u32[144,128]{1,0:T(1,128)}', space=vmem, size = 0x12000, scoped, tag = 'internal scratch']
  #allocation2 [shape = 'f32[1,1]{1,0:T(1,128)S(1)}', space=vmem, size = 0x200, scoped, tag = 'scoped memory for binary_classifier_region_abnormal.1']
  %s0 = inlined_call_operand.vmem [shape: f32[2,29,1024], index: 0, kind: input, shape index: {}]
  %s1 = inlined_call_operand.hbm [shape: bf16[1024,512], index: 1, kind: input, shape index: {}]
  %s2 = inlined_call_operand.vmem [shape: f32[1,512], index: 2, kind: input, shape index: {}]
  %s3 = inlined_call_operand.vmem [shape: bf16[512,128], index: 3, kind: input, shape index: {}]
  %s4 = inlined_call_operand.vmem [shape: f32[1,128], index: 4, kind: input, shape index: {}]
  %s5 = inlined_call_operand.vmem [shape: bf16[1,128], index: 5, kind: input, shape index: {}]
  %s6 = inlined_call_operand.<no memory space> [shape: f32[1,1], index: 6, kind: input, shape index: {}]
  %s7 = inlined_call_operand.vmem [shape: f32[2,1,29], index: 7, kind: input, shape index: {}]
  %s8 = inlined_call_operand.vmem [shape: f32[2,1,29], index: 8, kind: input, shape index: {}]
  %s9 = inlined_call_operand.vmem [shape: f32[2,1,29], index: 9, kind: output, shape index: {0}]
  %s10 = inlined_call_operand.hbm [shape: f32[1,1], index: 10, kind: output, shape index: {1}]
  %11 = xla_tuple %s9, %s10
  %s12 = sld [smem:[#allocation0]]
  $region58: #{binary_classifier_region_abnormal.1} parent=0
    _
  %s14 = ssub.s32 1, %s12
  %s15 = scalar_select 0, %s14, %s12
  %v16 = vstv %s6
  %17 = vst [vmem:[#allocation2] sm:$0x1] %v16
  $region1: #{binary_classifier_region_abnormal.1} parent=0
    #allocation3 [shape = 'u8[1048576]{0}', space=vmem, size = 0x100000, scoped, tag = 'input window, operand 1, single buffered']
    #allocation4 [shape = 's32[1]{0}', space=sflag, size = 0x4, scoped, tag = 'scoped memory for binary_classifier_region_abnormal.1']
    #allocation5 [shape = 's32[1]{0}', space=sflag, size = 0x4, scoped, tag = 'scoped memory for binary_classifier_region_abnormal.1']
    #allocation6 [shape = 'u8[512]{0}', space=vmem, size = 0x400, scoped, tag = 'output window, operand 1, single buffered']
    %18 = vsyncpa [#allocation4], 0
    %19 = vsyncpa [#allocation5], 0
    // Predicated region
    $region2: #{binary_classifier_region_abnormal.1} parent=1 // pred_check
      _
    $region3: #{binary_classifier_region_abnormal.1} parent=1 // pred_check_branch
      %21 = sbr.rel (0) target = $region5
    $region4: #{binary_classifier_region_abnormal.1} parent=1 // pred_region
      _
    $region5: #{binary_classifier_region_abnormal.1} parent=1 // pred_fallthru
      _
    // Predicated region
    $region6: #{binary_classifier_region_abnormal.1} parent=1 // pred_check
      _
    $region7: #{binary_classifier_region_abnormal.1} parent=1 // pred_check_branch
      %23 = sbr.rel (0) target = $region9
    $region8: #{binary_classifier_region_abnormal.1} parent=1 // pred_region
      %s25 = ssub.s32 32768, 32768
      %26 = vsyncadd [#allocation4], %s25
      %s27 = sshll.u32 [#allocation3], 4
      %s28 = int_to_ptr.vmem [resolvable:$true] %s27
      %33 = dma.hbm_to_vmem [thread:$0]  %s1, 32768, %s28, [#allocation4], 256, 256, 16
    $region9: #{binary_classifier_region_abnormal.1} parent=1 // pred_fallthru
      _
    // Predicated region
    $region10: #{binary_classifier_region_abnormal.1} parent=1 // pred_check
      _
    $region11: #{binary_classifier_region_abnormal.1} parent=1 // pred_check_branch
      %35 = sbr.rel (0) target = $region13
    $region12: #{binary_classifier_region_abnormal.1} parent=1 // pred_region
      _
    $region13: #{binary_classifier_region_abnormal.1} parent=1 // pred_fallthru
      _
    // Predicated region
    $region14: #{binary_classifier_region_abnormal.1} parent=1 // pred_check
      _
    $region15: #{binary_classifier_region_abnormal.1} parent=1 // pred_check_branch
      %37 = sbr.rel (0) target = $region17
    $region16: #{binary_classifier_region_abnormal.1} parent=1 // pred_region
      _
    $region17: #{binary_classifier_region_abnormal.1} parent=1 // pred_fallthru
      _
    // Predicated region
    $region18: #{binary_classifier_region_abnormal.1} parent=1 // pred_check
      _
    $region19: #{binary_classifier_region_abnormal.1} parent=1 // pred_check_branch
      %39 = sbr.rel (0) target = $region21
    $region20: #{binary_classifier_region_abnormal.1} parent=1 // pred_region
      _
    $region21: #{binary_classifier_region_abnormal.1} parent=1 // pred_fallthru
      _
    // Predicated region
    $region22: #{binary_classifier_region_abnormal.1} parent=1 // pred_check
      _
    $region23: #{binary_classifier_region_abnormal.1} parent=1 // pred_check_branch
      %41 = sbr.rel (0) target = $region25
    $region24: #{binary_classifier_region_abnormal.1} parent=1 // pred_region
      _
    $region25: #{binary_classifier_region_abnormal.1} parent=1 // pred_fallthru
      _
    // Predicated region
    $region26: #{binary_classifier_region_abnormal.1} parent=1 // pred_check
      _
    $region27: #{binary_classifier_region_abnormal.1} parent=1 // pred_check_branch
      %43 = sbr.rel (0) target = $region29
    $region28: #{binary_classifier_region_abnormal.1} parent=1 // pred_region
      _
    $region29: #{binary_classifier_region_abnormal.1} parent=1 // pred_fallthru
      _
    // Predicated region
    $region30: #{binary_classifier_region_abnormal.1} parent=1 // pred_check
      _
    $region31: #{binary_classifier_region_abnormal.1} parent=1 // pred_check_branch
      %45 = sbr.rel (0) target = $region33
    $region32: #{binary_classifier_region_abnormal.1} parent=1 // pred_region
      _
    $region33: #{binary_classifier_region_abnormal.1} parent=1 // pred_fallthru
      _
    // Predicated region
    $region34: #{binary_classifier_region_abnormal.1} parent=1 // pred_check
      _
    $region35: #{binary_classifier_region_abnormal.1} parent=1 // pred_check_branch
      %47 = sbr.rel (0) target = $region37
    $region36: #{binary_classifier_region_abnormal.1} parent=1 // pred_region
      _
    $region37: #{binary_classifier_region_abnormal.1} parent=1 // pred_fallthru
      _
    // Predicated region
    $region38: #{binary_classifier_region_abnormal.1} parent=1 // pred_check
      _
    $region39: #{binary_classifier_region_abnormal.1} parent=1 // pred_check_branch
      %49 = sbr.rel (0) target = $region41
    $region40: #{binary_classifier_region_abnormal.1} parent=1 // pred_region
      %50 = dma.done [#allocation4], 32768
    $region41: #{binary_classifier_region_abnormal.1} parent=1 // pred_fallthru
      _
    %v52 = vld [vmem:[#allocation3] sm:$0xff]
    %v53 = vld [vmem:[#allocation3 + $0x8] sm:$0xff]
    %v54 = vld [vmem:[#allocation3 + $0x10] sm:$0xff]
    %v55 = vld [vmem:[#allocation3 + $0x18] sm:$0xff]
    %v56 = vld [vmem:[#allocation3 + $0x20] sm:$0xff]
    %v57 = vld [vmem:[#allocation3 + $0x28] sm:$0xff]
    %v58 = vld [vmem:[#allocation3 + $0x30] sm:$0xff]
    %v59 = vld [vmem:[#allocation3 + $0x38] sm:$0xff]
    %v60 = vld [vmem:[#allocation3 + $0x40] sm:$0xff]
    %v61 = vld [vmem:[#allocation3 + $0x48] sm:$0xff]
    %v62 = vld [vmem:[#allocation3 + $0x50] sm:$0xff]
    %v63 = vld [vmem:[#allocation3 + $0x58] sm:$0xff]
    %v64 = vld [vmem:[#allocation3 + $0x60] sm:$0xff]
    %v65 = vld [vmem:[#allocation3 + $0x68] sm:$0xff]
    %v66 = vld [vmem:[#allocation3 + $0x70] sm:$0xff]
    %v67 = vld [vmem:[#allocation3 + $0x78] sm:$0xff]
    %v68 = vld [vmem:[#allocation3 + $0x80] sm:$0xff]
    %v69 = vld [vmem:[#allocation3 + $0x88] sm:$0xff]
    %v70 = vld [vmem:[#allocation3 + $0x90] sm:$0xff]
    %v71 = vld [vmem:[#allocation3 + $0x98] sm:$0xff]
    %v72 = vld [vmem:[#allocation3 + $0xa0] sm:$0xff]
    %v73 = vld [vmem:[#allocation3 + $0xa8] sm:$0xff]
    %v74 = vld [vmem:[#allocation3 + $0xb0] sm:$0xff]
    %v75 = vld [vmem:[#allocation3 + $0xb8] sm:$0xff]
    %v76 = vld [vmem:[#allocation3 + $0xc0] sm:$0xff]
    %v77 = vld [vmem:[#allocation3 + $0xc8] sm:$0xff]
    %v78 = vld [vmem:[#allocation3 + $0xd0] sm:$0xff]
    %v79 = vld [vmem:[#allocation3 + $0xd8] sm:$0xff]
    %v80 = vld [vmem:[#allocation3 + $0xe0] sm:$0xff]
    %v81 = vld [vmem:[#allocation3 + $0xe8] sm:$0xff]
    %v82 = vld [vmem:[#allocation3 + $0xf0] sm:$0xff]
    %v83 = vld [vmem:[#allocation3 + $0xf8] sm:$0xff]
    %v84 = vld [vmem:[#allocation3 + $0x100] sm:$0xff]
    %v85 = vld [vmem:[#allocation3 + $0x108] sm:$0xff]
    %v86 = vld [vmem:[#allocation3 + $0x110] sm:$0xff]
    %v87 = vld [vmem:[#allocation3 + $0x118] sm:$0xff]
    %v88 = vld [vmem:[#allocation3 + $0x120] sm:$0xff]
    %v89 = vld [vmem:[#allocation3 + $0x128] sm:$0xff]
    %v90 = vld [vmem:[#allocation3 + $0x130] sm:$0xff]
    %v91 = vld [vmem:[#allocation3 + $0x138] sm:$0xff]
    %v92 = vld [vmem:[#allocation3 + $0x140] sm:$0xff]
    %v93 = vld [vmem:[#allocation3 + $0x148] sm:$0xff]
    %v94 = vld [vmem:[#allocation3 + $0x150] sm:$0xff]
    %v95 = vld [vmem:[#allocation3 + $0x158] sm:$0xff]
    %v96 = vld [vmem:[#allocation3 + $0x160] sm:$0xff]
    %v97 = vld [vmem:[#allocation3 + $0x168] sm:$0xff]
    %v98 = vld [vmem:[#allocation3 + $0x170] sm:$0xff]
    %v99 = vld [vmem:[#allocation3 + $0x178] sm:$0xff]
    %v100 = vld [vmem:[#allocation3 + $0x180] sm:$0xff]
    %v101 = vld [vmem:[#allocation3 + $0x188] sm:$0xff]
    %v102 = vld [vmem:[#allocation3 + $0x190] sm:$0xff]
    %v103 = vld [vmem:[#allocation3 + $0x198] sm:$0xff]
    %v104 = vld [vmem:[#allocation3 + $0x1a0] sm:$0xff]
    %v105 = vld [vmem:[#allocation3 + $0x1a8] sm:$0xff]
    %v106 = vld [vmem:[#allocation3 + $0x1b0] sm:$0xff]
    %v107 = vld [vmem:[#allocation3 + $0x1b8] sm:$0xff]
    %v108 = vld [vmem:[#allocation3 + $0x1c0] sm:$0xff]
    %v109 = vld [vmem:[#allocation3 + $0x1c8] sm:$0xff]
    %v110 = vld [vmem:[#allocation3 + $0x1d0] sm:$0xff]
    %v111 = vld [vmem:[#allocation3 + $0x1d8] sm:$0xff]
    %v112 = vld [vmem:[#allocation3 + $0x1e0] sm:$0xff]
    %v113 = vld [vmem:[#allocation3 + $0x1e8] sm:$0xff]
    %v114 = vld [vmem:[#allocation3 + $0x1f0] sm:$0xff]
    %v115 = vld [vmem:[#allocation3 + $0x1f8] sm:$0xff]
    %v116 = vld [vmem:[#allocation3 + $0x200] sm:$0xff]
    %v117 = vld [vmem:[#allocation3 + $0x208] sm:$0xff]
    %v118 = vld [vmem:[#allocation3 + $0x210] sm:$0xff]
    %v119 = vld [vmem:[#allocation3 + $0x218] sm:$0xff]
    %v120 = vld [vmem:[#allocation3 + $0x220] sm:$0xff]
    %v121 = vld [vmem:[#allocation3 + $0x228] sm:$0xff]
    %v122 = vld [vmem:[#allocation3 + $0x230] sm:$0xff]
    %v123 = vld [vmem:[#allocation3 + $0x238] sm:$0xff]
    %v124 = vld [vmem:[#allocation3 + $0x240] sm:$0xff]
    %v125 = vld [vmem:[#allocation3 + $0x248] sm:$0xff]
    %v126 = vld [vmem:[#allocation3 + $0x250] sm:$0xff]
    %v127 = vld [vmem:[#allocation3 + $0x258] sm:$0xff]
    %v128 = vld [vmem:[#allocation3 + $0x260] sm:$0xff]
    %v129 = vld [vmem:[#allocation3 + $0x268] sm:$0xff]
    %v130 = vld [vmem:[#allocation3 + $0x270] sm:$0xff]
    %v131 = vld [vmem:[#allocation3 + $0x278] sm:$0xff]
    %v132 = vld [vmem:[#allocation3 + $0x280] sm:$0xff]
    %v133 = vld [vmem:[#allocation3 + $0x288] sm:$0xff]
    %v134 = vld [vmem:[#allocation3 + $0x290] sm:$0xff]
    %v135 = vld [vmem:[#allocation3 + $0x298] sm:$0xff]
    %v136 = vld [vmem:[#allocation3 + $0x2a0] sm:$0xff]
    %v137 = vld [vmem:[#allocation3 + $0x2a8] sm:$0xff]
    %v138 = vld [vmem:[#allocation3 + $0x2b0] sm:$0xff]
    %v139 = vld [vmem:[#allocation3 + $0x2b8] sm:$0xff]
    %v140 = vld [vmem:[#allocation3 + $0x2c0] sm:$0xff]
    %v141 = vld [vmem:[#allocation3 + $0x2c8] sm:$0xff]
    %v142 = vld [vmem:[#allocation3 + $0x2d0] sm:$0xff]
    %v143 = vld [vmem:[#allocation3 + $0x2d8] sm:$0xff]
    %v144 = vld [vmem:[#allocation3 + $0x2e0] sm:$0xff]
    %v145 = vld [vmem:[#allocation3 + $0x2e8] sm:$0xff]
    %v146 = vld [vmem:[#allocation3 + $0x2f0] sm:$0xff]
    %v147 = vld [vmem:[#allocation3 + $0x2f8] sm:$0xff]
    %v148 = vld [vmem:[#allocation3 + $0x300] sm:$0xff]
    %v149 = vld [vmem:[#allocation3 + $0x308] sm:$0xff]
    %v150 = vld [vmem:[#allocation3 + $0x310] sm:$0xff]
    %v151 = vld [vmem:[#allocation3 + $0x318] sm:$0xff]
    %v152 = vld [vmem:[#allocation3 + $0x320] sm:$0xff]
    %v153 = vld [vmem:[#allocation3 + $0x328] sm:$0xff]
    %v154 = vld [vmem:[#allocation3 + $0x330] sm:$0xff]
    %v155 = vld [vmem:[#allocation3 + $0x338] sm:$0xff]
    %v156 = vld [vmem:[#allocation3 + $0x340] sm:$0xff]
    %v157 = vld [vmem:[#allocation3 + $0x348] sm:$0xff]
    %v158 = vld [vmem:[#allocation3 + $0x350] sm:$0xff]
    %v159 = vld [vmem:[#allocation3 + $0x358] sm:$0xff]
    %v160 = vld [vmem:[#allocation3 + $0x360] sm:$0xff]
    %v161 = vld [vmem:[#allocation3 + $0x368] sm:$0xff]
    %v162 = vld [vmem:[#allocation3 + $0x370] sm:$0xff]
    %v163 = vld [vmem:[#allocation3 + $0x378] sm:$0xff]
    %v164 = vld [vmem:[#allocation3 + $0x380] sm:$0xff]
    %v165 = vld [vmem:[#allocation3 + $0x388] sm:$0xff]
    %v166 = vld [vmem:[#allocation3 + $0x390] sm:$0xff]
    %v167 = vld [vmem:[#allocation3 + $0x398] sm:$0xff]
    %v168 = vld [vmem:[#allocation3 + $0x3a0] sm:$0xff]
    %v169 = vld [vmem:[#allocation3 + $0x3a8] sm:$0xff]
    %v170 = vld [vmem:[#allocation3 + $0x3b0] sm:$0xff]
    %v171 = vld [vmem:[#allocation3 + $0x3b8] sm:$0xff]
    %v172 = vld [vmem:[#allocation3 + $0x3c0] sm:$0xff]
    %v173 = vld [vmem:[#allocation3 + $0x3c8] sm:$0xff]
    %v174 = vld [vmem:[#allocation3 + $0x3d0] sm:$0xff]
    %v175 = vld [vmem:[#allocation3 + $0x3d8] sm:$0xff]
    %v176 = vld [vmem:[#allocation3 + $0x3e0] sm:$0xff]
    %v177 = vld [vmem:[#allocation3 + $0x3e8] sm:$0xff]
    %v178 = vld [vmem:[#allocation3 + $0x3f0] sm:$0xff]
    %v179 = vld [vmem:[#allocation3 + $0x3f8] sm:$0xff]
    %v180 = vld [vmem:[#allocation3 + $0x400] sm:$0xff]
    %v181 = vld [vmem:[#allocation3 + $0x408] sm:$0xff]
    %v182 = vld [vmem:[#allocation3 + $0x410] sm:$0xff]
    %v183 = vld [vmem:[#allocation3 + $0x418] sm:$0xff]
    %v184 = vld [vmem:[#allocation3 + $0x420] sm:$0xff]
    %v185 = vld [vmem:[#allocation3 + $0x428] sm:$0xff]
    %v186 = vld [vmem:[#allocation3 + $0x430] sm:$0xff]
    %v187 = vld [vmem:[#allocation3 + $0x438] sm:$0xff]
    %v188 = vld [vmem:[#allocation3 + $0x440] sm:$0xff]
    %v189 = vld [vmem:[#allocation3 + $0x448] sm:$0xff]
    %v190 = vld [vmem:[#allocation3 + $0x450] sm:$0xff]
    %v191 = vld [vmem:[#allocation3 + $0x458] sm:$0xff]
    %v192 = vld [vmem:[#allocation3 + $0x460] sm:$0xff]
    %v193 = vld [vmem:[#allocation3 + $0x468] sm:$0xff]
    %v194 = vld [vmem:[#allocation3 + $0x470] sm:$0xff]
    %v195 = vld [vmem:[#allocation3 + $0x478] sm:$0xff]
    %v196 = vld [vmem:[#allocation3 + $0x480] sm:$0xff]
    %v197 = vld [vmem:[#allocation3 + $0x488] sm:$0xff]
    %v198 = vld [vmem:[#allocation3 + $0x490] sm:$0xff]
    %v199 = vld [vmem:[#allocation3 + $0x498] sm:$0xff]
    %v200 = vld [vmem:[#allocation3 + $0x4a0] sm:$0xff]
    %v201 = vld [vmem:[#allocation3 + $0x4a8] sm:$0xff]
    %v202 = vld [vmem:[#allocation3 + $0x4b0] sm:$0xff]
    %v203 = vld [vmem:[#allocation3 + $0x4b8] sm:$0xff]
    %v204 = vld [vmem:[#allocation3 + $0x4c0] sm:$0xff]
    %v205 = vld [vmem:[#allocation3 + $0x4c8] sm:$0xff]
    %v206 = vld [vmem:[#allocation3 + $0x4d0] sm:$0xff]
    %v207 = vld [vmem:[#allocation3 + $0x4d8] sm:$0xff]
    %v208 = vld [vmem:[#allocation3 + $0x4e0] sm:$0xff]
    %v209 = vld [vmem:[#allocation3 + $0x4e8] sm:$0xff]
    %v210 = vld [vmem:[#allocation3 + $0x4f0] sm:$0xff]
    %v211 = vld [vmem:[#allocation3 + $0x4f8] sm:$0xff]
    %v212 = vld [vmem:[#allocation3 + $0x500] sm:$0xff]
    %v213 = vld [vmem:[#allocation3 + $0x508] sm:$0xff]
    %v214 = vld [vmem:[#allocation3 + $0x510] sm:$0xff]
    %v215 = vld [vmem:[#allocation3 + $0x518] sm:$0xff]
    %v216 = vld [vmem:[#allocation3 + $0x520] sm:$0xff]
    %v217 = vld [vmem:[#allocation3 + $0x528] sm:$0xff]
    %v218 = vld [vmem:[#allocation3 + $0x530] sm:$0xff]
    %v219 = vld [vmem:[#allocation3 + $0x538] sm:$0xff]
    %v220 = vld [vmem:[#allocation3 + $0x540] sm:$0xff]
    %v221 = vld [vmem:[#allocation3 + $0x548] sm:$0xff]
    %v222 = vld [vmem:[#allocation3 + $0x550] sm:$0xff]
    %v223 = vld [vmem:[#allocation3 + $0x558] sm:$0xff]
    %v224 = vld [vmem:[#allocation3 + $0x560] sm:$0xff]
    %v225 = vld [vmem:[#allocation3 + $0x568] sm:$0xff]
    %v226 = vld [vmem:[#allocation3 + $0x570] sm:$0xff]
    %v227 = vld [vmem:[#allocation3 + $0x578] sm:$0xff]
    %v228 = vld [vmem:[#allocation3 + $0x580] sm:$0xff]
    %v229 = vld [vmem:[#allocation3 + $0x588] sm:$0xff]
    %v230 = vld [vmem:[#allocation3 + $0x590] sm:$0xff]
    %v231 = vld [vmem:[#allocation3 + $0x598] sm:$0xff]
    %v232 = vld [vmem:[#allocation3 + $0x5a0] sm:$0xff]
    %v233 = vld [vmem:[#allocation3 + $0x5a8] sm:$0xff]
    %v234 = vld [vmem:[#allocation3 + $0x5b0] sm:$0xff]
    %v235 = vld [vmem:[#allocation3 + $0x5b8] sm:$0xff]
    %v236 = vld [vmem:[#allocation3 + $0x5c0] sm:$0xff]
    %v237 = vld [vmem:[#allocation3 + $0x5c8] sm:$0xff]
    %v238 = vld [vmem:[#allocation3 + $0x5d0] sm:$0xff]
    %v239 = vld [vmem:[#allocation3 + $0x5d8] sm:$0xff]
    %v240 = vld [vmem:[#allocation3 + $0x5e0] sm:$0xff]
    %v241 = vld [vmem:[#allocation3 + $0x5e8] sm:$0xff]
    %v242 = vld [vmem:[#allocation3 + $0x5f0] sm:$0xff]
    %v243 = vld [vmem:[#allocation3 + $0x5f8] sm:$0xff]
    %v244 = vld [vmem:[#allocation3 + $0x600] sm:$0xff]
    %v245 = vld [vmem:[#allocation3 + $0x608] sm:$0xff]
    %v246 = vld [vmem:[#allocation3 + $0x610] sm:$0xff]
    %v247 = vld [vmem:[#allocation3 + $0x618] sm:$0xff]
    %v248 = vld [vmem:[#allocation3 + $0x620] sm:$0xff]
    %v249 = vld [vmem:[#allocation3 + $0x628] sm:$0xff]
    %v250 = vld [vmem:[#allocation3 + $0x630] sm:$0xff]
    %v251 = vld [vmem:[#allocation3 + $0x638] sm:$0xff]
    %v252 = vld [vmem:[#allocation3 + $0x640] sm:$0xff]
    %v253 = vld [vmem:[#allocation3 + $0x648] sm:$0xff]
    %v254 = vld [vmem:[#allocation3 + $0x650] sm:$0xff]
    %v255 = vld [vmem:[#allocation3 + $0x658] sm:$0xff]
    %v256 = vld [vmem:[#allocation3 + $0x660] sm:$0xff]
    %v257 = vld [vmem:[#allocation3 + $0x668] sm:$0xff]
    %v258 = vld [vmem:[#allocation3 + $0x670] sm:$0xff]
    %v259 = vld [vmem:[#allocation3 + $0x678] sm:$0xff]
    %v260 = vld [vmem:[#allocation3 + $0x680] sm:$0xff]
    %v261 = vld [vmem:[#allocation3 + $0x688] sm:$0xff]
    %v262 = vld [vmem:[#allocation3 + $0x690] sm:$0xff]
    %v263 = vld [vmem:[#allocation3 + $0x698] sm:$0xff]
    %v264 = vld [vmem:[#allocation3 + $0x6a0] sm:$0xff]
    %v265 = vld [vmem:[#allocation3 + $0x6a8] sm:$0xff]
    %v266 = vld [vmem:[#allocation3 + $0x6b0] sm:$0xff]
    %v267 = vld [vmem:[#allocation3 + $0x6b8] sm:$0xff]
    %v268 = vld [vmem:[#allocation3 + $0x6c0] sm:$0xff]
    %v269 = vld [vmem:[#allocation3 + $0x6c8] sm:$0xff]
    %v270 = vld [vmem:[#allocation3 + $0x6d0] sm:$0xff]
    %v271 = vld [vmem:[#allocation3 + $0x6d8] sm:$0xff]
    %v272 = vld [vmem:[#allocation3 + $0x6e0] sm:$0xff]
    %v273 = vld [vmem:[#allocation3 + $0x6e8] sm:$0xff]
    %v274 = vld [vmem:[#allocation3 + $0x6f0] sm:$0xff]
    %v275 = vld [vmem:[#allocation3 + $0x6f8] sm:$0xff]
    %v276 = vld [vmem:[#allocation3 + $0x700] sm:$0xff]
    %v277 = vld [vmem:[#allocation3 + $0x708] sm:$0xff]
    %v278 = vld [vmem:[#allocation3 + $0x710] sm:$0xff]
    %v279 = vld [vmem:[#allocation3 + $0x718] sm:$0xff]
    %v280 = vld [vmem:[#allocation3 + $0x720] sm:$0xff]
    %v281 = vld [vmem:[#allocation3 + $0x728] sm:$0xff]
    %v282 = vld [vmem:[#allocation3 + $0x730] sm:$0xff]
    %v283 = vld [vmem:[#allocation3 + $0x738] sm:$0xff]
    %v284 = vld [vmem:[#allocation3 + $0x740] sm:$0xff]
    %v285 = vld [vmem:[#allocation3 + $0x748] sm:$0xff]
    %v286 = vld [vmem:[#allocation3 + $0x750] sm:$0xff]
    %v287 = vld [vmem:[#allocation3 + $0x758] sm:$0xff]
    %v288 = vld [vmem:[#allocation3 + $0x760] sm:$0xff]
    %v289 = vld [vmem:[#allocation3 + $0x768] sm:$0xff]
    %v290 = vld [vmem:[#allocation3 + $0x770] sm:$0xff]
    %v291 = vld [vmem:[#allocation3 + $0x778] sm:$0xff]
    %v292 = vld [vmem:[#allocation3 + $0x780] sm:$0xff]
    %v293 = vld [vmem:[#allocation3 + $0x788] sm:$0xff]
    %v294 = vld [vmem:[#allocation3 + $0x790] sm:$0xff]
    %v295 = vld [vmem:[#allocation3 + $0x798] sm:$0xff]
    %v296 = vld [vmem:[#allocation3 + $0x7a0] sm:$0xff]
    %v297 = vld [vmem:[#allocation3 + $0x7a8] sm:$0xff]
    %v298 = vld [vmem:[#allocation3 + $0x7b0] sm:$0xff]
    %v299 = vld [vmem:[#allocation3 + $0x7b8] sm:$0xff]
    %v300 = vld [vmem:[#allocation3 + $0x7c0] sm:$0xff]
    %v301 = vld [vmem:[#allocation3 + $0x7c8] sm:$0xff]
    %v302 = vld [vmem:[#allocation3 + $0x7d0] sm:$0xff]
    %v303 = vld [vmem:[#allocation3 + $0x7d8] sm:$0xff]
    %v304 = vld [vmem:[#allocation3 + $0x7e0] sm:$0xff]
    %v305 = vld [vmem:[#allocation3 + $0x7e8] sm:$0xff]
    %v306 = vld [vmem:[#allocation3 + $0x7f0] sm:$0xff]
    %v307 = vld [vmem:[#allocation3 + $0x7f8] sm:$0xff]
    %v308 = vld [vmem:[%s2] sm:$0xf]
    %v309 = vld [vmem:[%s3] sm:$0xf]
    %v310 = vld [vmem:[%s3 + $0x4] sm:$0xf]
    %v311 = vld [vmem:[%s3 + $0x8] sm:$0xf]
    %v312 = vld [vmem:[%s3 + $0xc] sm:$0xf]
    %v313 = vld [vmem:[%s3 + $0x10] sm:$0xf]
    %v314 = vld [vmem:[%s3 + $0x14] sm:$0xf]
    %v315 = vld [vmem:[%s3 + $0x18] sm:$0xf]
    %v316 = vld [vmem:[%s3 + $0x1c] sm:$0xf]
    %v317 = vld [vmem:[%s3 + $0x20] sm:$0xf]
    %v318 = vld [vmem:[%s3 + $0x24] sm:$0xf]
    %v319 = vld [vmem:[%s3 + $0x28] sm:$0xf]
    %v320 = vld [vmem:[%s3 + $0x2c] sm:$0xf]
    %v321 = vld [vmem:[%s3 + $0x30] sm:$0xf]
    %v322 = vld [vmem:[%s3 + $0x34] sm:$0xf]
    %v323 = vld [vmem:[%s3 + $0x38] sm:$0xf]
    %v324 = vld [vmem:[%s3 + $0x3c] sm:$0xf]
    %v325 = vld [vmem:[%s3 + $0x40] sm:$0xf]
    %v326 = vld [vmem:[%s3 + $0x44] sm:$0xf]
    %v327 = vld [vmem:[%s3 + $0x48] sm:$0xf]
    %v328 = vld [vmem:[%s3 + $0x4c] sm:$0xf]
    %v329 = vld [vmem:[%s3 + $0x50] sm:$0xf]
    %v330 = vld [vmem:[%s3 + $0x54] sm:$0xf]
    %v331 = vld [vmem:[%s3 + $0x58] sm:$0xf]
    %v332 = vld [vmem:[%s3 + $0x5c] sm:$0xf]
    %v333 = vld [vmem:[%s3 + $0x60] sm:$0xf]
    %v334 = vld [vmem:[%s3 + $0x64] sm:$0xf]
    %v335 = vld [vmem:[%s3 + $0x68] sm:$0xf]
    %v336 = vld [vmem:[%s3 + $0x6c] sm:$0xf]
    %v337 = vld [vmem:[%s3 + $0x70] sm:$0xf]
    %v338 = vld [vmem:[%s3 + $0x74] sm:$0xf]
    %v339 = vld [vmem:[%s3 + $0x78] sm:$0xf]
    %v340 = vld [vmem:[%s3 + $0x7c] sm:$0xf]
    %v341 = vld [vmem:[%s3 + $0x80] sm:$0xf]
    %v342 = vld [vmem:[%s3 + $0x84] sm:$0xf]
    %v343 = vld [vmem:[%s3 + $0x88] sm:$0xf]
    %v344 = vld [vmem:[%s3 + $0x8c] sm:$0xf]
    %v345 = vld [vmem:[%s3 + $0x90] sm:$0xf]
    %v346 = vld [vmem:[%s3 + $0x94] sm:$0xf]
    %v347 = vld [vmem:[%s3 + $0x98] sm:$0xf]
    %v348 = vld [vmem:[%s3 + $0x9c] sm:$0xf]
    %v349 = vld [vmem:[%s3 + $0xa0] sm:$0xf]
    %v350 = vld [vmem:[%s3 + $0xa4] sm:$0xf]
    %v351 = vld [vmem:[%s3 + $0xa8] sm:$0xf]
    %v352 = vld [vmem:[%s3 + $0xac] sm:$0xf]
    %v353 = vld [vmem:[%s3 + $0xb0] sm:$0xf]
    %v354 = vld [vmem:[%s3 + $0xb4] sm:$0xf]
    %v355 = vld [vmem:[%s3 + $0xb8] sm:$0xf]
    %v356 = vld [vmem:[%s3 + $0xbc] sm:$0xf]
    %v357 = vld [vmem:[%s3 + $0xc0] sm:$0xf]
    %v358 = vld [vmem:[%s3 + $0xc4] sm:$0xf]
    %v359 = vld [vmem:[%s3 + $0xc8] sm:$0xf]
    %v360 = vld [vmem:[%s3 + $0xcc] sm:$0xf]
    %v361 = vld [vmem:[%s3 + $0xd0] sm:$0xf]
    %v362 = vld [vmem:[%s3 + $0xd4] sm:$0xf]
    %v363 = vld [vmem:[%s3 + $0xd8] sm:$0xf]
    %v364 = vld [vmem:[%s3 + $0xdc] sm:$0xf]
    %v365 = vld [vmem:[%s3 + $0xe0] sm:$0xf]
    %v366 = vld [vmem:[%s3 + $0xe4] sm:$0xf]
    %v367 = vld [vmem:[%s3 + $0xe8] sm:$0xf]
    %v368 = vld [vmem:[%s3 + $0xec] sm:$0xf]
    %v369 = vld [vmem:[%s3 + $0xf0] sm:$0xf]
    %v370 = vld [vmem:[%s3 + $0xf4] sm:$0xf]
    %v371 = vld [vmem:[%s3 + $0xf8] sm:$0xf]
    %v372 = vld [vmem:[%s3 + $0xfc] sm:$0xf]
    %v373 = vld [vmem:[%s4] sm:$0x1]
    %v374 = vld [vmem:[%s5] sm:$0x1]
    %v375 = vunpack.c.l.bf16 %v374
    %v376 = vld [vmem:[#allocation2] sm:$0x1]
    %v377 = vld [vmem:[%s0] sm:$0xff]
    %v378 = vld [vmem:[%s0 + $0x8] sm:$0xff]
    %v379 = vld [vmem:[%s0 + $0x10] sm:$0xff]
    %v380 = vld [vmem:[%s0 + $0x18] sm:$0xff]
    %v381 = vld [vmem:[%s0 + $0x20] sm:$0xff]
    %v382 = vld [vmem:[%s0 + $0x28] sm:$0xff]
    %v383 = vld [vmem:[%s0 + $0x30] sm:$0xff]
    %v384 = vld [vmem:[%s0 + $0x38] sm:$0xff]
    %v385 = vld [vmem:[%s0 + $0x40] sm:$0xff]
    %v386 = vld [vmem:[%s0 + $0x48] sm:$0xff]
    %v387 = vld [vmem:[%s0 + $0x50] sm:$0xff]
    %v388 = vld [vmem:[%s0 + $0x58] sm:$0xff]
    %v389 = vld [vmem:[%s0 + $0x60] sm:$0xff]
    %v390 = vld [vmem:[%s0 + $0x68] sm:$0xff]
    %v391 = vld [vmem:[%s0 + $0x70] sm:$0xff]
    %v392 = vld [vmem:[%s0 + $0x78] sm:$0xff]
    %v393 = vld [vmem:[%s0 + $0x80] sm:$0xff]
    %v394 = vld [vmem:[%s0 + $0x88] sm:$0xff]
    %v395 = vld [vmem:[%s0 + $0x90] sm:$0xff]
    %v396 = vld [vmem:[%s0 + $0x98] sm:$0xff]
    %v397 = vld [vmem:[%s0 + $0xa0] sm:$0xff]
    %v398 = vld [vmem:[%s0 + $0xa8] sm:$0xff]
    %v399 = vld [vmem:[%s0 + $0xb0] sm:$0xff]
    %v400 = vld [vmem:[%s0 + $0xb8] sm:$0xff]
    %v401 = vld [vmem:[%s0 + $0xc0] sm:$0x1f]
    %v402 = vld [vmem:[%s0 + $0xc8] sm:$0x1f]
    %v403 = vld [vmem:[%s0 + $0xd0] sm:$0x1f]
    %v404 = vld [vmem:[%s0 + $0xd8] sm:$0x1f]
    %v405 = vld [vmem:[%s0 + $0xe0] sm:$0x1f]
    %v406 = vld [vmem:[%s0 + $0xe8] sm:$0x1f]
    %v407 = vld [vmem:[%s0 + $0xf0] sm:$0x1f]
    %v408 = vld [vmem:[%s0 + $0xf8] sm:$0x1f]
    %v409 = vpack.c.bf16 %v385, %v377
    %v410 = vpack.c.bf16 %v386, %v378
    %v411 = vpack.c.bf16 %v387, %v379
    %v412 = vpack.c.bf16 %v388, %v380
    %v413 = vpack.c.bf16 %v389, %v381
    %v414 = vpack.c.bf16 %v390, %v382
    %v415 = vpack.c.bf16 %v391, %v383
    %v416 = vpack.c.bf16 %v392, %v384
    %v417 = vpack.c.bf16 %v401, %v393
    %v418 = vpack.c.bf16 %v402, %v394
    %v419 = vpack.c.bf16 %v403, %v395
    %v420 = vpack.c.bf16 %v404, %v396
    %v421 = vpack.c.bf16 %v405, %v397
    %v422 = vpack.c.bf16 %v406, %v398
    %v423 = vpack.c.bf16 %v407, %v399
    %v424 = vpack.c.bf16 %v408, %v400
    %v426 = vlaneseq
    %v427 = vshrl.u32 %v426, 7
    %v428 = vsub.s32 0, %v427
    %v429 = vrot.slane %v308, %v428
    %v430 = vlaneseq
    %v431 = vshrl.u32 %v430, 7
    %v432 = vsub.s32 1, %v431
    %v433 = vrot.slane %v308, %v432
    %v434 = vlaneseq
    %v435 = vshrl.u32 %v434, 7
    %v436 = vsub.s32 2, %v435
    %v437 = vrot.slane %v308, %v436
    %v438 = vlaneseq
    %v439 = vshrl.u32 %v438, 7
    %v440 = vsub.s32 3, %v439
    %v441 = vrot.slane %v308, %v440
    %v702 = vunpack.c.l.b16 %v52
    %v703 = vunpack.c.h.b16 %v52
    %v704 = vunpack.c.l.b16 %v53
    %v705 = vunpack.c.h.b16 %v53
    %v706 = vunpack.c.l.b16 %v54
    %v707 = vunpack.c.h.b16 %v54
    %v708 = vunpack.c.l.b16 %v55
    %v709 = vunpack.c.h.b16 %v55
    %v710 = vunpack.c.l.b16 %v56
    %v711 = vunpack.c.h.b16 %v56
    %v712 = vunpack.c.l.b16 %v57
    %v713 = vunpack.c.h.b16 %v57
    %v714 = vunpack.c.l.b16 %v58
    %v715 = vunpack.c.h.b16 %v58
    %v716 = vunpack.c.l.b16 %v59
    %v717 = vunpack.c.h.b16 %v59
    %v718 = vunpack.c.l.b16 %v60
    %v719 = vunpack.c.h.b16 %v60
    %v720 = vunpack.c.l.b16 %v61
    %v721 = vunpack.c.h.b16 %v61
    %v722 = vunpack.c.l.b16 %v62
    %v723 = vunpack.c.h.b16 %v62
    %v724 = vunpack.c.l.b16 %v63
    %v725 = vunpack.c.h.b16 %v63
    %v726 = vunpack.c.l.b16 %v64
    %v727 = vunpack.c.h.b16 %v64
    %v728 = vunpack.c.l.b16 %v65
    %v729 = vunpack.c.h.b16 %v65
    %v730 = vunpack.c.l.b16 %v66
    %v731 = vunpack.c.h.b16 %v66
    %v732 = vunpack.c.l.b16 %v67
    %v733 = vunpack.c.h.b16 %v67
    %v734 = vunpack.c.l.b16 %v68
    %v735 = vunpack.c.h.b16 %v68
    %v736 = vunpack.c.l.b16 %v69
    %v737 = vunpack.c.h.b16 %v69
    %v738 = vunpack.c.l.b16 %v70
    %v739 = vunpack.c.h.b16 %v70
    %v740 = vunpack.c.l.b16 %v71
    %v741 = vunpack.c.h.b16 %v71
    %v742 = vunpack.c.l.b16 %v72
    %v743 = vunpack.c.h.b16 %v72
    %v744 = vunpack.c.l.b16 %v73
    %v745 = vunpack.c.h.b16 %v73
    %v746 = vunpack.c.l.b16 %v74
    %v747 = vunpack.c.h.b16 %v74
    %v748 = vunpack.c.l.b16 %v75
    %v749 = vunpack.c.h.b16 %v75
    %v750 = vunpack.c.l.b16 %v76
    %v751 = vunpack.c.h.b16 %v76
    %v752 = vunpack.c.l.b16 %v77
    %v753 = vunpack.c.h.b16 %v77
    %v754 = vunpack.c.l.b16 %v78
    %v755 = vunpack.c.h.b16 %v78
    %v756 = vunpack.c.l.b16 %v79
    %v757 = vunpack.c.h.b16 %v79
    %v758 = vunpack.c.l.b16 %v80
    %v759 = vunpack.c.h.b16 %v80
    %v760 = vunpack.c.l.b16 %v81
    %v761 = vunpack.c.h.b16 %v81
    %v762 = vunpack.c.l.b16 %v82
    %v763 = vunpack.c.h.b16 %v82
    %v764 = vunpack.c.l.b16 %v83
    %v765 = vunpack.c.h.b16 %v83
    %v766 = vunpack.c.l.b16 %v84
    %v767 = vunpack.c.h.b16 %v84
    %v768 = vunpack.c.l.b16 %v85
    %v769 = vunpack.c.h.b16 %v85
    %v770 = vunpack.c.l.b16 %v86
    %v771 = vunpack.c.h.b16 %v86
    %v772 = vunpack.c.l.b16 %v87
    %v773 = vunpack.c.h.b16 %v87
    %v774 = vunpack.c.l.b16 %v88
    %v775 = vunpack.c.h.b16 %v88
    %v776 = vunpack.c.l.b16 %v89
    %v777 = vunpack.c.h.b16 %v89
    %v778 = vunpack.c.l.b16 %v90
    %v779 = vunpack.c.h.b16 %v90
    %v780 = vunpack.c.l.b16 %v91
    %v781 = vunpack.c.h.b16 %v91
    %v782 = vunpack.c.l.b16 %v92
    %v783 = vunpack.c.h.b16 %v92
    %v784 = vunpack.c.l.b16 %v93
    %v785 = vunpack.c.h.b16 %v93
    %v786 = vunpack.c.l.b16 %v94
    %v787 = vunpack.c.h.b16 %v94
    %v788 = vunpack.c.l.b16 %v95
    %v789 = vunpack.c.h.b16 %v95
    %v790 = vunpack.c.l.b16 %v96
    %v791 = vunpack.c.h.b16 %v96
    %v792 = vunpack.c.l.b16 %v97
    %v793 = vunpack.c.h.b16 %v97
    %v794 = vunpack.c.l.b16 %v98
    %v795 = vunpack.c.h.b16 %v98
    %v796 = vunpack.c.l.b16 %v99
    %v797 = vunpack.c.h.b16 %v99
    %v798 = vunpack.c.l.b16 %v100
    %v799 = vunpack.c.h.b16 %v100
    %v800 = vunpack.c.l.b16 %v101
    %v801 = vunpack.c.h.b16 %v101
    %v802 = vunpack.c.l.b16 %v102
    %v803 = vunpack.c.h.b16 %v102
    %v804 = vunpack.c.l.b16 %v103
    %v805 = vunpack.c.h.b16 %v103
    %v806 = vunpack.c.l.b16 %v104
    %v807 = vunpack.c.h.b16 %v104
    %v808 = vunpack.c.l.b16 %v105
    %v809 = vunpack.c.h.b16 %v105
    %v810 = vunpack.c.l.b16 %v106
    %v811 = vunpack.c.h.b16 %v106
    %v812 = vunpack.c.l.b16 %v107
    %v813 = vunpack.c.h.b16 %v107
    %v814 = vunpack.c.l.b16 %v108
    %v815 = vunpack.c.h.b16 %v108
    %v816 = vunpack.c.l.b16 %v109
    %v817 = vunpack.c.h.b16 %v109
    %v818 = vunpack.c.l.b16 %v110
    %v819 = vunpack.c.h.b16 %v110
    %v820 = vunpack.c.l.b16 %v111
    %v821 = vunpack.c.h.b16 %v111
    %v822 = vunpack.c.l.b16 %v112
    %v823 = vunpack.c.h.b16 %v112
    %v824 = vunpack.c.l.b16 %v113
    %v825 = vunpack.c.h.b16 %v113
    %v826 = vunpack.c.l.b16 %v114
    %v827 = vunpack.c.h.b16 %v114
    %v828 = vunpack.c.l.b16 %v115
    %v829 = vunpack.c.h.b16 %v115
    %v830 = vunpack.c.l.b16 %v116
    %v831 = vunpack.c.h.b16 %v116
    %v832 = vunpack.c.l.b16 %v117
    %v833 = vunpack.c.h.b16 %v117
    %v834 = vunpack.c.l.b16 %v118
    %v835 = vunpack.c.h.b16 %v118
    %v836 = vunpack.c.l.b16 %v119
    %v837 = vunpack.c.h.b16 %v119
    %v838 = vunpack.c.l.b16 %v120
    %v839 = vunpack.c.h.b16 %v120
    %v840 = vunpack.c.l.b16 %v121
    %v841 = vunpack.c.h.b16 %v121
    %v842 = vunpack.c.l.b16 %v122
    %v843 = vunpack.c.h.b16 %v122
    %v844 = vunpack.c.l.b16 %v123
    %v845 = vunpack.c.h.b16 %v123
    %v846 = vunpack.c.l.b16 %v124
    %v847 = vunpack.c.h.b16 %v124
    %v848 = vunpack.c.l.b16 %v125
    %v849 = vunpack.c.h.b16 %v125
    %v850 = vunpack.c.l.b16 %v126
    %v851 = vunpack.c.h.b16 %v126
    %v852 = vunpack.c.l.b16 %v127
    %v853 = vunpack.c.h.b16 %v127
    %v854 = vunpack.c.l.b16 %v128
    %v855 = vunpack.c.h.b16 %v128
    %v856 = vunpack.c.l.b16 %v129
    %v857 = vunpack.c.h.b16 %v129
    %v858 = vunpack.c.l.b16 %v130
    %v859 = vunpack.c.h.b16 %v130
    %v860 = vunpack.c.l.b16 %v131
    %v861 = vunpack.c.h.b16 %v131
    %v862 = vunpack.c.l.b16 %v132
    %v863 = vunpack.c.h.b16 %v132
    %v864 = vunpack.c.l.b16 %v133
    %v865 = vunpack.c.h.b16 %v133
    %v866 = vunpack.c.l.b16 %v134
    %v867 = vunpack.c.h.b16 %v134
    %v868 = vunpack.c.l.b16 %v135
    %v869 = vunpack.c.h.b16 %v135
    %v870 = vunpack.c.l.b16 %v136
    %v871 = vunpack.c.h.b16 %v136
    %v872 = vunpack.c.l.b16 %v137
    %v873 = vunpack.c.h.b16 %v137
    %v874 = vunpack.c.l.b16 %v138
    %v875 = vunpack.c.h.b16 %v138
    %v876 = vunpack.c.l.b16 %v139
    %v877 = vunpack.c.h.b16 %v139
    %v878 = vunpack.c.l.b16 %v140
    %v879 = vunpack.c.h.b16 %v140
    %v880 = vunpack.c.l.b16 %v141
    %v881 = vunpack.c.h.b16 %v141
    %v882 = vunpack.c.l.b16 %v142
    %v883 = vunpack.c.h.b16 %v142
    %v884 = vunpack.c.l.b16 %v143
    %v885 = vunpack.c.h.b16 %v143
    %v886 = vunpack.c.l.b16 %v144
    %v887 = vunpack.c.h.b16 %v144
    %v888 = vunpack.c.l.b16 %v145
    %v889 = vunpack.c.h.b16 %v145
    %v890 = vunpack.c.l.b16 %v146
    %v891 = vunpack.c.h.b16 %v146
    %v892 = vunpack.c.l.b16 %v147
    %v893 = vunpack.c.h.b16 %v147
    %v894 = vunpack.c.l.b16 %v148
    %v895 = vunpack.c.h.b16 %v148
    %v896 = vunpack.c.l.b16 %v149
    %v897 = vunpack.c.h.b16 %v149
    %v898 = vunpack.c.l.b16 %v150
    %v899 = vunpack.c.h.b16 %v150
    %v900 = vunpack.c.l.b16 %v151
    %v901 = vunpack.c.h.b16 %v151
    %v902 = vunpack.c.l.b16 %v152
    %v903 = vunpack.c.h.b16 %v152
    %v904 = vunpack.c.l.b16 %v153
    %v905 = vunpack.c.h.b16 %v153
    %v906 = vunpack.c.l.b16 %v154
    %v907 = vunpack.c.h.b16 %v154
    %v908 = vunpack.c.l.b16 %v155
    %v909 = vunpack.c.h.b16 %v155
    %v910 = vunpack.c.l.b16 %v156
    %v911 = vunpack.c.h.b16 %v156
    %v912 = vunpack.c.l.b16 %v157
    %v913 = vunpack.c.h.b16 %v157
    %v914 = vunpack.c.l.b16 %v158
    %v915 = vunpack.c.h.b16 %v158
    %v916 = vunpack.c.l.b16 %v159
    %v917 = vunpack.c.h.b16 %v159
    %v918 = vunpack.c.l.b16 %v160
    %v919 = vunpack.c.h.b16 %v160
    %v920 = vunpack.c.l.b16 %v161
    %v921 = vunpack.c.h.b16 %v161
    %v922 = vunpack.c.l.b16 %v162
    %v923 = vunpack.c.h.b16 %v162
    %v924 = vunpack.c.l.b16 %v163
    %v925 = vunpack.c.h.b16 %v163
    %v926 = vunpack.c.l.b16 %v164
    %v927 = vunpack.c.h.b16 %v164
    %v928 = vunpack.c.l.b16 %v165
    %v929 = vunpack.c.h.b16 %v165
    %v930 = vunpack.c.l.b16 %v166
    %v931 = vunpack.c.h.b16 %v166
    %v932 = vunpack.c.l.b16 %v167
    %v933 = vunpack.c.h.b16 %v167
    %v934 = vunpack.c.l.b16 %v168
    %v935 = vunpack.c.h.b16 %v168
    %v936 = vunpack.c.l.b16 %v169
    %v937 = vunpack.c.h.b16 %v169
    %v938 = vunpack.c.l.b16 %v170
    %v939 = vunpack.c.h.b16 %v170
    %v940 = vunpack.c.l.b16 %v171
    %v941 = vunpack.c.h.b16 %v171
    %v942 = vunpack.c.l.b16 %v172
    %v943 = vunpack.c.h.b16 %v172
    %v944 = vunpack.c.l.b16 %v173
    %v945 = vunpack.c.h.b16 %v173
    %v946 = vunpack.c.l.b16 %v174
    %v947 = vunpack.c.h.b16 %v174
    %v948 = vunpack.c.l.b16 %v175
    %v949 = vunpack.c.h.b16 %v175
    %v950 = vunpack.c.l.b16 %v176
    %v951 = vunpack.c.h.b16 %v176
    %v952 = vunpack.c.l.b16 %v177
    %v953 = vunpack.c.h.b16 %v177
    %v954 = vunpack.c.l.b16 %v178
    %v955 = vunpack.c.h.b16 %v178
    %v956 = vunpack.c.l.b16 %v179
    %v957 = vunpack.c.h.b16 %v179
    %v958 = vunpack.c.l.b16 %v180
    %v959 = vunpack.c.h.b16 %v180
    %v960 = vunpack.c.l.b16 %v181
    %v961 = vunpack.c.h.b16 %v181
    %v962 = vunpack.c.l.b16 %v182
    %v963 = vunpack.c.h.b16 %v182
    %v964 = vunpack.c.l.b16 %v183
    %v965 = vunpack.c.h.b16 %v183
    %v966 = vunpack.c.l.b16 %v184
    %v967 = vunpack.c.h.b16 %v184
    %v968 = vunpack.c.l.b16 %v185
    %v969 = vunpack.c.h.b16 %v185
    %v970 = vunpack.c.l.b16 %v186
    %v971 = vunpack.c.h.b16 %v186
    %v972 = vunpack.c.l.b16 %v187
    %v973 = vunpack.c.h.b16 %v187
    %v974 = vunpack.c.l.b16 %v188
    %v975 = vunpack.c.h.b16 %v188
    %v976 = vunpack.c.l.b16 %v189
    %v977 = vunpack.c.h.b16 %v189
    %v978 = vunpack.c.l.b16 %v190
    %v979 = vunpack.c.h.b16 %v190
    %v980 = vunpack.c.l.b16 %v191
    %v981 = vunpack.c.h.b16 %v191
    %v982 = vunpack.c.l.b16 %v192
    %v983 = vunpack.c.h.b16 %v192
    %v984 = vunpack.c.l.b16 %v193
    %v985 = vunpack.c.h.b16 %v193
    %v986 = vunpack.c.l.b16 %v194
    %v987 = vunpack.c.h.b16 %v194
    %v988 = vunpack.c.l.b16 %v195
    %v989 = vunpack.c.h.b16 %v195
    %v990 = vunpack.c.l.b16 %v196
    %v991 = vunpack.c.h.b16 %v196
    %v992 = vunpack.c.l.b16 %v197
    %v993 = vunpack.c.h.b16 %v197
    %v994 = vunpack.c.l.b16 %v198
    %v995 = vunpack.c.h.b16 %v198
    %v996 = vunpack.c.l.b16 %v199
    %v997 = vunpack.c.h.b16 %v199
    %v998 = vunpack.c.l.b16 %v200
    %v999 = vunpack.c.h.b16 %v200
    %v1000 = vunpack.c.l.b16 %v201
    %v1001 = vunpack.c.h.b16 %v201
    %v1002 = vunpack.c.l.b16 %v202
    %v1003 = vunpack.c.h.b16 %v202
    %v1004 = vunpack.c.l.b16 %v203
    %v1005 = vunpack.c.h.b16 %v203
    %v1006 = vunpack.c.l.b16 %v204
    %v1007 = vunpack.c.h.b16 %v204
    %v1008 = vunpack.c.l.b16 %v205
    %v1009 = vunpack.c.h.b16 %v205
    %v1010 = vunpack.c.l.b16 %v206
    %v1011 = vunpack.c.h.b16 %v206
    %v1012 = vunpack.c.l.b16 %v207
    %v1013 = vunpack.c.h.b16 %v207
    %v1014 = vunpack.c.l.b16 %v208
    %v1015 = vunpack.c.h.b16 %v208
    %v1016 = vunpack.c.l.b16 %v209
    %v1017 = vunpack.c.h.b16 %v209
    %v1018 = vunpack.c.l.b16 %v210
    %v1019 = vunpack.c.h.b16 %v210
    %v1020 = vunpack.c.l.b16 %v211
    %v1021 = vunpack.c.h.b16 %v211
    %v1022 = vunpack.c.l.b16 %v212
    %v1023 = vunpack.c.h.b16 %v212
    %v1024 = vunpack.c.l.b16 %v213
    %v1025 = vunpack.c.h.b16 %v213
    %v1026 = vunpack.c.l.b16 %v214
    %v1027 = vunpack.c.h.b16 %v214
    %v1028 = vunpack.c.l.b16 %v215
    %v1029 = vunpack.c.h.b16 %v215
    %v1030 = vunpack.c.l.b16 %v216
    %v1031 = vunpack.c.h.b16 %v216
    %v1032 = vunpack.c.l.b16 %v217
    %v1033 = vunpack.c.h.b16 %v217
    %v1034 = vunpack.c.l.b16 %v218
    %v1035 = vunpack.c.h.b16 %v218
    %v1036 = vunpack.c.l.b16 %v219
    %v1037 = vunpack.c.h.b16 %v219
    %v1038 = vunpack.c.l.b16 %v220
    %v1039 = vunpack.c.h.b16 %v220
    %v1040 = vunpack.c.l.b16 %v221
    %v1041 = vunpack.c.h.b16 %v221
    %v1042 = vunpack.c.l.b16 %v222
    %v1043 = vunpack.c.h.b16 %v222
    %v1044 = vunpack.c.l.b16 %v223
    %v1045 = vunpack.c.h.b16 %v223
    %v1046 = vunpack.c.l.b16 %v224
    %v1047 = vunpack.c.h.b16 %v224
    %v1048 = vunpack.c.l.b16 %v225
    %v1049 = vunpack.c.h.b16 %v225
    %v1050 = vunpack.c.l.b16 %v226
    %v1051 = vunpack.c.h.b16 %v226
    %v1052 = vunpack.c.l.b16 %v227
    %v1053 = vunpack.c.h.b16 %v227
    %v1054 = vunpack.c.l.b16 %v228
    %v1055 = vunpack.c.h.b16 %v228
    %v1056 = vunpack.c.l.b16 %v229
    %v1057 = vunpack.c.h.b16 %v229
    %v1058 = vunpack.c.l.b16 %v230
    %v1059 = vunpack.c.h.b16 %v230
    %v1060 = vunpack.c.l.b16 %v231
    %v1061 = vunpack.c.h.b16 %v231
    %v1062 = vunpack.c.l.b16 %v232
    %v1063 = vunpack.c.h.b16 %v232
    %v1064 = vunpack.c.l.b16 %v233
    %v1065 = vunpack.c.h.b16 %v233
    %v1066 = vunpack.c.l.b16 %v234
    %v1067 = vunpack.c.h.b16 %v234
    %v1068 = vunpack.c.l.b16 %v235
    %v1069 = vunpack.c.h.b16 %v235
    %v1070 = vunpack.c.l.b16 %v236
    %v1071 = vunpack.c.h.b16 %v236
    %v1072 = vunpack.c.l.b16 %v237
    %v1073 = vunpack.c.h.b16 %v237
    %v1074 = vunpack.c.l.b16 %v238
    %v1075 = vunpack.c.h.b16 %v238
    %v1076 = vunpack.c.l.b16 %v239
    %v1077 = vunpack.c.h.b16 %v239
    %v1078 = vunpack.c.l.b16 %v240
    %v1079 = vunpack.c.h.b16 %v240
    %v1080 = vunpack.c.l.b16 %v241
    %v1081 = vunpack.c.h.b16 %v241
    %v1082 = vunpack.c.l.b16 %v242
    %v1083 = vunpack.c.h.b16 %v242
    %v1084 = vunpack.c.l.b16 %v243
    %v1085 = vunpack.c.h.b16 %v243
    %v1086 = vunpack.c.l.b16 %v244
    %v1087 = vunpack.c.h.b16 %v244
    %v1088 = vunpack.c.l.b16 %v245
    %v1089 = vunpack.c.h.b16 %v245
    %v1090 = vunpack.c.l.b16 %v246
    %v1091 = vunpack.c.h.b16 %v246
    %v1092 = vunpack.c.l.b16 %v247
    %v1093 = vunpack.c.h.b16 %v247
    %v1094 = vunpack.c.l.b16 %v248
    %v1095 = vunpack.c.h.b16 %v248
    %v1096 = vunpack.c.l.b16 %v249
    %v1097 = vunpack.c.h.b16 %v249
    %v1098 = vunpack.c.l.b16 %v250
    %v1099 = vunpack.c.h.b16 %v250
    %v1100 = vunpack.c.l.b16 %v251
    %v1101 = vunpack.c.h.b16 %v251
    %v1102 = vunpack.c.l.b16 %v252
    %v1103 = vunpack.c.h.b16 %v252
    %v1104 = vunpack.c.l.b16 %v253
    %v1105 = vunpack.c.h.b16 %v253
    %v1106 = vunpack.c.l.b16 %v254
    %v1107 = vunpack.c.h.b16 %v254
    %v1108 = vunpack.c.l.b16 %v255
    %v1109 = vunpack.c.h.b16 %v255
    %v1110 = vunpack.c.l.b16 %v256
    %v1111 = vunpack.c.h.b16 %v256
    %v1112 = vunpack.c.l.b16 %v257
    %v1113 = vunpack.c.h.b16 %v257
    %v1114 = vunpack.c.l.b16 %v258
    %v1115 = vunpack.c.h.b16 %v258
    %v1116 = vunpack.c.l.b16 %v259
    %v1117 = vunpack.c.h.b16 %v259
    %v1118 = vunpack.c.l.b16 %v260
    %v1119 = vunpack.c.h.b16 %v260
    %v1120 = vunpack.c.l.b16 %v261
    %v1121 = vunpack.c.h.b16 %v261
    %v1122 = vunpack.c.l.b16 %v262
    %v1123 = vunpack.c.h.b16 %v262
    %v1124 = vunpack.c.l.b16 %v263
    %v1125 = vunpack.c.h.b16 %v263
    %v1126 = vunpack.c.l.b16 %v264
    %v1127 = vunpack.c.h.b16 %v264
    %v1128 = vunpack.c.l.b16 %v265
    %v1129 = vunpack.c.h.b16 %v265
    %v1130 = vunpack.c.l.b16 %v266
    %v1131 = vunpack.c.h.b16 %v266
    %v1132 = vunpack.c.l.b16 %v267
    %v1133 = vunpack.c.h.b16 %v267
    %v1134 = vunpack.c.l.b16 %v268
    %v1135 = vunpack.c.h.b16 %v268
    %v1136 = vunpack.c.l.b16 %v269
    %v1137 = vunpack.c.h.b16 %v269
    %v1138 = vunpack.c.l.b16 %v270
    %v1139 = vunpack.c.h.b16 %v270
    %v1140 = vunpack.c.l.b16 %v271
    %v1141 = vunpack.c.h.b16 %v271
    %v1142 = vunpack.c.l.b16 %v272
    %v1143 = vunpack.c.h.b16 %v272
    %v1144 = vunpack.c.l.b16 %v273
    %v1145 = vunpack.c.h.b16 %v273
    %v1146 = vunpack.c.l.b16 %v274
    %v1147 = vunpack.c.h.b16 %v274
    %v1148 = vunpack.c.l.b16 %v275
    %v1149 = vunpack.c.h.b16 %v275
    %v1150 = vunpack.c.l.b16 %v276
    %v1151 = vunpack.c.h.b16 %v276
    %v1152 = vunpack.c.l.b16 %v277
    %v1153 = vunpack.c.h.b16 %v277
    %v1154 = vunpack.c.l.b16 %v278
    %v1155 = vunpack.c.h.b16 %v278
    %v1156 = vunpack.c.l.b16 %v279
    %v1157 = vunpack.c.h.b16 %v279
    %v1158 = vunpack.c.l.b16 %v280
    %v1159 = vunpack.c.h.b16 %v280
    %v1160 = vunpack.c.l.b16 %v281
    %v1161 = vunpack.c.h.b16 %v281
    %v1162 = vunpack.c.l.b16 %v282
    %v1163 = vunpack.c.h.b16 %v282
    %v1164 = vunpack.c.l.b16 %v283
    %v1165 = vunpack.c.h.b16 %v283
    %v1166 = vunpack.c.l.b16 %v284
    %v1167 = vunpack.c.h.b16 %v284
    %v1168 = vunpack.c.l.b16 %v285
    %v1169 = vunpack.c.h.b16 %v285
    %v1170 = vunpack.c.l.b16 %v286
    %v1171 = vunpack.c.h.b16 %v286
    %v1172 = vunpack.c.l.b16 %v287
    %v1173 = vunpack.c.h.b16 %v287
    %v1174 = vunpack.c.l.b16 %v288
    %v1175 = vunpack.c.h.b16 %v288
    %v1176 = vunpack.c.l.b16 %v289
    %v1177 = vunpack.c.h.b16 %v289
    %v1178 = vunpack.c.l.b16 %v290
    %v1179 = vunpack.c.h.b16 %v290
    %v1180 = vunpack.c.l.b16 %v291
    %v1181 = vunpack.c.h.b16 %v291
    %v1182 = vunpack.c.l.b16 %v292
    %v1183 = vunpack.c.h.b16 %v292
    %v1184 = vunpack.c.l.b16 %v293
    %v1185 = vunpack.c.h.b16 %v293
    %v1186 = vunpack.c.l.b16 %v294
    %v1187 = vunpack.c.h.b16 %v294
    %v1188 = vunpack.c.l.b16 %v295
    %v1189 = vunpack.c.h.b16 %v295
    %v1190 = vunpack.c.l.b16 %v296
    %v1191 = vunpack.c.h.b16 %v296
    %v1192 = vunpack.c.l.b16 %v297
    %v1193 = vunpack.c.h.b16 %v297
    %v1194 = vunpack.c.l.b16 %v298
    %v1195 = vunpack.c.h.b16 %v298
    %v1196 = vunpack.c.l.b16 %v299
    %v1197 = vunpack.c.h.b16 %v299
    %v1198 = vunpack.c.l.b16 %v300
    %v1199 = vunpack.c.h.b16 %v300
    %v1200 = vunpack.c.l.b16 %v301
    %v1201 = vunpack.c.h.b16 %v301
    %v1202 = vunpack.c.l.b16 %v302
    %v1203 = vunpack.c.h.b16 %v302
    %v1204 = vunpack.c.l.b16 %v303
    %v1205 = vunpack.c.h.b16 %v303
    %v1206 = vunpack.c.l.b16 %v304
    %v1207 = vunpack.c.h.b16 %v304
    %v1208 = vunpack.c.l.b16 %v305
    %v1209 = vunpack.c.h.b16 %v305
    %v1210 = vunpack.c.l.b16 %v306
    %v1211 = vunpack.c.h.b16 %v306
    %v1212 = vunpack.c.l.b16 %v307
    %v1213 = vunpack.c.h.b16 %v307
    %v1214 = vpack.c.b16 %v706, %v702
    %v1215 = vpack.c.b16 %v707, %v703
    %v1216 = vpack.c.b16 %v708, %v704
    %v1217 = vpack.c.b16 %v709, %v705
    %v1218 = vpack.c.b16 %v714, %v710
    %v1219 = vpack.c.b16 %v715, %v711
    %v1220 = vpack.c.b16 %v716, %v712
    %v1221 = vpack.c.b16 %v717, %v713
    %v1222 = vpack.c.b16 %v722, %v718
    %v1223 = vpack.c.b16 %v723, %v719
    %v1224 = vpack.c.b16 %v724, %v720
    %v1225 = vpack.c.b16 %v725, %v721
    %v1226 = vpack.c.b16 %v730, %v726
    %v1227 = vpack.c.b16 %v731, %v727
    %v1228 = vpack.c.b16 %v732, %v728
    %v1229 = vpack.c.b16 %v733, %v729
    %v1230 = vpack.c.b16 %v738, %v734
    %v1231 = vpack.c.b16 %v739, %v735
    %v1232 = vpack.c.b16 %v740, %v736
    %v1233 = vpack.c.b16 %v741, %v737
    %v1234 = vpack.c.b16 %v746, %v742
    %v1235 = vpack.c.b16 %v747, %v743
    %v1236 = vpack.c.b16 %v748, %v744
    %v1237 = vpack.c.b16 %v749, %v745
    %v1238 = vpack.c.b16 %v754, %v750
    %v1239 = vpack.c.b16 %v755, %v751
    %v1240 = vpack.c.b16 %v756, %v752
    %v1241 = vpack.c.b16 %v757, %v753
    %v1242 = vpack.c.b16 %v762, %v758
    %v1243 = vpack.c.b16 %v763, %v759
    %v1244 = vpack.c.b16 %v764, %v760
    %v1245 = vpack.c.b16 %v765, %v761
    %v1246 = vpack.c.b16 %v770, %v766
    %v1247 = vpack.c.b16 %v771, %v767
    %v1248 = vpack.c.b16 %v772, %v768
    %v1249 = vpack.c.b16 %v773, %v769
    %v1250 = vpack.c.b16 %v778, %v774
    %v1251 = vpack.c.b16 %v779, %v775
    %v1252 = vpack.c.b16 %v780, %v776
    %v1253 = vpack.c.b16 %v781, %v777
    %v1254 = vpack.c.b16 %v786, %v782
    %v1255 = vpack.c.b16 %v787, %v783
    %v1256 = vpack.c.b16 %v788, %v784
    %v1257 = vpack.c.b16 %v789, %v785
    %v1258 = vpack.c.b16 %v794, %v790
    %v1259 = vpack.c.b16 %v795, %v791
    %v1260 = vpack.c.b16 %v796, %v792
    %v1261 = vpack.c.b16 %v797, %v793
    %v1262 = vpack.c.b16 %v802, %v798
    %v1263 = vpack.c.b16 %v803, %v799
    %v1264 = vpack.c.b16 %v804, %v800
    %v1265 = vpack.c.b16 %v805, %v801
    %v1266 = vpack.c.b16 %v810, %v806
    %v1267 = vpack.c.b16 %v811, %v807
    %v1268 = vpack.c.b16 %v812, %v808
    %v1269 = vpack.c.b16 %v813, %v809
    %v1270 = vpack.c.b16 %v818, %v814
    %v1271 = vpack.c.b16 %v819, %v815
    %v1272 = vpack.c.b16 %v820, %v816
    %v1273 = vpack.c.b16 %v821, %v817
    %v1274 = vpack.c.b16 %v826, %v822
    %v1275 = vpack.c.b16 %v827, %v823
    %v1276 = vpack.c.b16 %v828, %v824
    %v1277 = vpack.c.b16 %v829, %v825
    %v1278 = vpack.c.b16 %v834, %v830
    %v1279 = vpack.c.b16 %v835, %v831
    %v1280 = vpack.c.b16 %v836, %v832
    %v1281 = vpack.c.b16 %v837, %v833
    %v1282 = vpack.c.b16 %v842, %v838
    %v1283 = vpack.c.b16 %v843, %v839
    %v1284 = vpack.c.b16 %v844, %v840
    %v1285 = vpack.c.b16 %v845, %v841
    %v1286 = vpack.c.b16 %v850, %v846
    %v1287 = vpack.c.b16 %v851, %v847
    %v1288 = vpack.c.b16 %v852, %v848
    %v1289 = vpack.c.b16 %v853, %v849
    %v1290 = vpack.c.b16 %v858, %v854
    %v1291 = vpack.c.b16 %v859, %v855
    %v1292 = vpack.c.b16 %v860, %v856
    %v1293 = vpack.c.b16 %v861, %v857
    %v1294 = vpack.c.b16 %v866, %v862
    %v1295 = vpack.c.b16 %v867, %v863
    %v1296 = vpack.c.b16 %v868, %v864
    %v1297 = vpack.c.b16 %v869, %v865
    %v1298 = vpack.c.b16 %v874, %v870
    %v1299 = vpack.c.b16 %v875, %v871
    %v1300 = vpack.c.b16 %v876, %v872
    %v1301 = vpack.c.b16 %v877, %v873
    %v1302 = vpack.c.b16 %v882, %v878
    %v1303 = vpack.c.b16 %v883, %v879
    %v1304 = vpack.c.b16 %v884, %v880
    %v1305 = vpack.c.b16 %v885, %v881
    %v1306 = vpack.c.b16 %v890, %v886
    %v1307 = vpack.c.b16 %v891, %v887
    %v1308 = vpack.c.b16 %v892, %v888
    %v1309 = vpack.c.b16 %v893, %v889
    %v1310 = vpack.c.b16 %v898, %v894
    %v1311 = vpack.c.b16 %v899, %v895
    %v1312 = vpack.c.b16 %v900, %v896
    %v1313 = vpack.c.b16 %v901, %v897
    %v1314 = vpack.c.b16 %v906, %v902
    %v1315 = vpack.c.b16 %v907, %v903
    %v1316 = vpack.c.b16 %v908, %v904
    %v1317 = vpack.c.b16 %v909, %v905
    %v1318 = vpack.c.b16 %v914, %v910
    %v1319 = vpack.c.b16 %v915, %v911
    %v1320 = vpack.c.b16 %v916, %v912
    %v1321 = vpack.c.b16 %v917, %v913
    %v1322 = vpack.c.b16 %v922, %v918
    %v1323 = vpack.c.b16 %v923, %v919
    %v1324 = vpack.c.b16 %v924, %v920
    %v1325 = vpack.c.b16 %v925, %v921
    %v1326 = vpack.c.b16 %v930, %v926
    %v1327 = vpack.c.b16 %v931, %v927
    %v1328 = vpack.c.b16 %v932, %v928
    %v1329 = vpack.c.b16 %v933, %v929
    %v1330 = vpack.c.b16 %v938, %v934
    %v1331 = vpack.c.b16 %v939, %v935
    %v1332 = vpack.c.b16 %v940, %v936
    %v1333 = vpack.c.b16 %v941, %v937
    %v1334 = vpack.c.b16 %v946, %v942
    %v1335 = vpack.c.b16 %v947, %v943
    %v1336 = vpack.c.b16 %v948, %v944
    %v1337 = vpack.c.b16 %v949, %v945
    %v1338 = vpack.c.b16 %v954, %v950
    %v1339 = vpack.c.b16 %v955, %v951
    %v1340 = vpack.c.b16 %v956, %v952
    %v1341 = vpack.c.b16 %v957, %v953
    %v1342 = vpack.c.b16 %v962, %v958
    %v1343 = vpack.c.b16 %v963, %v959
    %v1344 = vpack.c.b16 %v964, %v960
    %v1345 = vpack.c.b16 %v965, %v961
    %v1346 = vpack.c.b16 %v970, %v966
    %v1347 = vpack.c.b16 %v971, %v967
    %v1348 = vpack.c.b16 %v972, %v968
    %v1349 = vpack.c.b16 %v973, %v969
    %v1350 = vpack.c.b16 %v978, %v974
    %v1351 = vpack.c.b16 %v979, %v975
    %v1352 = vpack.c.b16 %v980, %v976
    %v1353 = vpack.c.b16 %v981, %v977
    %v1354 = vpack.c.b16 %v986, %v982
    %v1355 = vpack.c.b16 %v987, %v983
    %v1356 = vpack.c.b16 %v988, %v984
    %v1357 = vpack.c.b16 %v989, %v985
    %v1358 = vpack.c.b16 %v994, %v990
    %v1359 = vpack.c.b16 %v995, %v991
    %v1360 = vpack.c.b16 %v996, %v992
    %v1361 = vpack.c.b16 %v997, %v993
    %v1362 = vpack.c.b16 %v1002, %v998
    %v1363 = vpack.c.b16 %v1003, %v999
    %v1364 = vpack.c.b16 %v1004, %v1000
    %v1365 = vpack.c.b16 %v1005, %v1001
    %v1366 = vpack.c.b16 %v1010, %v1006
    %v1367 = vpack.c.b16 %v1011, %v1007
    %v1368 = vpack.c.b16 %v1012, %v1008
    %v1369 = vpack.c.b16 %v1013, %v1009
    %v1370 = vpack.c.b16 %v1018, %v1014
    %v1371 = vpack.c.b16 %v1019, %v1015
    %v1372 = vpack.c.b16 %v1020, %v1016
    %v1373 = vpack.c.b16 %v1021, %v1017
    %v1374 = vpack.c.b16 %v1026, %v1022
    %v1375 = vpack.c.b16 %v1027, %v1023
    %v1376 = vpack.c.b16 %v1028, %v1024
    %v1377 = vpack.c.b16 %v1029, %v1025
    %v1378 = vpack.c.b16 %v1034, %v1030
    %v1379 = vpack.c.b16 %v1035, %v1031
    %v1380 = vpack.c.b16 %v1036, %v1032
    %v1381 = vpack.c.b16 %v1037, %v1033
    %v1382 = vpack.c.b16 %v1042, %v1038
    %v1383 = vpack.c.b16 %v1043, %v1039
    %v1384 = vpack.c.b16 %v1044, %v1040
    %v1385 = vpack.c.b16 %v1045, %v1041
    %v1386 = vpack.c.b16 %v1050, %v1046
    %v1387 = vpack.c.b16 %v1051, %v1047
    %v1388 = vpack.c.b16 %v1052, %v1048
    %v1389 = vpack.c.b16 %v1053, %v1049
    %v1390 = vpack.c.b16 %v1058, %v1054
    %v1391 = vpack.c.b16 %v1059, %v1055
    %v1392 = vpack.c.b16 %v1060, %v1056
    %v1393 = vpack.c.b16 %v1061, %v1057
    %v1394 = vpack.c.b16 %v1066, %v1062
    %v1395 = vpack.c.b16 %v1067, %v1063
    %v1396 = vpack.c.b16 %v1068, %v1064
    %v1397 = vpack.c.b16 %v1069, %v1065
    %v1398 = vpack.c.b16 %v1074, %v1070
    %v1399 = vpack.c.b16 %v1075, %v1071
    %v1400 = vpack.c.b16 %v1076, %v1072
    %v1401 = vpack.c.b16 %v1077, %v1073
    %v1402 = vpack.c.b16 %v1082, %v1078
    %v1403 = vpack.c.b16 %v1083, %v1079
    %v1404 = vpack.c.b16 %v1084, %v1080
    %v1405 = vpack.c.b16 %v1085, %v1081
    %v1406 = vpack.c.b16 %v1090, %v1086
    %v1407 = vpack.c.b16 %v1091, %v1087
    %v1408 = vpack.c.b16 %v1092, %v1088
    %v1409 = vpack.c.b16 %v1093, %v1089
    %v1410 = vpack.c.b16 %v1098, %v1094
    %v1411 = vpack.c.b16 %v1099, %v1095
    %v1412 = vpack.c.b16 %v1100, %v1096
    %v1413 = vpack.c.b16 %v1101, %v1097
    %v1414 = vpack.c.b16 %v1106, %v1102
    %v1415 = vpack.c.b16 %v1107, %v1103
    %v1416 = vpack.c.b16 %v1108, %v1104
    %v1417 = vpack.c.b16 %v1109, %v1105
    %v1418 = vpack.c.b16 %v1114, %v1110
    %v1419 = vpack.c.b16 %v1115, %v1111
    %v1420 = vpack.c.b16 %v1116, %v1112
    %v1421 = vpack.c.b16 %v1117, %v1113
    %v1422 = vpack.c.b16 %v1122, %v1118
    %v1423 = vpack.c.b16 %v1123, %v1119
    %v1424 = vpack.c.b16 %v1124, %v1120
    %v1425 = vpack.c.b16 %v1125, %v1121
    %v1426 = vpack.c.b16 %v1130, %v1126
    %v1427 = vpack.c.b16 %v1131, %v1127
    %v1428 = vpack.c.b16 %v1132, %v1128
    %v1429 = vpack.c.b16 %v1133, %v1129
    %v1430 = vpack.c.b16 %v1138, %v1134
    %v1431 = vpack.c.b16 %v1139, %v1135
    %v1432 = vpack.c.b16 %v1140, %v1136
    %v1433 = vpack.c.b16 %v1141, %v1137
    %v1434 = vpack.c.b16 %v1146, %v1142
    %v1435 = vpack.c.b16 %v1147, %v1143
    %v1436 = vpack.c.b16 %v1148, %v1144
    %v1437 = vpack.c.b16 %v1149, %v1145
    %v1438 = vpack.c.b16 %v1154, %v1150
    %v1439 = vpack.c.b16 %v1155, %v1151
    %v1440 = vpack.c.b16 %v1156, %v1152
    %v1441 = vpack.c.b16 %v1157, %v1153
    %v1442 = vpack.c.b16 %v1162, %v1158
    %v1443 = vpack.c.b16 %v1163, %v1159
    %v1444 = vpack.c.b16 %v1164, %v1160
    %v1445 = vpack.c.b16 %v1165, %v1161
    %v1446 = vpack.c.b16 %v1170, %v1166
    %v1447 = vpack.c.b16 %v1171, %v1167
    %v1448 = vpack.c.b16 %v1172, %v1168
    %v1449 = vpack.c.b16 %v1173, %v1169
    %v1450 = vpack.c.b16 %v1178, %v1174
    %v1451 = vpack.c.b16 %v1179, %v1175
    %v1452 = vpack.c.b16 %v1180, %v1176
    %v1453 = vpack.c.b16 %v1181, %v1177
    %v1454 = vpack.c.b16 %v1186, %v1182
    %v1455 = vpack.c.b16 %v1187, %v1183
    %v1456 = vpack.c.b16 %v1188, %v1184
    %v1457 = vpack.c.b16 %v1189, %v1185
    %v1458 = vpack.c.b16 %v1194, %v1190
    %v1459 = vpack.c.b16 %v1195, %v1191
    %v1460 = vpack.c.b16 %v1196, %v1192
    %v1461 = vpack.c.b16 %v1197, %v1193
    %v1462 = vpack.c.b16 %v1202, %v1198
    %v1463 = vpack.c.b16 %v1203, %v1199
    %v1464 = vpack.c.b16 %v1204, %v1200
    %v1465 = vpack.c.b16 %v1205, %v1201
    %v1466 = vpack.c.b16 %v1210, %v1206
    %v1467 = vpack.c.b16 %v1211, %v1207
    %v1468 = vpack.c.b16 %v1212, %v1208
    %v1469 = vpack.c.b16 %v1213, %v1209
    %1726 = vmatprep.subr.bf16.mxu0 %v1215
    %1727 = vmatpush1.bf16.msra.mxu0 %v1214
    %1728 = vmatprep.subr.bf16.mxu0 %v1219
    %1729 = vmatpush1.bf16.msra.mxu0 %v1218
    %1730 = vmatprep.subr.bf16.mxu0 %v1223
    %1731 = vmatpush1.bf16.msra.mxu0 %v1222
    %1732 = vmatprep.subr.bf16.mxu0 %v1227
    %1733 = vmatpush1.bf16.msra.mxu0 %v1226
    %1734 = vmatprep.subr.bf16.mxu0 %v1231
    %1735 = vmatpush1.bf16.msra.mxu0 %v1230
    %1736 = vmatprep.subr.bf16.mxu0 %v1235
    %1737 = vmatpush1.bf16.msra.mxu0 %v1234
    %1738 = vmatprep.subr.bf16.mxu0 %v1239
    %1739 = vmatpush1.bf16.msra.mxu0 %v1238
    %1740 = vmatprep.subr.bf16.mxu0 %v1243
    %1741 = vmatpush1.bf16.msra.mxu0 %v1242
    %1742 = vmatprep.subr.bf16.mxu0 %v1247
    %1743 = vmatpush1.bf16.msra.mxu0 %v1246
    %1744 = vmatprep.subr.bf16.mxu0 %v1251
    %1745 = vmatpush1.bf16.msra.mxu0 %v1250
    %1746 = vmatprep.subr.bf16.mxu0 %v1255
    %1747 = vmatpush1.bf16.msra.mxu0 %v1254
    %1748 = vmatprep.subr.bf16.mxu0 %v1259
    %1749 = vmatpush1.bf16.msra.mxu0 %v1258
    %1750 = vmatprep.subr.bf16.mxu0 %v1263
    %1751 = vmatpush1.bf16.msra.mxu0 %v1262
    %1752 = vmatprep.subr.bf16.mxu0 %v1267
    %1753 = vmatpush1.bf16.msra.mxu0 %v1266
    %1754 = vmatprep.subr.bf16.mxu0 %v1271
    %1755 = vmatpush1.bf16.msra.mxu0 %v1270
    %1756 = vmatprep.subr.bf16.mxu0 %v1275
    %1757 = vmatpush1.bf16.msra.mxu0 %v1274
    %1758 = vmatprep.mubr.bf16.mxu0 %v410
    %1759 = vmatmul.mubr.bf16.gmra.mrb[0].mxu0 %v409
    %v1760 = vpop.f32.mrb[0].mxu0
    %v1761 = vadd.f32 %v429, %v1760
    %v1762 = vpop.f32.mrb[0].mxu0
    %v1763 = vadd.f32 %v433, %v1762
    %v1764 = vpop.f32.mrb[0].mxu0
    %v1765 = vadd.f32 %v429, %v1764
    %v1766 = vpop.f32.mrb[0].mxu0
    %v1767 = vadd.f32 %v433, %v1766
    %1768 = vmatprep.mubr.bf16.mxu0 %v418
    %1769 = vmatmul.mubr.bf16.gmra.mrb[0].mxu0 %v417
    %v1770 = vpop.f32.mrb[0].mxu0
    %v1771 = vadd.f32 %v429, %v1770
    %v1772 = vpop.f32.mrb[0].mxu0
    %v1773 = vadd.f32 %v433, %v1772
    %v1774 = vpop.f32.mrb[0].mxu0
    %v1775 = vadd.f32 %v429, %v1774
    %v1776 = vpop.f32.mrb[0].mxu0
    %v1777 = vadd.f32 %v433, %v1776
    %1778 = vdwg.mxu0
    %1779 = vmatprep.subr.bf16.mxu0 %v1279
    %1780 = vmatpush1.bf16.msra.mxu0 %v1278
    %1781 = vmatprep.subr.bf16.mxu0 %v1283
    %1782 = vmatpush1.bf16.msra.mxu0 %v1282
    %1783 = vmatprep.subr.bf16.mxu0 %v1287
    %1784 = vmatpush1.bf16.msra.mxu0 %v1286
    %1785 = vmatprep.subr.bf16.mxu0 %v1291
    %1786 = vmatpush1.bf16.msra.mxu0 %v1290
    %1787 = vmatprep.subr.bf16.mxu0 %v1295
    %1788 = vmatpush1.bf16.msra.mxu0 %v1294
    %1789 = vmatprep.subr.bf16.mxu0 %v1299
    %1790 = vmatpush1.bf16.msra.mxu0 %v1298
    %1791 = vmatprep.subr.bf16.mxu0 %v1303
    %1792 = vmatpush1.bf16.msra.mxu0 %v1302
    %1793 = vmatprep.subr.bf16.mxu0 %v1307
    %1794 = vmatpush1.bf16.msra.mxu0 %v1306
    %1795 = vmatprep.subr.bf16.mxu0 %v1311
    %1796 = vmatpush1.bf16.msra.mxu0 %v1310
    %1797 = vmatprep.subr.bf16.mxu0 %v1315
    %1798 = vmatpush1.bf16.msra.mxu0 %v1314
    %1799 = vmatprep.subr.bf16.mxu0 %v1319
    %1800 = vmatpush1.bf16.msra.mxu0 %v1318
    %1801 = vmatprep.subr.bf16.mxu0 %v1323
    %1802 = vmatpush1.bf16.msra.mxu0 %v1322
    %1803 = vmatprep.subr.bf16.mxu0 %v1327
    %1804 = vmatpush1.bf16.msra.mxu0 %v1326
    %1805 = vmatprep.subr.bf16.mxu0 %v1331
    %1806 = vmatpush1.bf16.msra.mxu0 %v1330
    %1807 = vmatprep.subr.bf16.mxu0 %v1335
    %1808 = vmatpush1.bf16.msra.mxu0 %v1334
    %1809 = vmatprep.subr.bf16.mxu0 %v1339
    %1810 = vmatpush1.bf16.msra.mxu0 %v1338
    %1811 = vmatprep.mubr.bf16.mxu0 %v412
    %1812 = vmatmul.mubr.bf16.gmra.mrb[0].mxu0 %v411
    %v1813 = vpop.f32.mrb[0].mxu0
    %v1814 = vadd.f32 %v1761, %v1813
    %v1815 = vpop.f32.mrb[0].mxu0
    %v1816 = vadd.f32 %v1763, %v1815
    %v1817 = vpop.f32.mrb[0].mxu0
    %v1818 = vadd.f32 %v1765, %v1817
    %v1819 = vpop.f32.mrb[0].mxu0
    %v1820 = vadd.f32 %v1767, %v1819
    %1821 = vmatprep.mubr.bf16.mxu0 %v420
    %1822 = vmatmul.mubr.bf16.gmra.mrb[0].mxu0 %v419
    %v1823 = vpop.f32.mrb[0].mxu0
    %v1824 = vadd.f32 %v1771, %v1823
    %v1825 = vpop.f32.mrb[0].mxu0
    %v1826 = vadd.f32 %v1773, %v1825
    %v1827 = vpop.f32.mrb[0].mxu0
    %v1828 = vadd.f32 %v1775, %v1827
    %v1829 = vpop.f32.mrb[0].mxu0
    %v1830 = vadd.f32 %v1777, %v1829
    %1831 = vdwg.mxu0
    %1832 = vmatprep.subr.bf16.mxu0 %v1343
    %1833 = vmatpush1.bf16.msra.mxu0 %v1342
    %1834 = vmatprep.subr.bf16.mxu0 %v1347
    %1835 = vmatpush1.bf16.msra.mxu0 %v1346
    %1836 = vmatprep.subr.bf16.mxu0 %v1351
    %1837 = vmatpush1.bf16.msra.mxu0 %v1350
    %1838 = vmatprep.subr.bf16.mxu0 %v1355
    %1839 = vmatpush1.bf16.msra.mxu0 %v1354
    %1840 = vmatprep.subr.bf16.mxu0 %v1359
    %1841 = vmatpush1.bf16.msra.mxu0 %v1358
    %1842 = vmatprep.subr.bf16.mxu0 %v1363
    %1843 = vmatpush1.bf16.msra.mxu0 %v1362
    %1844 = vmatprep.subr.bf16.mxu0 %v1367
    %1845 = vmatpush1.bf16.msra.mxu0 %v1366
    %1846 = vmatprep.subr.bf16.mxu0 %v1371
    %1847 = vmatpush1.bf16.msra.mxu0 %v1370
    %1848 = vmatprep.subr.bf16.mxu0 %v1375
    %1849 = vmatpush1.bf16.msra.mxu0 %v1374
    %1850 = vmatprep.subr.bf16.mxu0 %v1379
    %1851 = vmatpush1.bf16.msra.mxu0 %v1378
    %1852 = vmatprep.subr.bf16.mxu0 %v1383
    %1853 = vmatpush1.bf16.msra.mxu0 %v1382
    %1854 = vmatprep.subr.bf16.mxu0 %v1387
    %1855 = vmatpush1.bf16.msra.mxu0 %v1386
    %1856 = vmatprep.subr.bf16.mxu0 %v1391
    %1857 = vmatpush1.bf16.msra.mxu0 %v1390
    %1858 = vmatprep.subr.bf16.mxu0 %v1395
    %1859 = vmatpush1.bf16.msra.mxu0 %v1394
    %1860 = vmatprep.subr.bf16.mxu0 %v1399
    %1861 = vmatpush1.bf16.msra.mxu0 %v1398
    %1862 = vmatprep.subr.bf16.mxu0 %v1403
    %1863 = vmatpush1.bf16.msra.mxu0 %v1402
    %1864 = vmatprep.mubr.bf16.mxu0 %v414
    %1865 = vmatmul.mubr.bf16.gmra.mrb[0].mxu0 %v413
    %v1866 = vpop.f32.mrb[0].mxu0
    %v1867 = vadd.f32 %v1814, %v1866
    %v1868 = vpop.f32.mrb[0].mxu0
    %v1869 = vadd.f32 %v1816, %v1868
    %v1870 = vpop.f32.mrb[0].mxu0
    %v1871 = vadd.f32 %v1818, %v1870
    %v1872 = vpop.f32.mrb[0].mxu0
    %v1873 = vadd.f32 %v1820, %v1872
    %1874 = vmatprep.mubr.bf16.mxu0 %v422
    %1875 = vmatmul.mubr.bf16.gmra.mrb[0].mxu0 %v421
    %v1876 = vpop.f32.mrb[0].mxu0
    %v1877 = vadd.f32 %v1824, %v1876
    %v1878 = vpop.f32.mrb[0].mxu0
    %v1879 = vadd.f32 %v1826, %v1878
    %v1880 = vpop.f32.mrb[0].mxu0
    %v1881 = vadd.f32 %v1828, %v1880
    %v1882 = vpop.f32.mrb[0].mxu0
    %v1883 = vadd.f32 %v1830, %v1882
    %1884 = vdwg.mxu0
    %1885 = vmatprep.subr.bf16.mxu0 %v1407
    %1886 = vmatpush1.bf16.msra.mxu0 %v1406
    %1887 = vmatprep.subr.bf16.mxu0 %v1411
    %1888 = vmatpush1.bf16.msra.mxu0 %v1410
    %1889 = vmatprep.subr.bf16.mxu0 %v1415
    %1890 = vmatpush1.bf16.msra.mxu0 %v1414
    %1891 = vmatprep.subr.bf16.mxu0 %v1419
    %1892 = vmatpush1.bf16.msra.mxu0 %v1418
    %1893 = vmatprep.subr.bf16.mxu0 %v1423
    %1894 = vmatpush1.bf16.msra.mxu0 %v1422
    %1895 = vmatprep.subr.bf16.mxu0 %v1427
    %1896 = vmatpush1.bf16.msra.mxu0 %v1426
    %1897 = vmatprep.subr.bf16.mxu0 %v1431
    %1898 = vmatpush1.bf16.msra.mxu0 %v1430
    %1899 = vmatprep.subr.bf16.mxu0 %v1435
    %1900 = vmatpush1.bf16.msra.mxu0 %v1434
    %1901 = vmatprep.subr.bf16.mxu0 %v1439
    %1902 = vmatpush1.bf16.msra.mxu0 %v1438
    %1903 = vmatprep.subr.bf16.mxu0 %v1443
    %1904 = vmatpush1.bf16.msra.mxu0 %v1442
    %1905 = vmatprep.subr.bf16.mxu0 %v1447
    %1906 = vmatpush1.bf16.msra.mxu0 %v1446
    %1907 = vmatprep.subr.bf16.mxu0 %v1451
    %1908 = vmatpush1.bf16.msra.mxu0 %v1450
    %1909 = vmatprep.subr.bf16.mxu0 %v1455
    %1910 = vmatpush1.bf16.msra.mxu0 %v1454
    %1911 = vmatprep.subr.bf16.mxu0 %v1459
    %1912 = vmatpush1.bf16.msra.mxu0 %v1458
    %1913 = vmatprep.subr.bf16.mxu0 %v1463
    %1914 = vmatpush1.bf16.msra.mxu0 %v1462
    %1915 = vmatprep.subr.bf16.mxu0 %v1467
    %1916 = vmatpush1.bf16.msra.mxu0 %v1466
    %1917 = vmatprep.mubr.bf16.mxu0 %v416
    %1918 = vmatmul.mubr.bf16.gmra.mrb[0].mxu0 %v415
    %v1919 = vpop.f32.mrb[0].mxu0
    %v1920 = vadd.f32 %v1867, %v1919
    %v1921 = vpop.f32.mrb[0].mxu0
    %v1922 = vadd.f32 %v1869, %v1921
    %v1923 = vpop.f32.mrb[0].mxu0
    %v1924 = vadd.f32 %v1871, %v1923
    %v1925 = vpop.f32.mrb[0].mxu0
    %v1926 = vadd.f32 %v1873, %v1925
    %1927 = vmatprep.mubr.bf16.mxu0 %v424
    %1928 = vmatmul.mubr.bf16.gmra.mrb[0].mxu0 %v423
    %v1929 = vpop.f32.mrb[0].mxu0
    %v1930 = vadd.f32 %v1877, %v1929
    %v1931 = vpop.f32.mrb[0].mxu0
    %v1932 = vadd.f32 %v1879, %v1931
    %v1933 = vpop.f32.mrb[0].mxu0
    %v1934 = vadd.f32 %v1881, %v1933
    %v1935 = vpop.f32.mrb[0].mxu0
    %v1936 = vadd.f32 %v1883, %v1935
    %1937 = vdwg.mxu0
    %1938 = vmatprep.subr.bf16.mxu0 %v1217
    %1939 = vmatpush1.bf16.msra.mxu0 %v1216
    %1940 = vmatprep.subr.bf16.mxu0 %v1221
    %1941 = vmatpush1.bf16.msra.mxu0 %v1220
    %1942 = vmatprep.subr.bf16.mxu0 %v1225
    %1943 = vmatpush1.bf16.msra.mxu0 %v1224
    %1944 = vmatprep.subr.bf16.mxu0 %v1229
    %1945 = vmatpush1.bf16.msra.mxu0 %v1228
    %1946 = vmatprep.subr.bf16.mxu0 %v1233
    %1947 = vmatpush1.bf16.msra.mxu0 %v1232
    %1948 = vmatprep.subr.bf16.mxu0 %v1237
    %1949 = vmatpush1.bf16.msra.mxu0 %v1236
    %1950 = vmatprep.subr.bf16.mxu0 %v1241
    %1951 = vmatpush1.bf16.msra.mxu0 %v1240
    %1952 = vmatprep.subr.bf16.mxu0 %v1245
    %1953 = vmatpush1.bf16.msra.mxu0 %v1244
    %1954 = vmatprep.subr.bf16.mxu0 %v1249
    %1955 = vmatpush1.bf16.msra.mxu0 %v1248
    %1956 = vmatprep.subr.bf16.mxu0 %v1253
    %1957 = vmatpush1.bf16.msra.mxu0 %v1252
    %1958 = vmatprep.subr.bf16.mxu0 %v1257
    %1959 = vmatpush1.bf16.msra.mxu0 %v1256
    %1960 = vmatprep.subr.bf16.mxu0 %v1261
    %1961 = vmatpush1.bf16.msra.mxu0 %v1260
    %1962 = vmatprep.subr.bf16.mxu0 %v1265
    %1963 = vmatpush1.bf16.msra.mxu0 %v1264
    %1964 = vmatprep.subr.bf16.mxu0 %v1269
    %1965 = vmatpush1.bf16.msra.mxu0 %v1268
    %1966 = vmatprep.subr.bf16.mxu0 %v1273
    %1967 = vmatpush1.bf16.msra.mxu0 %v1272
    %1968 = vmatprep.subr.bf16.mxu0 %v1277
    %1969 = vmatpush1.bf16.msra.mxu0 %v1276
    %1970 = vmatprep.mubr.bf16.mxu0 %v410
    %1971 = vmatmul.mubr.bf16.gmra.mrb[0].mxu0 %v409
    %v1972 = vpop.f32.mrb[0].mxu0
    %v1973 = vadd.f32 %v437, %v1972
    %v1974 = vpop.f32.mrb[0].mxu0
    %v1975 = vadd.f32 %v441, %v1974
    %v1976 = vpop.f32.mrb[0].mxu0
    %v1977 = vadd.f32 %v437, %v1976
    %v1978 = vpop.f32.mrb[0].mxu0
    %v1979 = vadd.f32 %v441, %v1978
    %1980 = vmatprep.mubr.bf16.mxu0 %v418
    %1981 = vmatmul.mubr.bf16.gmra.mrb[0].mxu0 %v417
    %v1982 = vpop.f32.mrb[0].mxu0
    %v1983 = vadd.f32 %v437, %v1982
    %v1984 = vpop.f32.mrb[0].mxu0
    %v1985 = vadd.f32 %v441, %v1984
    %v1986 = vpop.f32.mrb[0].mxu0
    %v1987 = vadd.f32 %v437, %v1986
    %v1988 = vpop.f32.mrb[0].mxu0
    %v1989 = vadd.f32 %v441, %v1988
    %1990 = vdwg.mxu0
    %1991 = vmatprep.subr.bf16.mxu0 %v1281
    %1992 = vmatpush1.bf16.msra.mxu0 %v1280
    %1993 = vmatprep.subr.bf16.mxu0 %v1285
    %1994 = vmatpush1.bf16.msra.mxu0 %v1284
    %1995 = vmatprep.subr.bf16.mxu0 %v1289
    %1996 = vmatpush1.bf16.msra.mxu0 %v1288
    %1997 = vmatprep.subr.bf16.mxu0 %v1293
    %1998 = vmatpush1.bf16.msra.mxu0 %v1292
    %1999 = vmatprep.subr.bf16.mxu0 %v1297
    %2000 = vmatpush1.bf16.msra.mxu0 %v1296
    %2001 = vmatprep.subr.bf16.mxu0 %v1301
    %2002 = vmatpush1.bf16.msra.mxu0 %v1300
    %2003 = vmatprep.subr.bf16.mxu0 %v1305
    %2004 = vmatpush1.bf16.msra.mxu0 %v1304
    %2005 = vmatprep.subr.bf16.mxu0 %v1309
    %2006 = vmatpush1.bf16.msra.mxu0 %v1308
    %2007 = vmatprep.subr.bf16.mxu0 %v1313
    %2008 = vmatpush1.bf16.msra.mxu0 %v1312
    %2009 = vmatprep.subr.bf16.mxu0 %v1317
    %2010 = vmatpush1.bf16.msra.mxu0 %v1316
    %2011 = vmatprep.subr.bf16.mxu0 %v1321
    %2012 = vmatpush1.bf16.msra.mxu0 %v1320
    %2013 = vmatprep.subr.bf16.mxu0 %v1325
    %2014 = vmatpush1.bf16.msra.mxu0 %v1324
    %2015 = vmatprep.subr.bf16.mxu0 %v1329
    %2016 = vmatpush1.bf16.msra.mxu0 %v1328
    %2017 = vmatprep.subr.bf16.mxu0 %v1333
    %2018 = vmatpush1.bf16.msra.mxu0 %v1332
    %2019 = vmatprep.subr.bf16.mxu0 %v1337
    %2020 = vmatpush1.bf16.msra.mxu0 %v1336
    %2021 = vmatprep.subr.bf16.mxu0 %v1341
    %2022 = vmatpush1.bf16.msra.mxu0 %v1340
    %2023 = vmatprep.mubr.bf16.mxu0 %v412
    %2024 = vmatmul.mubr.bf16.gmra.mrb[0].mxu0 %v411
    %v2025 = vpop.f32.mrb[0].mxu0
    %v2026 = vadd.f32 %v1973, %v2025
    %v2027 = vpop.f32.mrb[0].mxu0
    %v2028 = vadd.f32 %v1975, %v2027
    %v2029 = vpop.f32.mrb[0].mxu0
    %v2030 = vadd.f32 %v1977, %v2029
    %v2031 = vpop.f32.mrb[0].mxu0
    %v2032 = vadd.f32 %v1979, %v2031
    %2033 = vmatprep.mubr.bf16.mxu0 %v420
    %2034 = vmatmul.mubr.bf16.gmra.mrb[0].mxu0 %v419
    %v2035 = vpop.f32.mrb[0].mxu0
    %v2036 = vadd.f32 %v1983, %v2035
    %v2037 = vpop.f32.mrb[0].mxu0
    %v2038 = vadd.f32 %v1985, %v2037
    %v2039 = vpop.f32.mrb[0].mxu0
    %v2040 = vadd.f32 %v1987, %v2039
    %v2041 = vpop.f32.mrb[0].mxu0
    %v2042 = vadd.f32 %v1989, %v2041
    %2043 = vdwg.mxu0
    %2044 = vmatprep.subr.bf16.mxu0 %v1345
    %2045 = vmatpush1.bf16.msra.mxu0 %v1344
    %2046 = vmatprep.subr.bf16.mxu0 %v1349
    %2047 = vmatpush1.bf16.msra.mxu0 %v1348
    %2048 = vmatprep.subr.bf16.mxu0 %v1353
    %2049 = vmatpush1.bf16.msra.mxu0 %v1352
    %2050 = vmatprep.subr.bf16.mxu0 %v1357
    %2051 = vmatpush1.bf16.msra.mxu0 %v1356
    %2052 = vmatprep.subr.bf16.mxu0 %v1361
    %2053 = vmatpush1.bf16.msra.mxu0 %v1360
    %2054 = vmatprep.subr.bf16.mxu0 %v1365
    %2055 = vmatpush1.bf16.msra.mxu0 %v1364
    %2056 = vmatprep.subr.bf16.mxu0 %v1369
    %2057 = vmatpush1.bf16.msra.mxu0 %v1368
    %2058 = vmatprep.subr.bf16.mxu0 %v1373
    %2059 = vmatpush1.bf16.msra.mxu0 %v1372
    %2060 = vmatprep.subr.bf16.mxu0 %v1377
    %2061 = vmatpush1.bf16.msra.mxu0 %v1376
    %2062 = vmatprep.subr.bf16.mxu0 %v1381
    %2063 = vmatpush1.bf16.msra.mxu0 %v1380
    %2064 = vmatprep.subr.bf16.mxu0 %v1385
    %2065 = vmatpush1.bf16.msra.mxu0 %v1384
    %2066 = vmatprep.subr.bf16.mxu0 %v1389
    %2067 = vmatpush1.bf16.msra.mxu0 %v1388
    %2068 = vmatprep.subr.bf16.mxu0 %v1393
    %2069 = vmatpush1.bf16.msra.mxu0 %v1392
    %2070 = vmatprep.subr.bf16.mxu0 %v1397
    %2071 = vmatpush1.bf16.msra.mxu0 %v1396
    %2072 = vmatprep.subr.bf16.mxu0 %v1401
    %2073 = vmatpush1.bf16.msra.mxu0 %v1400
    %2074 = vmatprep.subr.bf16.mxu0 %v1405
    %2075 = vmatpush1.bf16.msra.mxu0 %v1404
    %2076 = vmatprep.mubr.bf16.mxu0 %v414
    %2077 = vmatmul.mubr.bf16.gmra.mrb[0].mxu0 %v413
    %v2078 = vpop.f32.mrb[0].mxu0
    %v2079 = vadd.f32 %v2026, %v2078
    %v2080 = vpop.f32.mrb[0].mxu0
    %v2081 = vadd.f32 %v2028, %v2080
    %v2082 = vpop.f32.mrb[0].mxu0
    %v2083 = vadd.f32 %v2030, %v2082
    %v2084 = vpop.f32.mrb[0].mxu0
    %v2085 = vadd.f32 %v2032, %v2084
    %2086 = vmatprep.mubr.bf16.mxu0 %v422
    %2087 = vmatmul.mubr.bf16.gmra.mrb[0].mxu0 %v421
    %v2088 = vpop.f32.mrb[0].mxu0
    %v2089 = vadd.f32 %v2036, %v2088
    %v2090 = vpop.f32.mrb[0].mxu0
    %v2091 = vadd.f32 %v2038, %v2090
    %v2092 = vpop.f32.mrb[0].mxu0
    %v2093 = vadd.f32 %v2040, %v2092
    %v2094 = vpop.f32.mrb[0].mxu0
    %v2095 = vadd.f32 %v2042, %v2094
    %2096 = vdwg.mxu0
    %2097 = vmatprep.subr.bf16.mxu0 %v1409
    %2098 = vmatpush1.bf16.msra.mxu0 %v1408
    %2099 = vmatprep.subr.bf16.mxu0 %v1413
    %2100 = vmatpush1.bf16.msra.mxu0 %v1412
    %2101 = vmatprep.subr.bf16.mxu0 %v1417
    %2102 = vmatpush1.bf16.msra.mxu0 %v1416
    %2103 = vmatprep.subr.bf16.mxu0 %v1421
    %2104 = vmatpush1.bf16.msra.mxu0 %v1420
    %2105 = vmatprep.subr.bf16.mxu0 %v1425
    %2106 = vmatpush1.bf16.msra.mxu0 %v1424
    %2107 = vmatprep.subr.bf16.mxu0 %v1429
    %2108 = vmatpush1.bf16.msra.mxu0 %v1428
    %2109 = vmatprep.subr.bf16.mxu0 %v1433
    %2110 = vmatpush1.bf16.msra.mxu0 %v1432
    %2111 = vmatprep.subr.bf16.mxu0 %v1437
    %2112 = vmatpush1.bf16.msra.mxu0 %v1436
    %2113 = vmatprep.subr.bf16.mxu0 %v1441
    %2114 = vmatpush1.bf16.msra.mxu0 %v1440
    %2115 = vmatprep.subr.bf16.mxu0 %v1445
    %2116 = vmatpush1.bf16.msra.mxu0 %v1444
    %2117 = vmatprep.subr.bf16.mxu0 %v1449
    %2118 = vmatpush1.bf16.msra.mxu0 %v1448
    %2119 = vmatprep.subr.bf16.mxu0 %v1453
    %2120 = vmatpush1.bf16.msra.mxu0 %v1452
    %2121 = vmatprep.subr.bf16.mxu0 %v1457
    %2122 = vmatpush1.bf16.msra.mxu0 %v1456
    %2123 = vmatprep.subr.bf16.mxu0 %v1461
    %2124 = vmatpush1.bf16.msra.mxu0 %v1460
    %2125 = vmatprep.subr.bf16.mxu0 %v1465
    %2126 = vmatpush1.bf16.msra.mxu0 %v1464
    %2127 = vmatprep.subr.bf16.mxu0 %v1469
    %2128 = vmatpush1.bf16.msra.mxu0 %v1468
    %2129 = vmatprep.mubr.bf16.mxu0 %v416
    %2130 = vmatmul.mubr.bf16.gmra.mrb[0].mxu0 %v415
    %v2131 = vpop.f32.mrb[0].mxu0
    %v2132 = vadd.f32 %v2079, %v2131
    %v2133 = vpop.f32.mrb[0].mxu0
    %v2134 = vadd.f32 %v2081, %v2133
    %v2135 = vpop.f32.mrb[0].mxu0
    %v2136 = vadd.f32 %v2083, %v2135
    %v2137 = vpop.f32.mrb[0].mxu0
    %v2138 = vadd.f32 %v2085, %v2137
    %2139 = vmatprep.mubr.bf16.mxu0 %v424
    %2140 = vmatmul.mubr.bf16.gmra.mrb[0].mxu0 %v423
    %v2141 = vpop.f32.mrb[0].mxu0
    %v2142 = vadd.f32 %v2089, %v2141
    %v2143 = vpop.f32.mrb[0].mxu0
    %v2144 = vadd.f32 %v2091, %v2143
    %v2145 = vpop.f32.mrb[0].mxu0
    %v2146 = vadd.f32 %v2093, %v2145
    %v2147 = vpop.f32.mrb[0].mxu0
    %v2148 = vadd.f32 %v2095, %v2147
    %2149 = vdwg.mxu0
    %v2150 = vmax.f32 %v1920, 0.0
    %v2151 = vmax.f32 %v1922, 0.0
    %v2152 = vmax.f32 %v2132, 0.0
    %v2153 = vmax.f32 %v2134, 0.0
    %v2154 = vmax.f32 %v1924, 0.0
    %v2155 = vmax.f32 %v1926, 0.0
    %v2156 = vmax.f32 %v2136, 0.0
    %v2157 = vmax.f32 %v2138, 0.0
    %v2158 = vmax.f32 %v1930, 0.0
    %v2159 = vmax.f32 %v1932, 0.0
    %v2160 = vmax.f32 %v2142, 0.0
    %v2161 = vmax.f32 %v2144, 0.0
    %v2162 = vmax.f32 %v1934, 0.0
    %v2163 = vmax.f32 %v1936, 0.0
    %v2164 = vmax.f32 %v2146, 0.0
    %v2165 = vmax.f32 %v2148, 0.0
    %v2166 = vpack.c.bf16 %v2154, %v2150
    %v2167 = vpack.c.bf16 %v2155, %v2151
    %v2168 = vpack.c.bf16 %v2156, %v2152
    %v2169 = vpack.c.bf16 %v2157, %v2153
    %v2170 = vpack.c.bf16 %v2162, %v2158
    %v2171 = vpack.c.bf16 %v2163, %v2159
    %v2172 = vpack.c.bf16 %v2164, %v2160
    %v2173 = vpack.c.bf16 %v2165, %v2161
    %v2175 = vlaneseq
    %v2176 = vshrl.u32 %v2175, 7
    %v2177 = vsub.s32 0, %v2176
    %v2178 = vrot.slane %v373, %v2177
    %v2244 = vunpack.c.l.b16 %v309
    %v2245 = vunpack.c.l.b16 %v310
    %v2246 = vunpack.c.l.b16 %v311
    %v2247 = vunpack.c.l.b16 %v312
    %v2248 = vunpack.c.l.b16 %v313
    %v2249 = vunpack.c.l.b16 %v314
    %v2250 = vunpack.c.l.b16 %v315
    %v2251 = vunpack.c.l.b16 %v316
    %v2252 = vunpack.c.l.b16 %v317
    %v2253 = vunpack.c.l.b16 %v318
    %v2254 = vunpack.c.l.b16 %v319
    %v2255 = vunpack.c.l.b16 %v320
    %v2256 = vunpack.c.l.b16 %v321
    %v2257 = vunpack.c.l.b16 %v322
    %v2258 = vunpack.c.l.b16 %v323
    %v2259 = vunpack.c.l.b16 %v324
    %v2260 = vunpack.c.l.b16 %v325
    %v2261 = vunpack.c.l.b16 %v326
    %v2262 = vunpack.c.l.b16 %v327
    %v2263 = vunpack.c.l.b16 %v328
    %v2264 = vunpack.c.l.b16 %v329
    %v2265 = vunpack.c.l.b16 %v330
    %v2266 = vunpack.c.l.b16 %v331
    %v2267 = vunpack.c.l.b16 %v332
    %v2268 = vunpack.c.l.b16 %v333
    %v2269 = vunpack.c.l.b16 %v334
    %v2270 = vunpack.c.l.b16 %v335
    %v2271 = vunpack.c.l.b16 %v336
    %v2272 = vunpack.c.l.b16 %v337
    %v2273 = vunpack.c.l.b16 %v338
    %v2274 = vunpack.c.l.b16 %v339
    %v2275 = vunpack.c.l.b16 %v340
    %v2276 = vunpack.c.l.b16 %v341
    %v2277 = vunpack.c.l.b16 %v342
    %v2278 = vunpack.c.l.b16 %v343
    %v2279 = vunpack.c.l.b16 %v344
    %v2280 = vunpack.c.l.b16 %v345
    %v2281 = vunpack.c.l.b16 %v346
    %v2282 = vunpack.c.l.b16 %v347
    %v2283 = vunpack.c.l.b16 %v348
    %v2284 = vunpack.c.l.b16 %v349
    %v2285 = vunpack.c.l.b16 %v350
    %v2286 = vunpack.c.l.b16 %v351
    %v2287 = vunpack.c.l.b16 %v352
    %v2288 = vunpack.c.l.b16 %v353
    %v2289 = vunpack.c.l.b16 %v354
    %v2290 = vunpack.c.l.b16 %v355
    %v2291 = vunpack.c.l.b16 %v356
    %v2292 = vunpack.c.l.b16 %v357
    %v2293 = vunpack.c.l.b16 %v358
    %v2294 = vunpack.c.l.b16 %v359
    %v2295 = vunpack.c.l.b16 %v360
    %v2296 = vunpack.c.l.b16 %v361
    %v2297 = vunpack.c.l.b16 %v362
    %v2298 = vunpack.c.l.b16 %v363
    %v2299 = vunpack.c.l.b16 %v364
    %v2300 = vunpack.c.l.b16 %v365
    %v2301 = vunpack.c.l.b16 %v366
    %v2302 = vunpack.c.l.b16 %v367
    %v2303 = vunpack.c.l.b16 %v368
    %v2304 = vunpack.c.l.b16 %v369
    %v2305 = vunpack.c.l.b16 %v370
    %v2306 = vunpack.c.l.b16 %v371
    %v2307 = vunpack.c.l.b16 %v372
    %v2308 = vpack.c.b16 %v2245, %v2244
    %v2309 = vpack.c.b16 %v2247, %v2246
    %v2310 = vpack.c.b16 %v2249, %v2248
    %v2311 = vpack.c.b16 %v2251, %v2250
    %v2312 = vpack.c.b16 %v2253, %v2252
    %v2313 = vpack.c.b16 %v2255, %v2254
    %v2314 = vpack.c.b16 %v2257, %v2256
    %v2315 = vpack.c.b16 %v2259, %v2258
    %v2316 = vpack.c.b16 %v2261, %v2260
    %v2317 = vpack.c.b16 %v2263, %v2262
    %v2318 = vpack.c.b16 %v2265, %v2264
    %v2319 = vpack.c.b16 %v2267, %v2266
    %v2320 = vpack.c.b16 %v2269, %v2268
    %v2321 = vpack.c.b16 %v2271, %v2270
    %v2322 = vpack.c.b16 %v2273, %v2272
    %v2323 = vpack.c.b16 %v2275, %v2274
    %v2324 = vpack.c.b16 %v2277, %v2276
    %v2325 = vpack.c.b16 %v2279, %v2278
    %v2326 = vpack.c.b16 %v2281, %v2280
    %v2327 = vpack.c.b16 %v2283, %v2282
    %v2328 = vpack.c.b16 %v2285, %v2284
    %v2329 = vpack.c.b16 %v2287, %v2286
    %v2330 = vpack.c.b16 %v2289, %v2288
    %v2331 = vpack.c.b16 %v2291, %v2290
    %v2332 = vpack.c.b16 %v2293, %v2292
    %v2333 = vpack.c.b16 %v2295, %v2294
    %v2334 = vpack.c.b16 %v2297, %v2296
    %v2335 = vpack.c.b16 %v2299, %v2298
    %v2336 = vpack.c.b16 %v2301, %v2300
    %v2337 = vpack.c.b16 %v2303, %v2302
    %v2338 = vpack.c.b16 %v2305, %v2304
    %v2339 = vpack.c.b16 %v2307, %v2306
    %2372 = vmatprep.subr.bf16.mxu0 0
    %2373 = vmatpush1.bf16.msra.mxu0 %v2308
    %2374 = vmatprep.subr.bf16.mxu0 0
    %2375 = vmatpush1.bf16.msra.mxu0 %v2309
    %2376 = vmatprep.subr.bf16.mxu0 0
    %2377 = vmatpush1.bf16.msra.mxu0 %v2310
    %2378 = vmatprep.subr.bf16.mxu0 0
    %2379 = vmatpush1.bf16.msra.mxu0 %v2311
    %2380 = vmatprep.subr.bf16.mxu0 0
    %2381 = vmatpush1.bf16.msra.mxu0 %v2312
    %2382 = vmatprep.subr.bf16.mxu0 0
    %2383 = vmatpush1.bf16.msra.mxu0 %v2313
    %2384 = vmatprep.subr.bf16.mxu0 0
    %2385 = vmatpush1.bf16.msra.mxu0 %v2314
    %2386 = vmatprep.subr.bf16.mxu0 0
    %2387 = vmatpush1.bf16.msra.mxu0 %v2315
    %2388 = vmatprep.subr.bf16.mxu0 0
    %2389 = vmatpush1.bf16.msra.mxu0 %v2316
    %2390 = vmatprep.subr.bf16.mxu0 0
    %2391 = vmatpush1.bf16.msra.mxu0 %v2317
    %2392 = vmatprep.subr.bf16.mxu0 0
    %2393 = vmatpush1.bf16.msra.mxu0 %v2318
    %2394 = vmatprep.subr.bf16.mxu0 0
    %2395 = vmatpush1.bf16.msra.mxu0 %v2319
    %2396 = vmatprep.subr.bf16.mxu0 0
    %2397 = vmatpush1.bf16.msra.mxu0 %v2320
    %2398 = vmatprep.subr.bf16.mxu0 0
    %2399 = vmatpush1.bf16.msra.mxu0 %v2321
    %2400 = vmatprep.subr.bf16.mxu0 0
    %2401 = vmatpush1.bf16.msra.mxu0 %v2322
    %2402 = vmatprep.subr.bf16.mxu0 0
    %2403 = vmatpush1.bf16.msra.mxu0 %v2323
    %2404 = vmatprep.mubr.bf16.mxu0 %v2167
    %2405 = vmatmul.mubr.bf16.gmra.mrb[0].mxu0 %v2166
    %v2406 = vpop.f32.mrb[0].mxu0
    %v2407 = vadd.f32 %v2178, %v2406
    %v2408 = vpop.f32.mrb[0].mxu0
    %v2409 = vpop.f32.mrb[0].mxu0
    %v2410 = vadd.f32 %v2178, %v2409
    %v2411 = vpop.f32.mrb[0].mxu0
    %2412 = vmatprep.mubr.bf16.mxu0 %v2171
    %2413 = vmatmul.mubr.bf16.gmra.mrb[0].mxu0 %v2170
    %v2414 = vpop.f32.mrb[0].mxu0
    %v2415 = vadd.f32 %v2178, %v2414
    %v2416 = vpop.f32.mrb[0].mxu0
    %v2417 = vpop.f32.mrb[0].mxu0
    %v2418 = vadd.f32 %v2178, %v2417
    %v2419 = vpop.f32.mrb[0].mxu0
    %2420 = vdwg.mxu0
    %2421 = vmatprep.subr.bf16.mxu0 0
    %2422 = vmatpush1.bf16.msra.mxu0 %v2324
    %2423 = vmatprep.subr.bf16.mxu0 0
    %2424 = vmatpush1.bf16.msra.mxu0 %v2325
    %2425 = vmatprep.subr.bf16.mxu0 0
    %2426 = vmatpush1.bf16.msra.mxu0 %v2326
    %2427 = vmatprep.subr.bf16.mxu0 0
    %2428 = vmatpush1.bf16.msra.mxu0 %v2327
    %2429 = vmatprep.subr.bf16.mxu0 0
    %2430 = vmatpush1.bf16.msra.mxu0 %v2328
    %2431 = vmatprep.subr.bf16.mxu0 0
    %2432 = vmatpush1.bf16.msra.mxu0 %v2329
    %2433 = vmatprep.subr.bf16.mxu0 0
    %2434 = vmatpush1.bf16.msra.mxu0 %v2330
    %2435 = vmatprep.subr.bf16.mxu0 0
    %2436 = vmatpush1.bf16.msra.mxu0 %v2331
    %2437 = vmatprep.subr.bf16.mxu0 0
    %2438 = vmatpush1.bf16.msra.mxu0 %v2332
    %2439 = vmatprep.subr.bf16.mxu0 0
    %2440 = vmatpush1.bf16.msra.mxu0 %v2333
    %2441 = vmatprep.subr.bf16.mxu0 0
    %2442 = vmatpush1.bf16.msra.mxu0 %v2334
    %2443 = vmatprep.subr.bf16.mxu0 0
    %2444 = vmatpush1.bf16.msra.mxu0 %v2335
    %2445 = vmatprep.subr.bf16.mxu0 0
    %2446 = vmatpush1.bf16.msra.mxu0 %v2336
    %2447 = vmatprep.subr.bf16.mxu0 0
    %2448 = vmatpush1.bf16.msra.mxu0 %v2337
    %2449 = vmatprep.subr.bf16.mxu0 0
    %2450 = vmatpush1.bf16.msra.mxu0 %v2338
    %2451 = vmatprep.subr.bf16.mxu0 0
    %2452 = vmatpush1.bf16.msra.mxu0 %v2339
    %2453 = vmatprep.mubr.bf16.mxu0 %v2169
    %2454 = vmatmul.mubr.bf16.gmra.mrb[0].mxu0 %v2168
    %v2455 = vpop.f32.mrb[0].mxu0
    %v2456 = vadd.f32 %v2407, %v2455
    %v2457 = vpop.f32.mrb[0].mxu0
    %v2458 = vpop.f32.mrb[0].mxu0
    %v2459 = vadd.f32 %v2410, %v2458
    %v2460 = vpop.f32.mrb[0].mxu0
    %2461 = vmatprep.mubr.bf16.mxu0 %v2173
    %2462 = vmatmul.mubr.bf16.gmra.mrb[0].mxu0 %v2172
    %v2463 = vpop.f32.mrb[0].mxu0
    %v2464 = vadd.f32 %v2415, %v2463
    %v2465 = vpop.f32.mrb[0].mxu0
    %v2466 = vpop.f32.mrb[0].mxu0
    %v2467 = vadd.f32 %v2418, %v2466
    %v2468 = vpop.f32.mrb[0].mxu0
    %2469 = vdwg.mxu0
    %v2470 = vmax.f32 %v2456, 0.0
    %v2471 = vmax.f32 %v2459, 0.0
    %v2472 = vmax.f32 %v2464, 0.0
    %v2473 = vmax.f32 %v2467, 0.0
    %2475 = vset.pattern.permute.xlu0 0
    %2476 = vperm.xlu0 %2475, %v376
    %v2477 = vpop.permute.xlu0 %2476
    %v2479 = vlaneseq
    %v2480 = vshrl.u32 %v2479, 7
    %v2481 = vsub.s32 0, %v2480
    %v2482 = vrot.slane %v2477, %v2481
    %2483 = vmatprep.subr.mxu0 0.0
    %2484 = vmatpush1.xpose.msra.mxu0 %v2470
    %2485 = vmatprep.subr.mxu0 0.0
    %2486 = vmatpush1.xpose.msra.mxu0 %v2471
    %2487 = vmatprep.subr.mxu0 0.0
    %2488 = vmatpush1.xpose.msra.mxu0 %v2472
    %2489 = vmatprep.subr.mxu0 0.0
    %2490 = vmatpush1.xpose.msra.mxu0 %v2473
    %2491 = vmatprep.subr.mxu0 0.0
    %2492 = vmatpush1.xpose.msra.mxu0 0.0
    %2493 = vmatprep.subr.mxu0 0.0
    %2494 = vmatpush1.xpose.msra.mxu0 0.0
    %2495 = vmatprep.subr.mxu0 0.0
    %2496 = vmatpush1.xpose.msra.mxu0 0.0
    %2497 = vmatprep.subr.mxu0 0.0
    %2498 = vmatpush1.xpose.msra.mxu0 0.0
    %2499 = vmatprep.subr.mxu0 0.0
    %2500 = vmatpush1.xpose.msra.mxu0 0.0
    %2501 = vmatprep.subr.mxu0 0.0
    %2502 = vmatpush1.xpose.msra.mxu0 0.0
    %2503 = vmatprep.subr.mxu0 0.0
    %2504 = vmatpush1.xpose.msra.mxu0 0.0
    %2505 = vmatprep.subr.mxu0 0.0
    %2506 = vmatpush1.xpose.msra.mxu0 0.0
    %2507 = vmatprep.subr.mxu0 0.0
    %2508 = vmatpush1.xpose.msra.mxu0 0.0
    %2509 = vmatprep.subr.mxu0 0.0
    %2510 = vmatpush1.xpose.msra.mxu0 0.0
    %2511 = vmatprep.subr.mxu0 0.0
    %2512 = vmatpush1.xpose.msra.mxu0 0.0
    %2513 = vmatprep.subr.mxu0 0.0
    %2514 = vmatpush1.xpose.msra.mxu0 0.0
    %2515 = vmatprep.subr.mxu0 0.0
    %2516 = vmatpush1.xpose.msra.mxu0 0.0
    %2517 = vmatprep.subr.mxu0 0.0
    %2518 = vmatpush1.xpose.msra.mxu0 0.0
    %2519 = vmatprep.subr.mxu0 0.0
    %2520 = vmatpush1.xpose.msra.mxu0 0.0
    %2521 = vmatprep.subr.mxu0 0.0
    %2522 = vmatpush1.xpose.msra.mxu0 0.0
    %2523 = vmatprep.subr.mxu0 0.0
    %2524 = vmatpush1.xpose.msra.mxu0 0.0
    %2525 = vmatprep.subr.mxu0 0.0
    %2526 = vmatpush1.xpose.msra.mxu0 0.0
    %2527 = vmatprep.subr.mxu0 0.0
    %2528 = vmatpush1.xpose.msra.mxu0 0.0
    %2529 = vmatprep.subr.mxu0 0.0
    %2530 = vmatpush1.xpose.msra.mxu0 0.0
    %2531 = vmatprep.subr.mxu0 0.0
    %2532 = vmatpush1.xpose.msra.mxu0 0.0
    %2533 = vmatprep.subr.mxu0 0.0
    %2534 = vmatpush1.xpose.msra.mxu0 0.0
    %2535 = vmatprep.subr.mxu0 0.0
    %2536 = vmatpush1.xpose.msra.mxu0 0.0
    %2537 = vmatprep.subr.mxu0 0.0
    %2538 = vmatpush1.xpose.msra.mxu0 0.0
    %2539 = vmatprep.subr.mxu0 0.0
    %2540 = vmatpush1.xpose.msra.mxu0 0.0
    %2541 = vmatprep.subr.mxu0 0.0
    %2542 = vmatpush1.xpose.msra.mxu0 0.0
    %2543 = vmatprep.subr.mxu0 0.0
    %2544 = vmatpush1.xpose.msra.mxu0 0.0
    %2545 = vmatprep.subr.mxu0 0.0
    %2546 = vmatpush1.xpose.msra.mxu0 0.0
    %2547 = vmatprep.mubr.f32.mxu0 0.0
    %2548 = vmatmul.mubr.f32.gmra.mrb[0].mxu0 %v375
    %v2549 = vpop.f32.mrb[0].mxu0
    %v2550 = vadd.f32 %v2482, %v2549
    %v2551 = vpop.f32.mrb[0].mxu0
    %2552 = vdwg.mxu0
    %vm2553 = vcmask 229376
    %2554 = vst.msk [vmem:[%s9] sm:$0x1] %vm2553, %v2550
    %v2555 = vld [vmem:[%s8] sm:$0x1]
    %v2556 = vld [vmem:[%s7] sm:$0x1]
    %v2557 = vsub.f32 0.0, %v2550
    %v2558 = vmax.f32 %v2557, 0.0
    %v2559 = vand.u32 2147483647, %v2550
    %v2560 = vsub.f32 0.0, %v2559
    %v2561 = vmul.f32 %v2560, 1.442695
    %v2562 = vpow.pop %v2561
    %v2563 = vadd.f32 %v2562, 1.0
    %v2564 = vlog2.pop %v2563
    %v2565 = vmul.f32 %v2564, 0.6931472
    %v2566 = vadd.f32 %v2558, %v2565
    %v2567 = vsub.f32 1.0, %v2555
    %v2568 = vmul.f32 %v2567, %v2550
    %v2569 = vmul.f32 %v2555, 2.13
    %v2570 = vadd.f32 %v2569, %v2567
    %v2571 = vmul.f32 %v2570, %v2566
    %v2572 = vadd.f32 %v2568, %v2571
    %v2573 = vmul.f32 %v2556, %v2572
    %v2574 = vsel %vm2553, %v2573, 0.0
    %2575 = vadd.xlane.f32.xlu0 %v2574
    %v2576 = vpop.xlane.xlu0 %2575
    %v2577 = vadd.f32 %v2576, 0.0
    %v2578 = vsel %vm2553, %v2556, 0.0
    %2579 = vadd.xlane.f32.xlu0 %v2578
    %v2580 = vpop.xlane.xlu0 %2579
    %v2581 = vadd.f32 %v2580, 0.0
    %s2582 = scalar_lea.vmem %s0, 256
    %v2583 = vld [vmem:[%s2582] sm:$0xff]
    %v2584 = vld [vmem:[%s2582 + $0x8] sm:$0xff]
    %v2585 = vld [vmem:[%s2582 + $0x10] sm:$0xff]
    %v2586 = vld [vmem:[%s2582 + $0x18] sm:$0xff]
    %v2587 = vld [vmem:[%s2582 + $0x20] sm:$0xff]
    %v2588 = vld [vmem:[%s2582 + $0x28] sm:$0xff]
    %v2589 = vld [vmem:[%s2582 + $0x30] sm:$0xff]
    %v2590 = vld [vmem:[%s2582 + $0x38] sm:$0xff]
    %v2591 = vld [vmem:[%s2582 + $0x40] sm:$0xff]
    %v2592 = vld [vmem:[%s2582 + $0x48] sm:$0xff]
    %v2593 = vld [vmem:[%s2582 + $0x50] sm:$0xff]
    %v2594 = vld [vmem:[%s2582 + $0x58] sm:$0xff]
    %v2595 = vld [vmem:[%s2582 + $0x60] sm:$0xff]
    %v2596 = vld [vmem:[%s2582 + $0x68] sm:$0xff]
    %v2597 = vld [vmem:[%s2582 + $0x70] sm:$0xff]
    %v2598 = vld [vmem:[%s2582 + $0x78] sm:$0xff]
    %v2599 = vld [vmem:[%s2582 + $0x80] sm:$0xff]
    %v2600 = vld [vmem:[%s2582 + $0x88] sm:$0xff]
    %v2601 = vld [vmem:[%s2582 + $0x90] sm:$0xff]
    %v2602 = vld [vmem:[%s2582 + $0x98] sm:$0xff]
    %v2603 = vld [vmem:[%s2582 + $0xa0] sm:$0xff]
    %v2604 = vld [vmem:[%s2582 + $0xa8] sm:$0xff]
    %v2605 = vld [vmem:[%s2582 + $0xb0] sm:$0xff]
    %v2606 = vld [vmem:[%s2582 + $0xb8] sm:$0xff]
    %v2607 = vld [vmem:[%s2582 + $0xc0] sm:$0x1f]
    %v2608 = vld [vmem:[%s2582 + $0xc8] sm:$0x1f]
    %v2609 = vld [vmem:[%s2582 + $0xd0] sm:$0x1f]
    %v2610 = vld [vmem:[%s2582 + $0xd8] sm:$0x1f]
    %v2611 = vld [vmem:[%s2582 + $0xe0] sm:$0x1f]
    %v2612 = vld [vmem:[%s2582 + $0xe8] sm:$0x1f]
    %v2613 = vld [vmem:[%s2582 + $0xf0] sm:$0x1f]
    %v2614 = vld [vmem:[%s2582 + $0xf8] sm:$0x1f]
    %v2615 = vpack.c.bf16 %v2591, %v2583
    %v2616 = vpack.c.bf16 %v2592, %v2584
    %v2617 = vpack.c.bf16 %v2593, %v2585
    %v2618 = vpack.c.bf16 %v2594, %v2586
    %v2619 = vpack.c.bf16 %v2595, %v2587
    %v2620 = vpack.c.bf16 %v2596, %v2588
    %v2621 = vpack.c.bf16 %v2597, %v2589
    %v2622 = vpack.c.bf16 %v2598, %v2590
    %v2623 = vpack.c.bf16 %v2607, %v2599
    %v2624 = vpack.c.bf16 %v2608, %v2600
    %v2625 = vpack.c.bf16 %v2609, %v2601
    %v2626 = vpack.c.bf16 %v2610, %v2602
    %v2627 = vpack.c.bf16 %v2611, %v2603
    %v2628 = vpack.c.bf16 %v2612, %v2604
    %v2629 = vpack.c.bf16 %v2613, %v2605
    %v2630 = vpack.c.bf16 %v2614, %v2606
    %2631 = vmatprep.subr.bf16.mxu0 %v1215
    %2632 = vmatpush1.bf16.msra.mxu0 %v1214
    %2633 = vmatprep.subr.bf16.mxu0 %v1219
    %2634 = vmatpush1.bf16.msra.mxu0 %v1218
    %2635 = vmatprep.subr.bf16.mxu0 %v1223
    %2636 = vmatpush1.bf16.msra.mxu0 %v1222
    %2637 = vmatprep.subr.bf16.mxu0 %v1227
    %2638 = vmatpush1.bf16.msra.mxu0 %v1226
    %2639 = vmatprep.subr.bf16.mxu0 %v1231
    %2640 = vmatpush1.bf16.msra.mxu0 %v1230
    %2641 = vmatprep.subr.bf16.mxu0 %v1235
    %2642 = vmatpush1.bf16.msra.mxu0 %v1234
    %2643 = vmatprep.subr.bf16.mxu0 %v1239
    %2644 = vmatpush1.bf16.msra.mxu0 %v1238
    %2645 = vmatprep.subr.bf16.mxu0 %v1243
    %2646 = vmatpush1.bf16.msra.mxu0 %v1242
    %2647 = vmatprep.subr.bf16.mxu0 %v1247
    %2648 = vmatpush1.bf16.msra.mxu0 %v1246
    %2649 = vmatprep.subr.bf16.mxu0 %v1251
    %2650 = vmatpush1.bf16.msra.mxu0 %v1250
    %2651 = vmatprep.subr.bf16.mxu0 %v1255
    %2652 = vmatpush1.bf16.msra.mxu0 %v1254
    %2653 = vmatprep.subr.bf16.mxu0 %v1259
    %2654 = vmatpush1.bf16.msra.mxu0 %v1258
    %2655 = vmatprep.subr.bf16.mxu0 %v1263
    %2656 = vmatpush1.bf16.msra.mxu0 %v1262
    %2657 = vmatprep.subr.bf16.mxu0 %v1267
    %2658 = vmatpush1.bf16.msra.mxu0 %v1266
    %2659 = vmatprep.subr.bf16.mxu0 %v1271
    %2660 = vmatpush1.bf16.msra.mxu0 %v1270
    %2661 = vmatprep.subr.bf16.mxu0 %v1275
    %2662 = vmatpush1.bf16.msra.mxu0 %v1274
    %2663 = vmatprep.mubr.bf16.mxu0 %v2616
    %2664 = vmatmul.mubr.bf16.gmra.mrb[0].mxu0 %v2615
    %v2665 = vpop.f32.mrb[0].mxu0
    %v2666 = vadd.f32 %v429, %v2665
    %v2667 = vpop.f32.mrb[0].mxu0
    %v2668 = vadd.f32 %v433, %v2667
    %v2669 = vpop.f32.mrb[0].mxu0
    %v2670 = vadd.f32 %v429, %v2669
    %v2671 = vpop.f32.mrb[0].mxu0
    %v2672 = vadd.f32 %v433, %v2671
    %2673 = vmatprep.mubr.bf16.mxu0 %v2624
    %2674 = vmatmul.mubr.bf16.gmra.mrb[0].mxu0 %v2623
    %v2675 = vpop.f32.mrb[0].mxu0
    %v2676 = vadd.f32 %v429, %v2675
    %v2677 = vpop.f32.mrb[0].mxu0
    %v2678 = vadd.f32 %v433, %v2677
    %v2679 = vpop.f32.mrb[0].mxu0
    %v2680 = vadd.f32 %v429, %v2679
    %v2681 = vpop.f32.mrb[0].mxu0
    %v2682 = vadd.f32 %v433, %v2681
    %2683 = vdwg.mxu0
    %2684 = vmatprep.subr.bf16.mxu0 %v1279
    %2685 = vmatpush1.bf16.msra.mxu0 %v1278
    %2686 = vmatprep.subr.bf16.mxu0 %v1283
    %2687 = vmatpush1.bf16.msra.mxu0 %v1282
    %2688 = vmatprep.subr.bf16.mxu0 %v1287
    %2689 = vmatpush1.bf16.msra.mxu0 %v1286
    %2690 = vmatprep.subr.bf16.mxu0 %v1291
    %2691 = vmatpush1.bf16.msra.mxu0 %v1290
    %2692 = vmatprep.subr.bf16.mxu0 %v1295
    %2693 = vmatpush1.bf16.msra.mxu0 %v1294
    %2694 = vmatprep.subr.bf16.mxu0 %v1299
    %2695 = vmatpush1.bf16.msra.mxu0 %v1298
    %2696 = vmatprep.subr.bf16.mxu0 %v1303
    %2697 = vmatpush1.bf16.msra.mxu0 %v1302
    %2698 = vmatprep.subr.bf16.mxu0 %v1307
    %2699 = vmatpush1.bf16.msra.mxu0 %v1306
    %2700 = vmatprep.subr.bf16.mxu0 %v1311
    %2701 = vmatpush1.bf16.msra.mxu0 %v1310
    %2702 = vmatprep.subr.bf16.mxu0 %v1315
    %2703 = vmatpush1.bf16.msra.mxu0 %v1314
    %2704 = vmatprep.subr.bf16.mxu0 %v1319
    %2705 = vmatpush1.bf16.msra.mxu0 %v1318
    %2706 = vmatprep.subr.bf16.mxu0 %v1323
    %2707 = vmatpush1.bf16.msra.mxu0 %v1322
    %2708 = vmatprep.subr.bf16.mxu0 %v1327
    %2709 = vmatpush1.bf16.msra.mxu0 %v1326
    %2710 = vmatprep.subr.bf16.mxu0 %v1331
    %2711 = vmatpush1.bf16.msra.mxu0 %v1330
    %2712 = vmatprep.subr.bf16.mxu0 %v1335
    %2713 = vmatpush1.bf16.msra.mxu0 %v1334
    %2714 = vmatprep.subr.bf16.mxu0 %v1339
    %2715 = vmatpush1.bf16.msra.mxu0 %v1338
    %2716 = vmatprep.mubr.bf16.mxu0 %v2618
    %2717 = vmatmul.mubr.bf16.gmra.mrb[0].mxu0 %v2617
    %v2718 = vpop.f32.mrb[0].mxu0
    %v2719 = vadd.f32 %v2666, %v2718
    %v2720 = vpop.f32.mrb[0].mxu0
    %v2721 = vadd.f32 %v2668, %v2720
    %v2722 = vpop.f32.mrb[0].mxu0
    %v2723 = vadd.f32 %v2670, %v2722
    %v2724 = vpop.f32.mrb[0].mxu0
    %v2725 = vadd.f32 %v2672, %v2724
    %2726 = vmatprep.mubr.bf16.mxu0 %v2626
    %2727 = vmatmul.mubr.bf16.gmra.mrb[0].mxu0 %v2625
    %v2728 = vpop.f32.mrb[0].mxu0
    %v2729 = vadd.f32 %v2676, %v2728
    %v2730 = vpop.f32.mrb[0].mxu0
    %v2731 = vadd.f32 %v2678, %v2730
    %v2732 = vpop.f32.mrb[0].mxu0
    %v2733 = vadd.f32 %v2680, %v2732
    %v2734 = vpop.f32.mrb[0].mxu0
    %v2735 = vadd.f32 %v2682, %v2734
    %2736 = vdwg.mxu0
    %2737 = vmatprep.subr.bf16.mxu0 %v1343
    %2738 = vmatpush1.bf16.msra.mxu0 %v1342
    %2739 = vmatprep.subr.bf16.mxu0 %v1347
    %2740 = vmatpush1.bf16.msra.mxu0 %v1346
    %2741 = vmatprep.subr.bf16.mxu0 %v1351
    %2742 = vmatpush1.bf16.msra.mxu0 %v1350
    %2743 = vmatprep.subr.bf16.mxu0 %v1355
    %2744 = vmatpush1.bf16.msra.mxu0 %v1354
    %2745 = vmatprep.subr.bf16.mxu0 %v1359
    %2746 = vmatpush1.bf16.msra.mxu0 %v1358
    %2747 = vmatprep.subr.bf16.mxu0 %v1363
    %2748 = vmatpush1.bf16.msra.mxu0 %v1362
    %2749 = vmatprep.subr.bf16.mxu0 %v1367
    %2750 = vmatpush1.bf16.msra.mxu0 %v1366
    %2751 = vmatprep.subr.bf16.mxu0 %v1371
    %2752 = vmatpush1.bf16.msra.mxu0 %v1370
    %2753 = vmatprep.subr.bf16.mxu0 %v1375
    %2754 = vmatpush1.bf16.msra.mxu0 %v1374
    %2755 = vmatprep.subr.bf16.mxu0 %v1379
    %2756 = vmatpush1.bf16.msra.mxu0 %v1378
    %2757 = vmatprep.subr.bf16.mxu0 %v1383
    %2758 = vmatpush1.bf16.msra.mxu0 %v1382
    %2759 = vmatprep.subr.bf16.mxu0 %v1387
    %2760 = vmatpush1.bf16.msra.mxu0 %v1386
    %2761 = vmatprep.subr.bf16.mxu0 %v1391
    %2762 = vmatpush1.bf16.msra.mxu0 %v1390
    %2763 = vmatprep.subr.bf16.mxu0 %v1395
    %2764 = vmatpush1.bf16.msra.mxu0 %v1394
    %2765 = vmatprep.subr.bf16.mxu0 %v1399
    %2766 = vmatpush1.bf16.msra.mxu0 %v1398
    %2767 = vmatprep.subr.bf16.mxu0 %v1403
    %2768 = vmatpush1.bf16.msra.mxu0 %v1402
    %2769 = vmatprep.mubr.bf16.mxu0 %v2620
    %2770 = vmatmul.mubr.bf16.gmra.mrb[0].mxu0 %v2619
    %v2771 = vpop.f32.mrb[0].mxu0
    %v2772 = vadd.f32 %v2719, %v2771
    %v2773 = vpop.f32.mrb[0].mxu0
    %v2774 = vadd.f32 %v2721, %v2773
    %v2775 = vpop.f32.mrb[0].mxu0
    %v2776 = vadd.f32 %v2723, %v2775
    %v2777 = vpop.f32.mrb[0].mxu0
    %v2778 = vadd.f32 %v2725, %v2777
    %2779 = vmatprep.mubr.bf16.mxu0 %v2628
    %2780 = vmatmul.mubr.bf16.gmra.mrb[0].mxu0 %v2627
    %v2781 = vpop.f32.mrb[0].mxu0
    %v2782 = vadd.f32 %v2729, %v2781
    %v2783 = vpop.f32.mrb[0].mxu0
    %v2784 = vadd.f32 %v2731, %v2783
    %v2785 = vpop.f32.mrb[0].mxu0
    %v2786 = vadd.f32 %v2733, %v2785
    %v2787 = vpop.f32.mrb[0].mxu0
    %v2788 = vadd.f32 %v2735, %v2787
    %2789 = vdwg.mxu0
    %2790 = vmatprep.subr.bf16.mxu0 %v1407
    %2791 = vmatpush1.bf16.msra.mxu0 %v1406
    %2792 = vmatprep.subr.bf16.mxu0 %v1411
    %2793 = vmatpush1.bf16.msra.mxu0 %v1410
    %2794 = vmatprep.subr.bf16.mxu0 %v1415
    %2795 = vmatpush1.bf16.msra.mxu0 %v1414
    %2796 = vmatprep.subr.bf16.mxu0 %v1419
    %2797 = vmatpush1.bf16.msra.mxu0 %v1418
    %2798 = vmatprep.subr.bf16.mxu0 %v1423
    %2799 = vmatpush1.bf16.msra.mxu0 %v1422
    %2800 = vmatprep.subr.bf16.mxu0 %v1427
    %2801 = vmatpush1.bf16.msra.mxu0 %v1426
    %2802 = vmatprep.subr.bf16.mxu0 %v1431
    %2803 = vmatpush1.bf16.msra.mxu0 %v1430
    %2804 = vmatprep.subr.bf16.mxu0 %v1435
    %2805 = vmatpush1.bf16.msra.mxu0 %v1434
    %2806 = vmatprep.subr.bf16.mxu0 %v1439
    %2807 = vmatpush1.bf16.msra.mxu0 %v1438
    %2808 = vmatprep.subr.bf16.mxu0 %v1443
    %2809 = vmatpush1.bf16.msra.mxu0 %v1442
    %2810 = vmatprep.subr.bf16.mxu0 %v1447
    %2811 = vmatpush1.bf16.msra.mxu0 %v1446
    %2812 = vmatprep.subr.bf16.mxu0 %v1451
    %2813 = vmatpush1.bf16.msra.mxu0 %v1450
    %2814 = vmatprep.subr.bf16.mxu0 %v1455
    %2815 = vmatpush1.bf16.msra.mxu0 %v1454
    %2816 = vmatprep.subr.bf16.mxu0 %v1459
    %2817 = vmatpush1.bf16.msra.mxu0 %v1458
    %2818 = vmatprep.subr.bf16.mxu0 %v1463
    %2819 = vmatpush1.bf16.msra.mxu0 %v1462
    %2820 = vmatprep.subr.bf16.mxu0 %v1467
    %2821 = vmatpush1.bf16.msra.mxu0 %v1466
    %2822 = vmatprep.mubr.bf16.mxu0 %v2622
    %2823 = vmatmul.mubr.bf16.gmra.mrb[0].mxu0 %v2621
    %v2824 = vpop.f32.mrb[0].mxu0
    %v2825 = vadd.f32 %v2772, %v2824
    %v2826 = vpop.f32.mrb[0].mxu0
    %v2827 = vadd.f32 %v2774, %v2826
    %v2828 = vpop.f32.mrb[0].mxu0
    %v2829 = vadd.f32 %v2776, %v2828
    %v2830 = vpop.f32.mrb[0].mxu0
    %v2831 = vadd.f32 %v2778, %v2830
    %2832 = vmatprep.mubr.bf16.mxu0 %v2630
    %2833 = vmatmul.mubr.bf16.gmra.mrb[0].mxu0 %v2629
    %v2834 = vpop.f32.mrb[0].mxu0
    %v2835 = vadd.f32 %v2782, %v2834
    %v2836 = vpop.f32.mrb[0].mxu0
    %v2837 = vadd.f32 %v2784, %v2836
    %v2838 = vpop.f32.mrb[0].mxu0
    %v2839 = vadd.f32 %v2786, %v2838
    %v2840 = vpop.f32.mrb[0].mxu0
    %v2841 = vadd.f32 %v2788, %v2840
    %2842 = vdwg.mxu0
    %2843 = vmatprep.subr.bf16.mxu0 %v1217
    %2844 = vmatpush1.bf16.msra.mxu0 %v1216
    %2845 = vmatprep.subr.bf16.mxu0 %v1221
    %2846 = vmatpush1.bf16.msra.mxu0 %v1220
    %2847 = vmatprep.subr.bf16.mxu0 %v1225
    %2848 = vmatpush1.bf16.msra.mxu0 %v1224
    %2849 = vmatprep.subr.bf16.mxu0 %v1229
    %2850 = vmatpush1.bf16.msra.mxu0 %v1228
    %2851 = vmatprep.subr.bf16.mxu0 %v1233
    %2852 = vmatpush1.bf16.msra.mxu0 %v1232
    %2853 = vmatprep.subr.bf16.mxu0 %v1237
    %2854 = vmatpush1.bf16.msra.mxu0 %v1236
    %2855 = vmatprep.subr.bf16.mxu0 %v1241
    %2856 = vmatpush1.bf16.msra.mxu0 %v1240
    %2857 = vmatprep.subr.bf16.mxu0 %v1245
    %2858 = vmatpush1.bf16.msra.mxu0 %v1244
    %2859 = vmatprep.subr.bf16.mxu0 %v1249
    %2860 = vmatpush1.bf16.msra.mxu0 %v1248
    %2861 = vmatprep.subr.bf16.mxu0 %v1253
    %2862 = vmatpush1.bf16.msra.mxu0 %v1252
    %2863 = vmatprep.subr.bf16.mxu0 %v1257
    %2864 = vmatpush1.bf16.msra.mxu0 %v1256
    %2865 = vmatprep.subr.bf16.mxu0 %v1261
    %2866 = vmatpush1.bf16.msra.mxu0 %v1260
    %2867 = vmatprep.subr.bf16.mxu0 %v1265
    %2868 = vmatpush1.bf16.msra.mxu0 %v1264
    %2869 = vmatprep.subr.bf16.mxu0 %v1269
    %2870 = vmatpush1.bf16.msra.mxu0 %v1268
    %2871 = vmatprep.subr.bf16.mxu0 %v1273
    %2872 = vmatpush1.bf16.msra.mxu0 %v1272
    %2873 = vmatprep.subr.bf16.mxu0 %v1277
    %2874 = vmatpush1.bf16.msra.mxu0 %v1276
    %2875 = vmatprep.mubr.bf16.mxu0 %v2616
    %2876 = vmatmul.mubr.bf16.gmra.mrb[0].mxu0 %v2615
    %v2877 = vpop.f32.mrb[0].mxu0
    %v2878 = vadd.f32 %v437, %v2877
    %v2879 = vpop.f32.mrb[0].mxu0
    %v2880 = vadd.f32 %v441, %v2879
    %v2881 = vpop.f32.mrb[0].mxu0
    %v2882 = vadd.f32 %v437, %v2881
    %v2883 = vpop.f32.mrb[0].mxu0
    %v2884 = vadd.f32 %v441, %v2883
    %2885 = vmatprep.mubr.bf16.mxu0 %v2624
    %2886 = vmatmul.mubr.bf16.gmra.mrb[0].mxu0 %v2623
    %v2887 = vpop.f32.mrb[0].mxu0
    %v2888 = vadd.f32 %v437, %v2887
    %v2889 = vpop.f32.mrb[0].mxu0
    %v2890 = vadd.f32 %v441, %v2889
    %v2891 = vpop.f32.mrb[0].mxu0
    %v2892 = vadd.f32 %v437, %v2891
    %v2893 = vpop.f32.mrb[0].mxu0
    %v2894 = vadd.f32 %v441, %v2893
    %2895 = vdwg.mxu0
    %2896 = vmatprep.subr.bf16.mxu0 %v1281
    %2897 = vmatpush1.bf16.msra.mxu0 %v1280
    %2898 = vmatprep.subr.bf16.mxu0 %v1285
    %2899 = vmatpush1.bf16.msra.mxu0 %v1284
    %2900 = vmatprep.subr.bf16.mxu0 %v1289
    %2901 = vmatpush1.bf16.msra.mxu0 %v1288
    %2902 = vmatprep.subr.bf16.mxu0 %v1293
    %2903 = vmatpush1.bf16.msra.mxu0 %v1292
    %2904 = vmatprep.subr.bf16.mxu0 %v1297
    %2905 = vmatpush1.bf16.msra.mxu0 %v1296
    %2906 = vmatprep.subr.bf16.mxu0 %v1301
    %2907 = vmatpush1.bf16.msra.mxu0 %v1300
    %2908 = vmatprep.subr.bf16.mxu0 %v1305
    %2909 = vmatpush1.bf16.msra.mxu0 %v1304
    %2910 = vmatprep.subr.bf16.mxu0 %v1309
    %2911 = vmatpush1.bf16.msra.mxu0 %v1308
    %2912 = vmatprep.subr.bf16.mxu0 %v1313
    %2913 = vmatpush1.bf16.msra.mxu0 %v1312
    %2914 = vmatprep.subr.bf16.mxu0 %v1317
    %2915 = vmatpush1.bf16.msra.mxu0 %v1316
    %2916 = vmatprep.subr.bf16.mxu0 %v1321
    %2917 = vmatpush1.bf16.msra.mxu0 %v1320
    %2918 = vmatprep.subr.bf16.mxu0 %v1325
    %2919 = vmatpush1.bf16.msra.mxu0 %v1324
    %2920 = vmatprep.subr.bf16.mxu0 %v1329
    %2921 = vmatpush1.bf16.msra.mxu0 %v1328
    %2922 = vmatprep.subr.bf16.mxu0 %v1333
    %2923 = vmatpush1.bf16.msra.mxu0 %v1332
    %2924 = vmatprep.subr.bf16.mxu0 %v1337
    %2925 = vmatpush1.bf16.msra.mxu0 %v1336
    %2926 = vmatprep.subr.bf16.mxu0 %v1341
    %2927 = vmatpush1.bf16.msra.mxu0 %v1340
    %2928 = vmatprep.mubr.bf16.mxu0 %v2618
    %2929 = vmatmul.mubr.bf16.gmra.mrb[0].mxu0 %v2617
    %v2930 = vpop.f32.mrb[0].mxu0
    %v2931 = vadd.f32 %v2878, %v2930
    %v2932 = vpop.f32.mrb[0].mxu0
    %v2933 = vadd.f32 %v2880, %v2932
    %v2934 = vpop.f32.mrb[0].mxu0
    %v2935 = vadd.f32 %v2882, %v2934
    %v2936 = vpop.f32.mrb[0].mxu0
    %v2937 = vadd.f32 %v2884, %v2936
    %2938 = vmatprep.mubr.bf16.mxu0 %v2626
    %2939 = vmatmul.mubr.bf16.gmra.mrb[0].mxu0 %v2625
    %v2940 = vpop.f32.mrb[0].mxu0
    %v2941 = vadd.f32 %v2888, %v2940
    %v2942 = vpop.f32.mrb[0].mxu0
    %v2943 = vadd.f32 %v2890, %v2942
    %v2944 = vpop.f32.mrb[0].mxu0
    %v2945 = vadd.f32 %v2892, %v2944
    %v2946 = vpop.f32.mrb[0].mxu0
    %v2947 = vadd.f32 %v2894, %v2946
    %2948 = vdwg.mxu0
    %2949 = vmatprep.subr.bf16.mxu0 %v1345
    %2950 = vmatpush1.bf16.msra.mxu0 %v1344
    %2951 = vmatprep.subr.bf16.mxu0 %v1349
    %2952 = vmatpush1.bf16.msra.mxu0 %v1348
    %2953 = vmatprep.subr.bf16.mxu0 %v1353
    %2954 = vmatpush1.bf16.msra.mxu0 %v1352
    %2955 = vmatprep.subr.bf16.mxu0 %v1357
    %2956 = vmatpush1.bf16.msra.mxu0 %v1356
    %2957 = vmatprep.subr.bf16.mxu0 %v1361
    %2958 = vmatpush1.bf16.msra.mxu0 %v1360
    %2959 = vmatprep.subr.bf16.mxu0 %v1365
    %2960 = vmatpush1.bf16.msra.mxu0 %v1364
    %2961 = vmatprep.subr.bf16.mxu0 %v1369
    %2962 = vmatpush1.bf16.msra.mxu0 %v1368
    %2963 = vmatprep.subr.bf16.mxu0 %v1373
    %2964 = vmatpush1.bf16.msra.mxu0 %v1372
    %2965 = vmatprep.subr.bf16.mxu0 %v1377
    %2966 = vmatpush1.bf16.msra.mxu0 %v1376
    %2967 = vmatprep.subr.bf16.mxu0 %v1381
    %2968 = vmatpush1.bf16.msra.mxu0 %v1380
    %2969 = vmatprep.subr.bf16.mxu0 %v1385
    %2970 = vmatpush1.bf16.msra.mxu0 %v1384
    %2971 = vmatprep.subr.bf16.mxu0 %v1389
    %2972 = vmatpush1.bf16.msra.mxu0 %v1388
    %2973 = vmatprep.subr.bf16.mxu0 %v1393
    %2974 = vmatpush1.bf16.msra.mxu0 %v1392
    %2975 = vmatprep.subr.bf16.mxu0 %v1397
    %2976 = vmatpush1.bf16.msra.mxu0 %v1396
    %2977 = vmatprep.subr.bf16.mxu0 %v1401
    %2978 = vmatpush1.bf16.msra.mxu0 %v1400
    %2979 = vmatprep.subr.bf16.mxu0 %v1405
    %2980 = vmatpush1.bf16.msra.mxu0 %v1404
    %2981 = vmatprep.mubr.bf16.mxu0 %v2620
    %2982 = vmatmul.mubr.bf16.gmra.mrb[0].mxu0 %v2619
    %v2983 = vpop.f32.mrb[0].mxu0
    %v2984 = vadd.f32 %v2931, %v2983
    %v2985 = vpop.f32.mrb[0].mxu0
    %v2986 = vadd.f32 %v2933, %v2985
    %v2987 = vpop.f32.mrb[0].mxu0
    %v2988 = vadd.f32 %v2935, %v2987
    %v2989 = vpop.f32.mrb[0].mxu0
    %v2990 = vadd.f32 %v2937, %v2989
    %2991 = vmatprep.mubr.bf16.mxu0 %v2628
    %2992 = vmatmul.mubr.bf16.gmra.mrb[0].mxu0 %v2627
    %v2993 = vpop.f32.mrb[0].mxu0
    %v2994 = vadd.f32 %v2941, %v2993
    %v2995 = vpop.f32.mrb[0].mxu0
    %v2996 = vadd.f32 %v2943, %v2995
    %v2997 = vpop.f32.mrb[0].mxu0
    %v2998 = vadd.f32 %v2945, %v2997
    %v2999 = vpop.f32.mrb[0].mxu0
    %v3000 = vadd.f32 %v2947, %v2999
    %3001 = vdwg.mxu0
    %3002 = vmatprep.subr.bf16.mxu0 %v1409
    %3003 = vmatpush1.bf16.msra.mxu0 %v1408
    %3004 = vmatprep.subr.bf16.mxu0 %v1413
    %3005 = vmatpush1.bf16.msra.mxu0 %v1412
    %3006 = vmatprep.subr.bf16.mxu0 %v1417
    %3007 = vmatpush1.bf16.msra.mxu0 %v1416
    %3008 = vmatprep.subr.bf16.mxu0 %v1421
    %3009 = vmatpush1.bf16.msra.mxu0 %v1420
    %3010 = vmatprep.subr.bf16.mxu0 %v1425
    %3011 = vmatpush1.bf16.msra.mxu0 %v1424
    %3012 = vmatprep.subr.bf16.mxu0 %v1429
    %3013 = vmatpush1.bf16.msra.mxu0 %v1428
    %3014 = vmatprep.subr.bf16.mxu0 %v1433
    %3015 = vmatpush1.bf16.msra.mxu0 %v1432
    %3016 = vmatprep.subr.bf16.mxu0 %v1437
    %3017 = vmatpush1.bf16.msra.mxu0 %v1436
    %3018 = vmatprep.subr.bf16.mxu0 %v1441
    %3019 = vmatpush1.bf16.msra.mxu0 %v1440
    %3020 = vmatprep.subr.bf16.mxu0 %v1445
    %3021 = vmatpush1.bf16.msra.mxu0 %v1444
    %3022 = vmatprep.subr.bf16.mxu0 %v1449
    %3023 = vmatpush1.bf16.msra.mxu0 %v1448
    %3024 = vmatprep.subr.bf16.mxu0 %v1453
    %3025 = vmatpush1.bf16.msra.mxu0 %v1452
    %3026 = vmatprep.subr.bf16.mxu0 %v1457
    %3027 = vmatpush1.bf16.msra.mxu0 %v1456
    %3028 = vmatprep.subr.bf16.mxu0 %v1461
    %3029 = vmatpush1.bf16.msra.mxu0 %v1460
    %3030 = vmatprep.subr.bf16.mxu0 %v1465
    %3031 = vmatpush1.bf16.msra.mxu0 %v1464
    %3032 = vmatprep.subr.bf16.mxu0 %v1469
    %3033 = vmatpush1.bf16.msra.mxu0 %v1468
    %3034 = vmatprep.mubr.bf16.mxu0 %v2622
    %3035 = vmatmul.mubr.bf16.gmra.mrb[0].mxu0 %v2621
    %v3036 = vpop.f32.mrb[0].mxu0
    %v3037 = vadd.f32 %v2984, %v3036
    %v3038 = vpop.f32.mrb[0].mxu0
    %v3039 = vadd.f32 %v2986, %v3038
    %v3040 = vpop.f32.mrb[0].mxu0
    %v3041 = vadd.f32 %v2988, %v3040
    %v3042 = vpop.f32.mrb[0].mxu0
    %v3043 = vadd.f32 %v2990, %v3042
    %3044 = vmatprep.mubr.bf16.mxu0 %v2630
    %3045 = vmatmul.mubr.bf16.gmra.mrb[0].mxu0 %v2629
    %v3046 = vpop.f32.mrb[0].mxu0
    %v3047 = vadd.f32 %v2994, %v3046
    %v3048 = vpop.f32.mrb[0].mxu0
    %v3049 = vadd.f32 %v2996, %v3048
    %v3050 = vpop.f32.mrb[0].mxu0
    %v3051 = vadd.f32 %v2998, %v3050
    %v3052 = vpop.f32.mrb[0].mxu0
    %v3053 = vadd.f32 %v3000, %v3052
    %3054 = vdwg.mxu0
    %v3055 = vmax.f32 %v2825, 0.0
    %v3056 = vmax.f32 %v2827, 0.0
    %v3057 = vmax.f32 %v3037, 0.0
    %v3058 = vmax.f32 %v3039, 0.0
    %v3059 = vmax.f32 %v2829, 0.0
    %v3060 = vmax.f32 %v2831, 0.0
    %v3061 = vmax.f32 %v3041, 0.0
    %v3062 = vmax.f32 %v3043, 0.0
    %v3063 = vmax.f32 %v2835, 0.0
    %v3064 = vmax.f32 %v2837, 0.0
    %v3065 = vmax.f32 %v3047, 0.0
    %v3066 = vmax.f32 %v3049, 0.0
    %v3067 = vmax.f32 %v2839, 0.0
    %v3068 = vmax.f32 %v2841, 0.0
    %v3069 = vmax.f32 %v3051, 0.0
    %v3070 = vmax.f32 %v3053, 0.0
    %v3071 = vpack.c.bf16 %v3059, %v3055
    %v3072 = vpack.c.bf16 %v3060, %v3056
    %v3073 = vpack.c.bf16 %v3061, %v3057
    %v3074 = vpack.c.bf16 %v3062, %v3058
    %v3075 = vpack.c.bf16 %v3067, %v3063
    %v3076 = vpack.c.bf16 %v3068, %v3064
    %v3077 = vpack.c.bf16 %v3069, %v3065
    %v3078 = vpack.c.bf16 %v3070, %v3066
    %3079 = vmatprep.subr.bf16.mxu0 0
    %3080 = vmatpush1.bf16.msra.mxu0 %v2308
    %3081 = vmatprep.subr.bf16.mxu0 0
    %3082 = vmatpush1.bf16.msra.mxu0 %v2309
    %3083 = vmatprep.subr.bf16.mxu0 0
    %3084 = vmatpush1.bf16.msra.mxu0 %v2310
    %3085 = vmatprep.subr.bf16.mxu0 0
    %3086 = vmatpush1.bf16.msra.mxu0 %v2311
    %3087 = vmatprep.subr.bf16.mxu0 0
    %3088 = vmatpush1.bf16.msra.mxu0 %v2312
    %3089 = vmatprep.subr.bf16.mxu0 0
    %3090 = vmatpush1.bf16.msra.mxu0 %v2313
    %3091 = vmatprep.subr.bf16.mxu0 0
    %3092 = vmatpush1.bf16.msra.mxu0 %v2314
    %3093 = vmatprep.subr.bf16.mxu0 0
    %3094 = vmatpush1.bf16.msra.mxu0 %v2315
    %3095 = vmatprep.subr.bf16.mxu0 0
    %3096 = vmatpush1.bf16.msra.mxu0 %v2316
    %3097 = vmatprep.subr.bf16.mxu0 0
    %3098 = vmatpush1.bf16.msra.mxu0 %v2317
    %3099 = vmatprep.subr.bf16.mxu0 0
    %3100 = vmatpush1.bf16.msra.mxu0 %v2318
    %3101 = vmatprep.subr.bf16.mxu0 0
    %3102 = vmatpush1.bf16.msra.mxu0 %v2319
    %3103 = vmatprep.subr.bf16.mxu0 0
    %3104 = vmatpush1.bf16.msra.mxu0 %v2320
    %3105 = vmatprep.subr.bf16.mxu0 0
    %3106 = vmatpush1.bf16.msra.mxu0 %v2321
    %3107 = vmatprep.subr.bf16.mxu0 0
    %3108 = vmatpush1.bf16.msra.mxu0 %v2322
    %3109 = vmatprep.subr.bf16.mxu0 0
    %3110 = vmatpush1.bf16.msra.mxu0 %v2323
    %3111 = vmatprep.mubr.bf16.mxu0 %v3072
    %3112 = vmatmul.mubr.bf16.gmra.mrb[0].mxu0 %v3071
    %v3113 = vpop.f32.mrb[0].mxu0
    %v3114 = vadd.f32 %v2178, %v3113
    %v3115 = vpop.f32.mrb[0].mxu0
    %v3116 = vpop.f32.mrb[0].mxu0
    %v3117 = vadd.f32 %v2178, %v3116
    %v3118 = vpop.f32.mrb[0].mxu0
    %3119 = vmatprep.mubr.bf16.mxu0 %v3076
    %3120 = vmatmul.mubr.bf16.gmra.mrb[0].mxu0 %v3075
    %v3121 = vpop.f32.mrb[0].mxu0
    %v3122 = vadd.f32 %v2178, %v3121
    %v3123 = vpop.f32.mrb[0].mxu0
    %v3124 = vpop.f32.mrb[0].mxu0
    %v3125 = vadd.f32 %v2178, %v3124
    %v3126 = vpop.f32.mrb[0].mxu0
    %3127 = vdwg.mxu0
    %3128 = vmatprep.subr.bf16.mxu0 0
    %3129 = vmatpush1.bf16.msra.mxu0 %v2324
    %3130 = vmatprep.subr.bf16.mxu0 0
    %3131 = vmatpush1.bf16.msra.mxu0 %v2325
    %3132 = vmatprep.subr.bf16.mxu0 0
    %3133 = vmatpush1.bf16.msra.mxu0 %v2326
    %3134 = vmatprep.subr.bf16.mxu0 0
    %3135 = vmatpush1.bf16.msra.mxu0 %v2327
    %3136 = vmatprep.subr.bf16.mxu0 0
    %3137 = vmatpush1.bf16.msra.mxu0 %v2328
    %3138 = vmatprep.subr.bf16.mxu0 0
    %3139 = vmatpush1.bf16.msra.mxu0 %v2329
    %3140 = vmatprep.subr.bf16.mxu0 0
    %3141 = vmatpush1.bf16.msra.mxu0 %v2330
    %3142 = vmatprep.subr.bf16.mxu0 0
    %3143 = vmatpush1.bf16.msra.mxu0 %v2331
    %3144 = vmatprep.subr.bf16.mxu0 0
    %3145 = vmatpush1.bf16.msra.mxu0 %v2332
    %3146 = vmatprep.subr.bf16.mxu0 0
    %3147 = vmatpush1.bf16.msra.mxu0 %v2333
    %3148 = vmatprep.subr.bf16.mxu0 0
    %3149 = vmatpush1.bf16.msra.mxu0 %v2334
    %3150 = vmatprep.subr.bf16.mxu0 0
    %3151 = vmatpush1.bf16.msra.mxu0 %v2335
    %3152 = vmatprep.subr.bf16.mxu0 0
    %3153 = vmatpush1.bf16.msra.mxu0 %v2336
    %3154 = vmatprep.subr.bf16.mxu0 0
    %3155 = vmatpush1.bf16.msra.mxu0 %v2337
    %3156 = vmatprep.subr.bf16.mxu0 0
    %3157 = vmatpush1.bf16.msra.mxu0 %v2338
    %3158 = vmatprep.subr.bf16.mxu0 0
    %3159 = vmatpush1.bf16.msra.mxu0 %v2339
    %3160 = vmatprep.mubr.bf16.mxu0 %v3074
    %3161 = vmatmul.mubr.bf16.gmra.mrb[0].mxu0 %v3073
    %v3162 = vpop.f32.mrb[0].mxu0
    %v3163 = vadd.f32 %v3114, %v3162
    %v3164 = vpop.f32.mrb[0].mxu0
    %v3165 = vpop.f32.mrb[0].mxu0
    %v3166 = vadd.f32 %v3117, %v3165
    %v3167 = vpop.f32.mrb[0].mxu0
    %3168 = vmatprep.mubr.bf16.mxu0 %v3078
    %3169 = vmatmul.mubr.bf16.gmra.mrb[0].mxu0 %v3077
    %v3170 = vpop.f32.mrb[0].mxu0
    %v3171 = vadd.f32 %v3122, %v3170
    %v3172 = vpop.f32.mrb[0].mxu0
    %v3173 = vpop.f32.mrb[0].mxu0
    %v3174 = vadd.f32 %v3125, %v3173
    %v3175 = vpop.f32.mrb[0].mxu0
    %3176 = vdwg.mxu0
    %v3177 = vmax.f32 %v3163, 0.0
    %v3178 = vmax.f32 %v3166, 0.0
    %v3179 = vmax.f32 %v3171, 0.0
    %v3180 = vmax.f32 %v3174, 0.0
    %3181 = vmatprep.subr.mxu0 0.0
    %3182 = vmatpush1.xpose.msra.mxu0 %v3177
    %3183 = vmatprep.subr.mxu0 0.0
    %3184 = vmatpush1.xpose.msra.mxu0 %v3178
    %3185 = vmatprep.subr.mxu0 0.0
    %3186 = vmatpush1.xpose.msra.mxu0 %v3179
    %3187 = vmatprep.subr.mxu0 0.0
    %3188 = vmatpush1.xpose.msra.mxu0 %v3180
    %3189 = vmatprep.subr.mxu0 0.0
    %3190 = vmatpush1.xpose.msra.mxu0 0.0
    %3191 = vmatprep.subr.mxu0 0.0
    %3192 = vmatpush1.xpose.msra.mxu0 0.0
    %3193 = vmatprep.subr.mxu0 0.0
    %3194 = vmatpush1.xpose.msra.mxu0 0.0
    %3195 = vmatprep.subr.mxu0 0.0
    %3196 = vmatpush1.xpose.msra.mxu0 0.0
    %3197 = vmatprep.subr.mxu0 0.0
    %3198 = vmatpush1.xpose.msra.mxu0 0.0
    %3199 = vmatprep.subr.mxu0 0.0
    %3200 = vmatpush1.xpose.msra.mxu0 0.0
    %3201 = vmatprep.subr.mxu0 0.0
    %3202 = vmatpush1.xpose.msra.mxu0 0.0
    %3203 = vmatprep.subr.mxu0 0.0
    %3204 = vmatpush1.xpose.msra.mxu0 0.0
    %3205 = vmatprep.subr.mxu0 0.0
    %3206 = vmatpush1.xpose.msra.mxu0 0.0
    %3207 = vmatprep.subr.mxu0 0.0
    %3208 = vmatpush1.xpose.msra.mxu0 0.0
    %3209 = vmatprep.subr.mxu0 0.0
    %3210 = vmatpush1.xpose.msra.mxu0 0.0
    %3211 = vmatprep.subr.mxu0 0.0
    %3212 = vmatpush1.xpose.msra.mxu0 0.0
    %3213 = vmatprep.subr.mxu0 0.0
    %3214 = vmatpush1.xpose.msra.mxu0 0.0
    %3215 = vmatprep.subr.mxu0 0.0
    %3216 = vmatpush1.xpose.msra.mxu0 0.0
    %3217 = vmatprep.subr.mxu0 0.0
    %3218 = vmatpush1.xpose.msra.mxu0 0.0
    %3219 = vmatprep.subr.mxu0 0.0
    %3220 = vmatpush1.xpose.msra.mxu0 0.0
    %3221 = vmatprep.subr.mxu0 0.0
    %3222 = vmatpush1.xpose.msra.mxu0 0.0
    %3223 = vmatprep.subr.mxu0 0.0
    %3224 = vmatpush1.xpose.msra.mxu0 0.0
    %3225 = vmatprep.subr.mxu0 0.0
    %3226 = vmatpush1.xpose.msra.mxu0 0.0
    %3227 = vmatprep.subr.mxu0 0.0
    %3228 = vmatpush1.xpose.msra.mxu0 0.0
    %3229 = vmatprep.subr.mxu0 0.0
    %3230 = vmatpush1.xpose.msra.mxu0 0.0
    %3231 = vmatprep.subr.mxu0 0.0
    %3232 = vmatpush1.xpose.msra.mxu0 0.0
    %3233 = vmatprep.subr.mxu0 0.0
    %3234 = vmatpush1.xpose.msra.mxu0 0.0
    %3235 = vmatprep.subr.mxu0 0.0
    %3236 = vmatpush1.xpose.msra.mxu0 0.0
    %3237 = vmatprep.subr.mxu0 0.0
    %3238 = vmatpush1.xpose.msra.mxu0 0.0
    %3239 = vmatprep.subr.mxu0 0.0
    %3240 = vmatpush1.xpose.msra.mxu0 0.0
    %3241 = vmatprep.subr.mxu0 0.0
    %3242 = vmatpush1.xpose.msra.mxu0 0.0
    %3243 = vmatprep.subr.mxu0 0.0
    %3244 = vmatpush1.xpose.msra.mxu0 0.0
    %3245 = vmatprep.mubr.f32.mxu0 0.0
    %3246 = vmatmul.mubr.f32.gmra.mrb[0].mxu0 %v375
    %v3247 = vpop.f32.mrb[0].mxu0
    %v3248 = vadd.f32 %v2482, %v3247
    %v3249 = vpop.f32.mrb[0].mxu0
    %3250 = vdwg.mxu0
    %s3251 = scalar_lea.vmem %s9, 1
    %3252 = vst.msk [vmem:[%s3251] sm:$0x1] %vm2553, %v3248
    %s3253 = scalar_lea.vmem %s8, 1
    %v3254 = vld [vmem:[%s3253] sm:$0x1]
    %s3255 = scalar_lea.vmem %s7, 1
    %v3256 = vld [vmem:[%s3255] sm:$0x1]
    %v3257 = vsub.f32 0.0, %v3248
    %v3258 = vmax.f32 %v3257, 0.0
    %v3259 = vand.u32 2147483647, %v3248
    %v3260 = vsub.f32 0.0, %v3259
    %v3261 = vmul.f32 %v3260, 1.442695
    %v3262 = vpow.pop %v3261
    %v3263 = vadd.f32 %v3262, 1.0
    %v3264 = vlog2.pop %v3263
    %v3265 = vmul.f32 %v3264, 0.6931472
    %v3266 = vadd.f32 %v3258, %v3265
    %v3267 = vsub.f32 1.0, %v3254
    %v3268 = vmul.f32 %v3267, %v3248
    %v3269 = vmul.f32 %v3254, 2.13
    %v3270 = vadd.f32 %v3269, %v3267
    %v3271 = vmul.f32 %v3270, %v3266
    %v3272 = vadd.f32 %v3268, %v3271
    %v3273 = vmul.f32 %v3256, %v3272
    %v3274 = vsel %vm2553, %v3273, 0.0
    %3275 = vadd.xlane.f32.xlu0 %v3274
    %v3276 = vpop.xlane.xlu0 %3275
    %v3277 = vadd.f32 %v2577, %v3276
    %v3278 = vsel %vm2553, %v3256, 0.0
    %3279 = vadd.xlane.f32.xlu0 %v3278
    %v3280 = vpop.xlane.xlu0 %3279
    %v3281 = vadd.f32 %v2581, %v3280
    %v3282 = vrcp.pop %v3281
    %v3283 = vmul.f32 %v3277, %v3282
    %vm3284 = vcmask 0
    %3285 = vst.msk [vmem:[#allocation6] sm:$0x1] %vm3284, %v3283
    // Predicated region
    $region42: #{binary_classifier_region_abnormal.1} parent=1 // pred_check
      _
    $region43: #{binary_classifier_region_abnormal.1} parent=1 // pred_check_branch
      %3287 = sbr.rel (0) target = $region45
    $region44: #{binary_classifier_region_abnormal.1} parent=1 // pred_region
      _
    $region45: #{binary_classifier_region_abnormal.1} parent=1 // pred_fallthru
      _
    // Predicated region
    $region46: #{binary_classifier_region_abnormal.1} parent=1 // pred_check
      _
    $region47: #{binary_classifier_region_abnormal.1} parent=1 // pred_check_branch
      %3289 = sbr.rel (0) target = $region49
    $region48: #{binary_classifier_region_abnormal.1} parent=1 // pred_region
      %s3291 = ssub.s32 16, 16
      %3292 = vsyncadd [#allocation5], %s3291
      %s3294 = sshll.u32 [#allocation6], 4
      %s3295 = int_to_ptr.vmem [resolvable:$true] %s3294
      %3297 = dma.vmem_to_hbm [thread:$0]  %s3295, 16, %s10, [#allocation5]
    $region49: #{binary_classifier_region_abnormal.1} parent=1 // pred_fallthru
      _
    // Predicated region
    $region50: #{binary_classifier_region_abnormal.1} parent=1 // pred_check
      _
    $region51: #{binary_classifier_region_abnormal.1} parent=1 // pred_check_branch
      %3299 = sbr.rel (0) target = $region53
    $region52: #{binary_classifier_region_abnormal.1} parent=1 // pred_region
      _
    $region53: #{binary_classifier_region_abnormal.1} parent=1 // pred_fallthru
      _
    // Predicated region
    $region54: #{binary_classifier_region_abnormal.1} parent=1 // pred_check
      _
    $region55: #{binary_classifier_region_abnormal.1} parent=1 // pred_check_branch
      %3301 = sbr.rel (0) target = $region57
    $region56: #{binary_classifier_region_abnormal.1} parent=1 // pred_region
      %3302 = dma.done [#allocation5], 16
    $region57: #{binary_classifier_region_abnormal.1} parent=1 // pred_fallthru
      _
    %3303 = vsyncpa [#allocation4], 1
    %3304 = vsyncpa [#allocation5], 1

</llo_original>
